<compile_context>
chip_gen: v6e
topology: v6e:2x2x1
jax: 0.10.0
libtpu: 0.0.40
codegen_flags: <defaults>
</compile_context>

<pallas_src>
import functools

import jax
import jax.numpy as jnp
from jax.experimental import pallas as pl
from jax.experimental.pallas import tpu as pltpu


def _round_up(x, m):
    return ((x + m - 1) // m) * m


# ----------------------------------------------------------------------------
# Encoder constant: arg = F @ (x / bound), shape (in_dim_pad, input_dim).
# Rows: [identity(3) | 2^f * I (sin args) | 2^f * I (cos args) | zero padding]
# ----------------------------------------------------------------------------
def _freq_matrix(input_dim, num_freqs, padded_dim):
    eye = jnp.eye(input_dim, dtype=jnp.float32)
    rows = [eye]
    for f in range(num_freqs):
        rows.append(eye * (2.0 ** f))
    for f in range(num_freqs):
        rows.append(eye * (2.0 ** f))
    fmat = jnp.concatenate(rows, axis=0)            # (in_dim, input_dim)
    pad = padded_dim - fmat.shape[0]
    if pad:
        fmat = jnp.pad(fmat, ((0, pad), (0, 0)))    # sublane-align K
    return fmat


# ----------------------------------------------------------------------------
# Pallas kernel: fused frequency encoding + full MLP for one tile of points.
# Activation layout is (features, tile_n): features on sublanes, points on lanes.
# ----------------------------------------------------------------------------
def _density_mlp_kernel(num_layers, skips, num_freqs, input_dim, in_dim,
                        inv_bound, compute_dtype, *refs):
    pts_ref = refs[0]            # (input_dim, tile_n)   raw points (transposed)
    fmat_ref = refs[1]           # (in_dim_pad, input_dim) encoder matrix
    out_ref = refs[-1]           # (out_dim, tile_n)     lane-dense density row
    prefs = refs[2:-1]           # flattened per-layer weights / biases

    neg_slope = jnp.float32(0.01)                    # nn.LeakyReLU default
    half_pi = jnp.float32(jnp.pi / 2.0)

    # ---- fused frequency encoder ------------------------------------------
    x = pts_ref[...].astype(jnp.float32) * jnp.float32(inv_bound)  # (3, tile_n)
    arg = jnp.dot(fmat_ref[...], x, preferred_element_type=jnp.float32)
    row = jax.lax.broadcasted_iota(jnp.int32, arg.shape, 0)
    sin_end = input_dim * (1 + num_freqs)
    # cos(a) == sin(a + pi/2): one EUP transcendental covers sin AND cos rows.
    trig = jnp.sin(jnp.where(row < sin_end, arg, arg + half_pi))
    feats = jnp.where(row < input_dim, arg,
                      jnp.where(row < in_dim, trig, 0.0))           # pad rows -> 0
    feats_c = feats.astype(compute_dtype)            # (in_dim_pad, tile_n)

    # ---- MLP -----------------------------------------------------------------
    h = feats
    idx = 0
    for i in range(num_layers):
        h_c = h.astype(compute_dtype)
        if i in skips:
            w_x = prefs[idx][...]        # (hidden, in_dim_pad)
            w_h = prefs[idx + 1][...]    # (hidden, hidden)
            b = prefs[idx + 2][...]      # (hidden, 1) f32
            idx += 3
            # torch: cat([input_pts, h]) @ [W_x | W_h].T == W_x@feats + W_h@h
            z = (jnp.dot(w_h, h_c, preferred_element_type=jnp.float32)
                 + jnp.dot(w_x, feats_c, preferred_element_type=jnp.float32)
                 + b)
        else:
            w = prefs[idx][...]          # (fan_out, fan_in)
            b = prefs[idx + 1][...]      # (fan_out, 1) f32
            idx += 2
            z = jnp.dot(w, h_c, preferred_element_type=jnp.float32) + b

        if i < num_layers - 1:
            h = jnp.where(z >= 0, z, neg_slope * z)  # LeakyReLU (f32, VPU)
        else:
            # Sigmoid; reciprocal goes to the EUP slot.
            h = pl.reciprocal(1.0 + jnp.exp(-z), approx=True)

    out_ref[...] = h.astype(out_ref.dtype)           # (out_dim, tile_n)


# ----------------------------------------------------------------------------
# Parameter init (torch nn.Linear default: U(-k, k), k = 1/sqrt(fan_in)).
# Weights kept in torch (fan_out, fan_in) orientation; skip-layer weight split.
# ----------------------------------------------------------------------------
def init_density_params(key, input_dim=3, num_freqs=4, hidden_dim=32,
                        num_layers=8, skips=(4,), out_dim=1):
    in_dim = input_dim * (1 + 2 * num_freqs)
    params = []
    for i in range(num_layers):
        if i == 0:
            fan_in, fan_out = in_dim, hidden_dim
        elif i == num_layers - 1:
            fan_in, fan_out = hidden_dim, out_dim
        elif i in skips:
            fan_in, fan_out = hidden_dim + in_dim, hidden_dim
        else:
            fan_in, fan_out = hidden_dim, hidden_dim
        key, kw, kb = jax.random.split(key, 3)
        bnd = 1.0 / (fan_in ** 0.5)
        w = jax.random.uniform(kw, (fan_out, fan_in), jnp.float32, -bnd, bnd)
        b = jax.random.uniform(kb, (fan_out, 1), jnp.float32, -bnd, bnd)
        if i in skips:
            params.append({"w_x": w[:, :in_dim], "w_h": w[:, in_dim:], "b": b})
        else:
            params.append({"w": w, "b": b})
    return params


# ----------------------------------------------------------------------------
# Wrapper: tiles the point axis, pads arbitrary N, handles layout plumbing.
# ----------------------------------------------------------------------------
def density_network_forward(points, params, *, bound=0.2, num_freqs=4,
                            num_layers=8, skips=(4,), tile_n=1024,
                            compute_dtype=jnp.float32):
    n, input_dim = points.shape
    skips = tuple(skips)
    out_dim = params[-1]["w"].shape[0]
    in_dim = input_dim * (1 + 2 * num_freqs)
    in_dim_p = _round_up(in_dim, 8)        # sublane-aligned encoder feature dim

    # tile_n: multiple of 128, clamped for tiny N; pad N to a multiple of tile_n.
    tile_n = min(int(tile_n), _round_up(n, 128))
    tile_n = _round_up(tile_n, 128)
    n_pad = _round_up(n, tile_n)

    pts_t = jnp.transpose(points).astype(jnp.float32)       # (3, N) lane-dense
    if n_pad != n:
        pts_t = jnp.pad(pts_t, ((0, 0), (0, n_pad - n)))

    fmat = _freq_matrix(input_dim, num_freqs, in_dim_p)     # (in_dim_p, 3)

    def pad_cols(w):
        return jnp.pad(w, ((0, 0), (0, in_dim_p - w.shape[1])))

    flat_inputs = [pts_t, fmat]
    in_specs = [
        pl.BlockSpec((input_dim, tile_n), lambda i: (0, i)),
        pl.BlockSpec(fmat.shape, lambda i: (0, 0)),
    ]
    for i, layer in enumerate(params):
        if i in skips:
            mats = [pad_cols(layer["w_x"]).astype(compute_dtype),
                    layer["w_h"].astype(compute_dtype),
                    layer["b"].astype(jnp.float32)]
        elif i == 0:
            mats = [pad_cols(layer["w"]).astype(compute_dtype),
                    layer["b"].astype(jnp.float32)]
        else:
            mats = [layer["w"].astype(compute_dtype),
                    layer["b"].astype(jnp.float32)]
        for t in mats:
            flat_inputs.append(t)
            in_specs.append(pl.BlockSpec(t.shape, lambda i: (0, 0)))

    kernel = functools.partial(_density_mlp_kernel, num_layers, skips,
                               num_freqs, input_dim, in_dim, 1.0 / bound,
                               compute_dtype)

    out_t = pl.pallas_call(
        kernel,
        out_shape=jax.ShapeDtypeStruct((out_dim, n_pad), jnp.float32),
        grid_spec=pltpu.PrefetchScalarGridSpec(
            num_scalar_prefetch=0,
            grid=(n_pad // tile_n,),
            in_specs=in_specs,
            out_specs=pl.BlockSpec((out_dim, tile_n), lambda i: (0, i)),
        ),
        compiler_params=pltpu.CompilerParams(
            dimension_semantics=("parallel",),
        ),
    )(*flat_inputs)

    return jnp.transpose(out_t)[:n]                          # (N, out_dim)


# ----------------------------------------------------------------------------
# Pure-JAX reference (row-major, mirrors the PyTorch module exactly)
# ----------------------------------------------------------------------------
def density_network_ref(points, params, *, bound, num_freqs, num_layers, skips):
    x = points / bound
    parts = [x]
    for f in range(num_freqs):
        parts.append(jnp.sin(x * (2.0 ** f)))
    for f in range(num_freqs):
        parts.append(jnp.cos(x * (2.0 ** f)))
    feats = jnp.concatenate(parts, axis=-1)                  # (N, in_dim)

    h = feats
    for i in range(num_layers):
        layer = params[i]
        if i in skips:
            h = jnp.concatenate([feats, h], axis=-1)         # torch cat order
            w = jnp.concatenate([layer["w_x"], layer["w_h"]], axis=-1)
        else:
            w = layer["w"]
        h = h @ w.T + layer["b"][:, 0]
        if i < num_layers - 1:
            h = jnp.where(h >= 0, h, 0.01 * h)
        else:
            h = 1.0 / (1.0 + jnp.exp(-h))
    return h


if __name__ == "__main__":
    key = jax.random.PRNGKey(0)
    k_pts, k_par = jax.random.split(key)

    INPUT_DIM, NUM_FREQS = 3, 4          # encoder output_dim = 27
    NUM_LAYERS, HIDDEN_DIM = 8, 32       # hidden scaled down from 256 for the test
    SKIPS, OUT_DIM = (4,), 1
    BOUND = 0.2

    n_points = 4096                      # 8 grid steps at tile_n=512
    points = jax.random.uniform(
        k_pts, (n_points, INPUT_DIM), jnp.float32, minval=-BOUND, maxval=BOUND)

    params = init_density_params(
        k_par, INPUT_DIM, NUM_FREQS, HIDDEN_DIM, NUM_LAYERS, SKIPS, OUT_DIM)

    ref = density_network_ref(points, params, bound=BOUND, num_freqs=NUM_FREQS,
                              num_layers=NUM_LAYERS, skips=SKIPS)

    # f32 matmul path (tight-ish check; approx reciprocal in the sigmoid).
    out_f32 = density_network_forward(
        points, params, bound=BOUND, num_freqs=NUM_FREQS, num_layers=NUM_LAYERS,
        skips=SKIPS, tile_n=512, compute_dtype=jnp.float32)
    out_f32 = jax.block_until_ready(out_f32)
    assert out_f32.shape == (n_points, OUT_DIM)
    assert float(jnp.max(jnp.abs(out_f32 - ref))) < 5e-3, "f32 kernel mismatch"

    # bf16 matmul-input path (v6e/v7x MXU preference), f32 accumulate/activations.
    out_bf16 = density_network_forward(
        points, params, bound=BOUND, num_freqs=NUM_FREQS, num_layers=NUM_LAYERS,
        skips=SKIPS, tile_n=512, compute_dtype=jnp.bfloat16)
    out_bf16 = jax.block_until_ready(out_bf16)
    assert float(jnp.max(jnp.abs(out_bf16 - ref))) < 5e-2, "bf16 kernel mismatch"

    print("KERNEL_OK")
</pallas_src>

<mosaic_0001>
module attributes {stable_mosaic.version = 11 : i64} {
  func.func @_density_mlp_kernel(%arg0: i32, %arg1: memref<3x512xf32, #tpu.memory_space<vmem>>, %arg2: memref<32x3xf32, #tpu.memory_space<vmem>>, %arg3: memref<32x32xf32, #tpu.memory_space<vmem>>, %arg4: memref<32x1xf32, #tpu.memory_space<vmem>>, %arg5: memref<32x32xf32, #tpu.memory_space<vmem>>, %arg6: memref<32x1xf32, #tpu.memory_space<vmem>>, %arg7: memref<32x32xf32, #tpu.memory_space<vmem>>, %arg8: memref<32x1xf32, #tpu.memory_space<vmem>>, %arg9: memref<32x32xf32, #tpu.memory_space<vmem>>, %arg10: memref<32x1xf32, #tpu.memory_space<vmem>>, %arg11: memref<32x32xf32, #tpu.memory_space<vmem>>, %arg12: memref<32x32xf32, #tpu.memory_space<vmem>>, %arg13: memref<32x1xf32, #tpu.memory_space<vmem>>, %arg14: memref<32x32xf32, #tpu.memory_space<vmem>>, %arg15: memref<32x1xf32, #tpu.memory_space<vmem>>, %arg16: memref<32x32xf32, #tpu.memory_space<vmem>>, %arg17: memref<32x1xf32, #tpu.memory_space<vmem>>, %arg18: memref<1x32xf32, #tpu.memory_space<vmem>>, %arg19: memref<1x1xf32, #tpu.memory_space<vmem>>, %arg20: memref<1x512xf32, #tpu.memory_space<vmem>>) attributes {dimension_semantics = [#tpu.dimension_semantics<parallel>], iteration_bounds = array<i64: 8>, scalar_prefetch = 0 : i64, scratch_operands = 0 : i64, tpu.core_type = #tpu.core_type<tc>, window_params = [{transform_indices = @transform_0, window_bounds = array<i64: 3, 512>}, {pipeline_mode = #tpu.pipeline_mode<synchronous>, transform_indices = @transform_1, window_bounds = array<i64: 32, 3>}, {pipeline_mode = #tpu.pipeline_mode<synchronous>, transform_indices = @transform_2, window_bounds = array<i64: 32, 32>}, {pipeline_mode = #tpu.pipeline_mode<synchronous>, transform_indices = @transform_3, window_bounds = array<i64: 32, 1>}, {pipeline_mode = #tpu.pipeline_mode<synchronous>, transform_indices = @transform_4, window_bounds = array<i64: 32, 32>}, {pipeline_mode = #tpu.pipeline_mode<synchronous>, transform_indices = @transform_5, window_bounds = array<i64: 32, 1>}, {pipeline_mode = #tpu.pipeline_mode<synchronous>, transform_indices = @transform_6, window_bounds = array<i64: 32, 32>}, {pipeline_mode = #tpu.pipeline_mode<synchronous>, transform_indices = @transform_7, window_bounds = array<i64: 32, 1>}, {pipeline_mode = #tpu.pipeline_mode<synchronous>, transform_indices = @transform_8, window_bounds = array<i64: 32, 32>}, {pipeline_mode = #tpu.pipeline_mode<synchronous>, transform_indices = @transform_9, window_bounds = array<i64: 32, 1>}, {pipeline_mode = #tpu.pipeline_mode<synchronous>, transform_indices = @transform_10, window_bounds = array<i64: 32, 32>}, {pipeline_mode = #tpu.pipeline_mode<synchronous>, transform_indices = @transform_11, window_bounds = array<i64: 32, 32>}, {pipeline_mode = #tpu.pipeline_mode<synchronous>, transform_indices = @transform_12, window_bounds = array<i64: 32, 1>}, {pipeline_mode = #tpu.pipeline_mode<synchronous>, transform_indices = @transform_13, window_bounds = array<i64: 32, 32>}, {pipeline_mode = #tpu.pipeline_mode<synchronous>, transform_indices = @transform_14, window_bounds = array<i64: 32, 1>}, {pipeline_mode = #tpu.pipeline_mode<synchronous>, transform_indices = @transform_15, window_bounds = array<i64: 32, 32>}, {pipeline_mode = #tpu.pipeline_mode<synchronous>, transform_indices = @transform_16, window_bounds = array<i64: 32, 1>}, {pipeline_mode = #tpu.pipeline_mode<synchronous>, transform_indices = @transform_17, window_bounds = array<i64: 1, 32>}, {pipeline_mode = #tpu.pipeline_mode<synchronous>, transform_indices = @transform_18, window_bounds = array<i64: 1, 1>}, {transform_indices = @transform_19, window_bounds = array<i64: 1, 512>}]} {
    %c0 = arith.constant 0 : index
    %c0_0 = arith.constant 0 : index
    %0 = vector.load %arg1[%c0, %c0_0] : memref<3x512xf32, #tpu.memory_space<vmem>>, vector<3x512xf32>
    %cst = arith.constant 5.000000e+00 : f32
    %1 = vector.broadcast %cst : f32 to vector<3x512xf32>
    %2 = arith.mulf %0, %1 : vector<3x512xf32>
    %c0_1 = arith.constant 0 : index
    %c0_2 = arith.constant 0 : index
    %3 = vector.load %arg2[%c0_1, %c0_2] : memref<32x3xf32, #tpu.memory_space<vmem>>, vector<32x3xf32>
    %cst_3 = arith.constant dense<0.000000e+00> : vector<32x512xf32>
    %4 = tpu.matmul %3, %2, %cst_3 {dimension_numbers = #tpu.dot_dimension_numbers<[1], [0], [0], [1], [0, 0, 1, 1], [], []>} : vector<32x3xf32>, vector<3x512xf32>, vector<32x512xf32> -> vector<32x512xf32>
    %5 = tpu.iota {dimensions = array<i32: 0>} : vector<32x512xi32>
    %c15_i32 = arith.constant 15 : i32
    %6 = vector.broadcast %c15_i32 : i32 to vector<32x512xi32>
    %7 = arith.cmpi slt, %5, %6 : vector<32x512xi32>
    %cst_4 = arith.constant 1.57079637 : f32
    %8 = vector.broadcast %cst_4 : f32 to vector<32x512xf32>
    %9 = arith.addf %4, %8 : vector<32x512xf32>
    %10 = arith.select %7, %4, %9 : vector<32x512xi1>, vector<32x512xf32>
    %11 = math.sin %10 : vector<32x512xf32>
    %c3_i32 = arith.constant 3 : i32
    %12 = vector.broadcast %c3_i32 : i32 to vector<32x512xi32>
    %13 = arith.cmpi slt, %5, %12 : vector<32x512xi32>
    %c27_i32 = arith.constant 27 : i32
    %14 = vector.broadcast %c27_i32 : i32 to vector<32x512xi32>
    %15 = arith.cmpi slt, %5, %14 : vector<32x512xi32>
    %cst_5 = arith.constant 0.000000e+00 : f32
    %16 = vector.broadcast %cst_5 : f32 to vector<32x512xf32>
    %17 = arith.select %15, %11, %16 : vector<32x512xi1>, vector<32x512xf32>
    %18 = arith.select %13, %4, %17 : vector<32x512xi1>, vector<32x512xf32>
    %c0_6 = arith.constant 0 : index
    %c0_7 = arith.constant 0 : index
    %19 = vector.load %arg3[%c0_6, %c0_7] : memref<32x32xf32, #tpu.memory_space<vmem>>, vector<32x32xf32>
    %c0_8 = arith.constant 0 : index
    %c0_9 = arith.constant 0 : index
    %20 = vector.load %arg4[%c0_8, %c0_9] : memref<32x1xf32, #tpu.memory_space<vmem>>, vector<32x1xf32>
    %cst_10 = arith.constant dense<0.000000e+00> : vector<32x512xf32>
    %21 = tpu.matmul %19, %18, %cst_10 {dimension_numbers = #tpu.dot_dimension_numbers<[1], [0], [0], [1], [0, 0, 1, 1], [], []>} : vector<32x32xf32>, vector<32x512xf32>, vector<32x512xf32> -> vector<32x512xf32>
    %22 = vector.broadcast %20 : vector<32x1xf32> to vector<32x512xf32>
    %23 = arith.addf %21, %22 : vector<32x512xf32>
    %cst_11 = arith.constant 0.000000e+00 : f32
    %24 = vector.broadcast %cst_11 : f32 to vector<32x512xf32>
    %25 = arith.cmpf oge, %23, %24 : vector<32x512xf32>
    %cst_12 = arith.constant 0.00999999977 : f32
    %26 = vector.broadcast %cst_12 : f32 to vector<32x512xf32>
    %27 = arith.mulf %26, %23 : vector<32x512xf32>
    %28 = arith.select %25, %23, %27 : vector<32x512xi1>, vector<32x512xf32>
    %c0_13 = arith.constant 0 : index
    %c0_14 = arith.constant 0 : index
    %29 = vector.load %arg5[%c0_13, %c0_14] : memref<32x32xf32, #tpu.memory_space<vmem>>, vector<32x32xf32>
    %c0_15 = arith.constant 0 : index
    %c0_16 = arith.constant 0 : index
    %30 = vector.load %arg6[%c0_15, %c0_16] : memref<32x1xf32, #tpu.memory_space<vmem>>, vector<32x1xf32>
    %cst_17 = arith.constant dense<0.000000e+00> : vector<32x512xf32>
    %31 = tpu.matmul %29, %28, %cst_17 {dimension_numbers = #tpu.dot_dimension_numbers<[1], [0], [0], [1], [0, 0, 1, 1], [], []>} : vector<32x32xf32>, vector<32x512xf32>, vector<32x512xf32> -> vector<32x512xf32>
    %32 = vector.broadcast %30 : vector<32x1xf32> to vector<32x512xf32>
    %33 = arith.addf %31, %32 : vector<32x512xf32>
    %cst_18 = arith.constant 0.000000e+00 : f32
    %34 = vector.broadcast %cst_18 : f32 to vector<32x512xf32>
    %35 = arith.cmpf oge, %33, %34 : vector<32x512xf32>
    %cst_19 = arith.constant 0.00999999977 : f32
    %36 = vector.broadcast %cst_19 : f32 to vector<32x512xf32>
    %37 = arith.mulf %36, %33 : vector<32x512xf32>
    %38 = arith.select %35, %33, %37 : vector<32x512xi1>, vector<32x512xf32>
    %c0_20 = arith.constant 0 : index
    %c0_21 = arith.constant 0 : index
    %39 = vector.load %arg7[%c0_20, %c0_21] : memref<32x32xf32, #tpu.memory_space<vmem>>, vector<32x32xf32>
    %c0_22 = arith.constant 0 : index
    %c0_23 = arith.constant 0 : index
    %40 = vector.load %arg8[%c0_22, %c0_23] : memref<32x1xf32, #tpu.memory_space<vmem>>, vector<32x1xf32>
    %cst_24 = arith.constant dense<0.000000e+00> : vector<32x512xf32>
    %41 = tpu.matmul %39, %38, %cst_24 {dimension_numbers = #tpu.dot_dimension_numbers<[1], [0], [0], [1], [0, 0, 1, 1], [], []>} : vector<32x32xf32>, vector<32x512xf32>, vector<32x512xf32> -> vector<32x512xf32>
    %42 = vector.broadcast %40 : vector<32x1xf32> to vector<32x512xf32>
    %43 = arith.addf %41, %42 : vector<32x512xf32>
    %cst_25 = arith.constant 0.000000e+00 : f32
    %44 = vector.broadcast %cst_25 : f32 to vector<32x512xf32>
    %45 = arith.cmpf oge, %43, %44 : vector<32x512xf32>
    %cst_26 = arith.constant 0.00999999977 : f32
    %46 = vector.broadcast %cst_26 : f32 to vector<32x512xf32>
    %47 = arith.mulf %46, %43 : vector<32x512xf32>
    %48 = arith.select %45, %43, %47 : vector<32x512xi1>, vector<32x512xf32>
    %c0_27 = arith.constant 0 : index
    %c0_28 = arith.constant 0 : index
    %49 = vector.load %arg9[%c0_27, %c0_28] : memref<32x32xf32, #tpu.memory_space<vmem>>, vector<32x32xf32>
    %c0_29 = arith.constant 0 : index
    %c0_30 = arith.constant 0 : index
    %50 = vector.load %arg10[%c0_29, %c0_30] : memref<32x1xf32, #tpu.memory_space<vmem>>, vector<32x1xf32>
    %cst_31 = arith.constant dense<0.000000e+00> : vector<32x512xf32>
    %51 = tpu.matmul %49, %48, %cst_31 {dimension_numbers = #tpu.dot_dimension_numbers<[1], [0], [0], [1], [0, 0, 1, 1], [], []>} : vector<32x32xf32>, vector<32x512xf32>, vector<32x512xf32> -> vector<32x512xf32>
    %52 = vector.broadcast %50 : vector<32x1xf32> to vector<32x512xf32>
    %53 = arith.addf %51, %52 : vector<32x512xf32>
    %cst_32 = arith.constant 0.000000e+00 : f32
    %54 = vector.broadcast %cst_32 : f32 to vector<32x512xf32>
    %55 = arith.cmpf oge, %53, %54 : vector<32x512xf32>
    %cst_33 = arith.constant 0.00999999977 : f32
    %56 = vector.broadcast %cst_33 : f32 to vector<32x512xf32>
    %57 = arith.mulf %56, %53 : vector<32x512xf32>
    %58 = arith.select %55, %53, %57 : vector<32x512xi1>, vector<32x512xf32>
    %c0_34 = arith.constant 0 : index
    %c0_35 = arith.constant 0 : index
    %59 = vector.load %arg11[%c0_34, %c0_35] : memref<32x32xf32, #tpu.memory_space<vmem>>, vector<32x32xf32>
    %c0_36 = arith.constant 0 : index
    %c0_37 = arith.constant 0 : index
    %60 = vector.load %arg12[%c0_36, %c0_37] : memref<32x32xf32, #tpu.memory_space<vmem>>, vector<32x32xf32>
    %c0_38 = arith.constant 0 : index
    %c0_39 = arith.constant 0 : index
    %61 = vector.load %arg13[%c0_38, %c0_39] : memref<32x1xf32, #tpu.memory_space<vmem>>, vector<32x1xf32>
    %cst_40 = arith.constant dense<0.000000e+00> : vector<32x512xf32>
    %62 = tpu.matmul %60, %58, %cst_40 {dimension_numbers = #tpu.dot_dimension_numbers<[1], [0], [0], [1], [0, 0, 1, 1], [], []>} : vector<32x32xf32>, vector<32x512xf32>, vector<32x512xf32> -> vector<32x512xf32>
    %cst_41 = arith.constant dense<0.000000e+00> : vector<32x512xf32>
    %63 = tpu.matmul %59, %18, %cst_41 {dimension_numbers = #tpu.dot_dimension_numbers<[1], [0], [0], [1], [0, 0, 1, 1], [], []>} : vector<32x32xf32>, vector<32x512xf32>, vector<32x512xf32> -> vector<32x512xf32>
    %64 = arith.addf %62, %63 : vector<32x512xf32>
    %65 = vector.broadcast %61 : vector<32x1xf32> to vector<32x512xf32>
    %66 = arith.addf %64, %65 : vector<32x512xf32>
    %cst_42 = arith.constant 0.000000e+00 : f32
    %67 = vector.broadcast %cst_42 : f32 to vector<32x512xf32>
    %68 = arith.cmpf oge, %66, %67 : vector<32x512xf32>
    %cst_43 = arith.constant 0.00999999977 : f32
    %69 = vector.broadcast %cst_43 : f32 to vector<32x512xf32>
    %70 = arith.mulf %69, %66 : vector<32x512xf32>
    %71 = arith.select %68, %66, %70 : vector<32x512xi1>, vector<32x512xf32>
    %c0_44 = arith.constant 0 : index
    %c0_45 = arith.constant 0 : index
    %72 = vector.load %arg14[%c0_44, %c0_45] : memref<32x32xf32, #tpu.memory_space<vmem>>, vector<32x32xf32>
    %c0_46 = arith.constant 0 : index
    %c0_47 = arith.constant 0 : index
    %73 = vector.load %arg15[%c0_46, %c0_47] : memref<32x1xf32, #tpu.memory_space<vmem>>, vector<32x1xf32>
    %cst_48 = arith.constant dense<0.000000e+00> : vector<32x512xf32>
    %74 = tpu.matmul %72, %71, %cst_48 {dimension_numbers = #tpu.dot_dimension_numbers<[1], [0], [0], [1], [0, 0, 1, 1], [], []>} : vector<32x32xf32>, vector<32x512xf32>, vector<32x512xf32> -> vector<32x512xf32>
    %75 = vector.broadcast %73 : vector<32x1xf32> to vector<32x512xf32>
    %76 = arith.addf %74, %75 : vector<32x512xf32>
    %cst_49 = arith.constant 0.000000e+00 : f32
    %77 = vector.broadcast %cst_49 : f32 to vector<32x512xf32>
    %78 = arith.cmpf oge, %76, %77 : vector<32x512xf32>
    %cst_50 = arith.constant 0.00999999977 : f32
    %79 = vector.broadcast %cst_50 : f32 to vector<32x512xf32>
    %80 = arith.mulf %79, %76 : vector<32x512xf32>
    %81 = arith.select %78, %76, %80 : vector<32x512xi1>, vector<32x512xf32>
    %c0_51 = arith.constant 0 : index
    %c0_52 = arith.constant 0 : index
    %82 = vector.load %arg16[%c0_51, %c0_52] : memref<32x32xf32, #tpu.memory_space<vmem>>, vector<32x32xf32>
    %c0_53 = arith.constant 0 : index
    %c0_54 = arith.constant 0 : index
    %83 = vector.load %arg17[%c0_53, %c0_54] : memref<32x1xf32, #tpu.memory_space<vmem>>, vector<32x1xf32>
    %cst_55 = arith.constant dense<0.000000e+00> : vector<32x512xf32>
    %84 = tpu.matmul %82, %81, %cst_55 {dimension_numbers = #tpu.dot_dimension_numbers<[1], [0], [0], [1], [0, 0, 1, 1], [], []>} : vector<32x32xf32>, vector<32x512xf32>, vector<32x512xf32> -> vector<32x512xf32>
    %85 = vector.broadcast %83 : vector<32x1xf32> to vector<32x512xf32>
    %86 = arith.addf %84, %85 : vector<32x512xf32>
    %cst_56 = arith.constant 0.000000e+00 : f32
    %87 = vector.broadcast %cst_56 : f32 to vector<32x512xf32>
    %88 = arith.cmpf oge, %86, %87 : vector<32x512xf32>
    %cst_57 = arith.constant 0.00999999977 : f32
    %89 = vector.broadcast %cst_57 : f32 to vector<32x512xf32>
    %90 = arith.mulf %89, %86 : vector<32x512xf32>
    %91 = arith.select %88, %86, %90 : vector<32x512xi1>, vector<32x512xf32>
    %c0_58 = arith.constant 0 : index
    %c0_59 = arith.constant 0 : index
    %92 = vector.load %arg18[%c0_58, %c0_59] : memref<1x32xf32, #tpu.memory_space<vmem>>, vector<1x32xf32>
    %c0_60 = arith.constant 0 : index
    %c0_61 = arith.constant 0 : index
    %93 = vector.load %arg19[%c0_60, %c0_61] : memref<1x1xf32, #tpu.memory_space<vmem>>, vector<1x1xf32>
    %cst_62 = arith.constant dense<0.000000e+00> : vector<1x512xf32>
    %94 = tpu.matmul %92, %91, %cst_62 {dimension_numbers = #tpu.dot_dimension_numbers<[1], [0], [0], [1], [0, 0, 1, 1], [], []>} : vector<1x32xf32>, vector<32x512xf32>, vector<1x512xf32> -> vector<1x512xf32>
    %95 = vector.broadcast %93 : vector<1x1xf32> to vector<1x512xf32>
    %96 = arith.addf %94, %95 : vector<1x512xf32>
    %cst_63 = arith.constant 0.000000e+00 : f32
    %97 = vector.broadcast %cst_63 : f32 to vector<1x512xf32>
    %98 = arith.subf %97, %96 : vector<1x512xf32>
    %99 = math.exp %98 : vector<1x512xf32>
    %cst_64 = arith.constant 1.000000e+00 : f32
    %100 = vector.broadcast %cst_64 : f32 to vector<1x512xf32>
    %101 = arith.addf %100, %99 : vector<1x512xf32>
    %102 = tpu.reciprocal %101 {approx = true} : vector<1x512xf32> -> vector<1x512xf32>
    %c0_65 = arith.constant 0 : index
    %c0_66 = arith.constant 0 : index
    %103 = vector.load %arg20[%c0_65, %c0_66] : memref<1x512xf32, #tpu.memory_space<vmem>>, vector<1x512xf32>
    tpu.vector_store %arg20[%c0_65, %c0_66], %102 {strides = array<i32>} : memref<1x512xf32, #tpu.memory_space<vmem>>, vector<1x512xf32>,
    return
  }
  func.func @transform_0(%arg0: i32) -> (i32, i32) {
    %c0_i32 = arith.constant 0 : i32
    %c0_i32_0 = arith.constant 0 : i32
    return %c0_i32, %arg0 : i32, i32
  }
  func.func @transform_1(%arg0: i32) -> (i32, i32) {
    %c0_i32 = arith.constant 0 : i32
    %c0_i32_0 = arith.constant 0 : i32
    %c0_i32_1 = arith.constant 0 : i32
    return %c0_i32, %c0_i32_0 : i32, i32
  }
  func.func @transform_2(%arg0: i32) -> (i32, i32) {
    %c0_i32 = arith.constant 0 : i32
    %c0_i32_0 = arith.constant 0 : i32
    %c0_i32_1 = arith.constant 0 : i32
    return %c0_i32, %c0_i32_0 : i32, i32
  }
  func.func @transform_3(%arg0: i32) -> (i32, i32) {
    %c0_i32 = arith.constant 0 : i32
    %c0_i32_0 = arith.constant 0 : i32
    %c0_i32_1 = arith.constant 0 : i32
    return %c0_i32, %c0_i32_0 : i32, i32
  }
  func.func @transform_4(%arg0: i32) -> (i32, i32) {
    %c0_i32 = arith.constant 0 : i32
    %c0_i32_0 = arith.constant 0 : i32
    %c0_i32_1 = arith.constant 0 : i32
    return %c0_i32, %c0_i32_0 : i32, i32
  }
  func.func @transform_5(%arg0: i32) -> (i32, i32) {
    %c0_i32 = arith.constant 0 : i32
    %c0_i32_0 = arith.constant 0 : i32
    %c0_i32_1 = arith.constant 0 : i32
    return %c0_i32, %c0_i32_0 : i32, i32
  }
  func.func @transform_6(%arg0: i32) -> (i32, i32) {
    %c0_i32 = arith.constant 0 : i32
    %c0_i32_0 = arith.constant 0 : i32
    %c0_i32_1 = arith.constant 0 : i32
    return %c0_i32, %c0_i32_0 : i32, i32
  }
  func.func @transform_7(%arg0: i32) -> (i32, i32) {
    %c0_i32 = arith.constant 0 : i32
    %c0_i32_0 = arith.constant 0 : i32
    %c0_i32_1 = arith.constant 0 : i32
    return %c0_i32, %c0_i32_0 : i32, i32
  }
  func.func @transform_8(%arg0: i32) -> (i32, i32) {
    %c0_i32 = arith.constant 0 : i32
    %c0_i32_0 = arith.constant 0 : i32
    %c0_i32_1 = arith.constant 0 : i32
    return %c0_i32, %c0_i32_0 : i32, i32
  }
  func.func @transform_9(%arg0: i32) -> (i32, i32) {
    %c0_i32 = arith.constant 0 : i32
    %c0_i32_0 = arith.constant 0 : i32
    %c0_i32_1 = arith.constant 0 : i32
    return %c0_i32, %c0_i32_0 : i32, i32
  }
  func.func @transform_10(%arg0: i32) -> (i32, i32) {
    %c0_i32 = arith.constant 0 : i32
    %c0_i32_0 = arith.constant 0 : i32
    %c0_i32_1 = arith.constant 0 : i32
    return %c0_i32, %c0_i32_0 : i32, i32
  }
  func.func @transform_11(%arg0: i32) -> (i32, i32) {
    %c0_i32 = arith.constant 0 : i32
    %c0_i32_0 = arith.constant 0 : i32
    %c0_i32_1 = arith.constant 0 : i32
    return %c0_i32, %c0_i32_0 : i32, i32
  }
  func.func @transform_12(%arg0: i32) -> (i32, i32) {
    %c0_i32 = arith.constant 0 : i32
    %c0_i32_0 = arith.constant 0 : i32
    %c0_i32_1 = arith.constant 0 : i32
    return %c0_i32, %c0_i32_0 : i32, i32
  }
  func.func @transform_13(%arg0: i32) -> (i32, i32) {
    %c0_i32 = arith.constant 0 : i32
    %c0_i32_0 = arith.constant 0 : i32
    %c0_i32_1 = arith.constant 0 : i32
    return %c0_i32, %c0_i32_0 : i32, i32
  }
  func.func @transform_14(%arg0: i32) -> (i32, i32) {
    %c0_i32 = arith.constant 0 : i32
    %c0_i32_0 = arith.constant 0 : i32
    %c0_i32_1 = arith.constant 0 : i32
    return %c0_i32, %c0_i32_0 : i32, i32
  }
  func.func @transform_15(%arg0: i32) -> (i32, i32) {
    %c0_i32 = arith.constant 0 : i32
    %c0_i32_0 = arith.constant 0 : i32
    %c0_i32_1 = arith.constant 0 : i32
    return %c0_i32, %c0_i32_0 : i32, i32
  }
  func.func @transform_16(%arg0: i32) -> (i32, i32) {
    %c0_i32 = arith.constant 0 : i32
    %c0_i32_0 = arith.constant 0 : i32
    %c0_i32_1 = arith.constant 0 : i32
    return %c0_i32, %c0_i32_0 : i32, i32
  }
  func.func @transform_17(%arg0: i32) -> (i32, i32) {
    %c0_i32 = arith.constant 0 : i32
    %c0_i32_0 = arith.constant 0 : i32
    %c0_i32_1 = arith.constant 0 : i32
    return %c0_i32, %c0_i32_0 : i32, i32
  }
  func.func @transform_18(%arg0: i32) -> (i32, i32) {
    %c0_i32 = arith.constant 0 : i32
    %c0_i32_0 = arith.constant 0 : i32
    %c0_i32_1 = arith.constant 0 : i32
    return %c0_i32, %c0_i32_0 : i32, i32
  }
  func.func @transform_19(%arg0: i32) -> (i32, i32) {
    %c0_i32 = arith.constant 0 : i32
    %c0_i32_0 = arith.constant 0 : i32
    return %c0_i32, %arg0 : i32, i32
  }
}

</mosaic_0001>

<llo_original>
// kernel: tpu_custom_call.1
$region0: #{tpu_custom_call.1}
  #allocation0 [shape = 'u32[]', space=smem, size = 0x4, offset = 0x4, fixed_abs, tag = 'smem constant byte address 0x4 - core index']
  #allocation1 [shape = 'u32[144,128]{1,0:T(1,128)}', space=vmem, size = 0x12000, scoped, tag = 'internal scratch']
  #allocation2 [shape = 'f32[1,1]{1,0:T(1,128)S(1)}', space=vmem, size = 0x200, scoped, tag = 'scoped memory for tpu_custom_call.1']
  %s0 = inlined_call_operand.vmem [shape: f32[3,4096], index: 0, kind: input, shape index: {}]
  %s1 = inlined_call_operand.vmem [shape: f32[32,3], index: 1, kind: input, shape index: {}]
  %s2 = inlined_call_operand.vmem [shape: f32[32,32], index: 2, kind: input, shape index: {}]
  %s3 = inlined_call_operand.vmem [shape: f32[32,1], index: 3, kind: input, shape index: {}]
  %s4 = inlined_call_operand.vmem [shape: f32[32,32], index: 4, kind: input, shape index: {}]
  %s5 = inlined_call_operand.vmem [shape: f32[32,1], index: 5, kind: input, shape index: {}]
  %s6 = inlined_call_operand.vmem [shape: f32[32,32], index: 6, kind: input, shape index: {}]
  %s7 = inlined_call_operand.vmem [shape: f32[32,1], index: 7, kind: input, shape index: {}]
  %s8 = inlined_call_operand.vmem [shape: f32[32,32], index: 8, kind: input, shape index: {}]
  %s9 = inlined_call_operand.vmem [shape: f32[32,1], index: 9, kind: input, shape index: {}]
  %s10 = inlined_call_operand.hbm [shape: f32[32,32], index: 10, kind: input, shape index: {}]
  %s11 = inlined_call_operand.vmem [shape: f32[32,32], index: 11, kind: input, shape index: {}]
  %s12 = inlined_call_operand.vmem [shape: f32[32,1], index: 12, kind: input, shape index: {}]
  %s13 = inlined_call_operand.hbm [shape: f32[32,32], index: 13, kind: input, shape index: {}]
  %s14 = inlined_call_operand.vmem [shape: f32[32,1], index: 14, kind: input, shape index: {}]
  %s15 = inlined_call_operand.hbm [shape: f32[32,32], index: 15, kind: input, shape index: {}]
  %s16 = inlined_call_operand.vmem [shape: f32[32,1], index: 16, kind: input, shape index: {}]
  %s17 = inlined_call_operand.vmem [shape: f32[1,32], index: 17, kind: input, shape index: {}]
  %s18 = inlined_call_operand.<no memory space> [shape: f32[1,1], index: 18, kind: input, shape index: {}]
  %s19 = inlined_call_operand.hbm [shape: f32[1,4096], index: 19, kind: output, shape index: {}]
  %s20 = sld [smem:[#allocation0]]
  $region121: #{tpu_custom_call.1} parent=0
    _
  %s22 = ssub.s32 1, %s20
  %s23 = scalar_select 0, %s22, %s20
  %v24 = vstv %s18
  %25 = vst [vmem:[#allocation2] sm:$0x1] %v24
  $region1: #{tpu_custom_call.1} parent=0
    #allocation3 [shape = 'u8[16384]{0}', space=vmem, size = 0x4000, scoped, tag = 'input window, operand 10, single buffered']
    #allocation4 [shape = 's32[2]{0}', space=sflag, size = 0x8, scoped, tag = 'scoped memory for tpu_custom_call.1']
    #allocation5 [shape = 's32[2]{0}', space=sflag, size = 0x8, scoped, tag = 'scoped memory for tpu_custom_call.1']
    #allocation6 [shape = 'u8[16384]{0}', space=vmem, size = 0x4000, scoped, tag = 'input window, operand 13, single buffered']
    #allocation7 [shape = 's32[1]{0}', space=sflag, size = 0x4, scoped, tag = 'scoped memory for tpu_custom_call.1']
    #allocation8 [shape = 'u8[16384]{0}', space=vmem, size = 0x4000, scoped, tag = 'input window, operand 15, single buffered']
    #allocation9 [shape = 'u8[4096]{0}', space=vmem, size = 0x1000, scoped, tag = 'output window, operand 0']
    %26 = vsyncpa [#allocation4], 0
    %27 = vsyncpa [#allocation7], 0
    %28 = vsyncpa [#allocation5], 0
    %s29 = scalar_lea.sflag [#allocation5], 1
    %30 = vsyncpa %s29, 0
    loop: start=0, step=1, limit=10
    $region2: #{tpu_custom_call.1} parent=1 // loop_pre_header
      _
    $region3: #{tpu_custom_call.1} parent=1 // loop_header
      %s32 = sphi 0, %s36
      %p33 = scmp.ge.s32.totalorder %s32, 10
      %s42 = sphi 0, %s44
      %s45 = sphi 0, %s42
      %s46 = sphi 0, %s45
      %s62 = sphi 0, %s46
      %s66 = sphi 0, %s66
      %s68 = sphi 0, %s66
      %s69 = sphi 0, %s68
      %s83 = sphi 0, %s69
      %s87 = sphi 0, %s87
      %s89 = sphi 0, %s87
      %s90 = sphi 0, %s89
      %s104 = sphi 0, %s90
      %s108 = sphi 0, %s108
      %s110 = sphi 0, %s108
      %s111 = sphi 0, %s110
      %s125 = sphi 0, %s111
      %s129 = sphi 0, %s129
      %s131 = sphi 0, %s129
      %s132 = sphi 0, %s131
      %s146 = sphi 0, %s132
      %s150 = sphi 0, %s150
      %s152 = sphi 0, %s150
      %s153 = sphi 0, %s152
      %s167 = sphi 0, %s153
      %s171 = sphi 0, %s171
      %s173 = sphi 0, %s171
      %s174 = sphi 0, %s173
      %s188 = sphi 0, %s174
      %s192 = sphi 0, %s192
      %s194 = sphi 0, %s192
      %s195 = sphi 0, %s194
      %s209 = sphi 0, %s195
      %s213 = sphi 0, %s213
      %s215 = sphi 0, %s213
      %s216 = sphi 0, %s215
      %s230 = sphi 0, %s216
      %s234 = sphi 0, %s234
      %s236 = sphi 0, %s234
      %s237 = sphi 0, %s236
      %s251 = sphi 0, %s237
      %s255 = sphi 0, %s255
      %s257 = sphi 0, %s255
      %s258 = sphi 0, %s257
      %s272 = sphi 0, %s258
      %s276 = sphi 0, %s276
      %s278 = sphi 0, %s276
      %s279 = sphi 0, %s278
      %s293 = sphi 0, %s279
      %s297 = sphi 0, %s297
      %s299 = sphi 0, %s297
      %s300 = sphi 0, %s299
      %s314 = sphi 0, %s300
      %s318 = sphi 0, %s318
      %s320 = sphi 0, %s318
      %s321 = sphi 0, %s320
      %s335 = sphi 0, %s321
      %s339 = sphi 0, %s339
      %s341 = sphi 0, %s339
      %s342 = sphi 0, %s341
      %s356 = sphi 0, %s342
      %s360 = sphi 0, %s360
      %s362 = sphi 0, %s360
      %s363 = sphi 0, %s362
      %s377 = sphi 0, %s363
      %s381 = sphi 0, %s381
      %s383 = sphi 0, %s381
      %s384 = sphi 0, %s383
      %s398 = sphi 0, %s384
      %s402 = sphi 0, %s402
      %s404 = sphi 0, %s402
      %s405 = sphi 0, %s404
      %s419 = sphi 0, %s405
      %s423 = sphi 0, %s423
      %s425 = sphi 0, %s423
      %s426 = sphi 0, %s425
      %s440 = sphi 0, %s426
      %s446 = sphi 0, %s448
      %s449 = sphi 0, %s446
      %s450 = sphi 0, %s449
      %s466 = sphi 0, %s450
    $region4: #{tpu_custom_call.1} parent=1 // loop_header_branch
      %35 = sbr.rel (%p33) target = $region8
    $region5: #{tpu_custom_call.1} parent=1 // loop_body
      %s37 = ssub.s32 %s32, 1
      %s38 = ssub.s32 %s32, 2
      %s39 = sadd.s32 %s32, 1
      %s40 = ssub.s32 %s32, %s39
      %p41 = scmp.eq.s32.totalorder %s40, 0
      %s43 = sadd.s32 %s42, 1
      %s44 = scalar_select %p41, %s42, %s43
      %p47 = pneg %p41
      %p48 = scmp.eq.s32.totalorder %s32, 7
      %p49 = por %p47, %p48
      %p50 = scmp.ne.s32.totalorder %s42, %s45
      %p51 = scmp.eq.s32.totalorder %s32, 0
      %p52 = por %p50, %p51
      %p53 = scmp.ne.s32.totalorder %s42, %s45
      %p54 = scmp.eq.s32.totalorder %s37, 7
      %p55 = por %p53, %p54
      %p56 = scmp.ne.s32.totalorder %s45, %s46
      %p57 = scmp.eq.s32.totalorder %s37, 0
      %p58 = por %p56, %p57
      %p59 = scmp.ne.s32.totalorder %s45, %s46
      %p60 = scmp.eq.s32.totalorder %s38, 7
      %p61 = por %p59, %p60
      %p63 = scmp.ne.s32.totalorder %s46, %s62
      %p64 = scmp.eq.s32.totalorder %s38, 0
      %p65 = por %p63, %p64
      %s67 = sadd.s32 %s66, 1
      %p70 = scmp.eq.s32.totalorder %s32, 7
      %p71 = scmp.ne.s32.totalorder %s66, %s68
      %p72 = scmp.eq.s32.totalorder %s32, 0
      %p73 = por %p71, %p72
      %p74 = scmp.ne.s32.totalorder %s66, %s68
      %p75 = scmp.eq.s32.totalorder %s37, 7
      %p76 = por %p74, %p75
      %p77 = scmp.ne.s32.totalorder %s68, %s69
      %p78 = scmp.eq.s32.totalorder %s37, 0
      %p79 = por %p77, %p78
      %p80 = scmp.ne.s32.totalorder %s68, %s69
      %p81 = scmp.eq.s32.totalorder %s38, 7
      %p82 = por %p80, %p81
      %p84 = scmp.ne.s32.totalorder %s69, %s83
      %p85 = scmp.eq.s32.totalorder %s38, 0
      %p86 = por %p84, %p85
      %s88 = sadd.s32 %s87, 1
      %p91 = scmp.eq.s32.totalorder %s32, 7
      %p92 = scmp.ne.s32.totalorder %s87, %s89
      %p93 = scmp.eq.s32.totalorder %s32, 0
      %p94 = por %p92, %p93
      %p95 = scmp.ne.s32.totalorder %s87, %s89
      %p96 = scmp.eq.s32.totalorder %s37, 7
      %p97 = por %p95, %p96
      %p98 = scmp.ne.s32.totalorder %s89, %s90
      %p99 = scmp.eq.s32.totalorder %s37, 0
      %p100 = por %p98, %p99
      %p101 = scmp.ne.s32.totalorder %s89, %s90
      %p102 = scmp.eq.s32.totalorder %s38, 7
      %p103 = por %p101, %p102
      %p105 = scmp.ne.s32.totalorder %s90, %s104
      %p106 = scmp.eq.s32.totalorder %s38, 0
      %p107 = por %p105, %p106
      %s109 = sadd.s32 %s108, 1
      %p112 = scmp.eq.s32.totalorder %s32, 7
      %p113 = scmp.ne.s32.totalorder %s108, %s110
      %p114 = scmp.eq.s32.totalorder %s32, 0
      %p115 = por %p113, %p114
      %p116 = scmp.ne.s32.totalorder %s108, %s110
      %p117 = scmp.eq.s32.totalorder %s37, 7
      %p118 = por %p116, %p117
      %p119 = scmp.ne.s32.totalorder %s110, %s111
      %p120 = scmp.eq.s32.totalorder %s37, 0
      %p121 = por %p119, %p120
      %p122 = scmp.ne.s32.totalorder %s110, %s111
      %p123 = scmp.eq.s32.totalorder %s38, 7
      %p124 = por %p122, %p123
      %p126 = scmp.ne.s32.totalorder %s111, %s125
      %p127 = scmp.eq.s32.totalorder %s38, 0
      %p128 = por %p126, %p127
      %s130 = sadd.s32 %s129, 1
      %p133 = scmp.eq.s32.totalorder %s32, 7
      %p134 = scmp.ne.s32.totalorder %s129, %s131
      %p135 = scmp.eq.s32.totalorder %s32, 0
      %p136 = por %p134, %p135
      %p137 = scmp.ne.s32.totalorder %s129, %s131
      %p138 = scmp.eq.s32.totalorder %s37, 7
      %p139 = por %p137, %p138
      %p140 = scmp.ne.s32.totalorder %s131, %s132
      %p141 = scmp.eq.s32.totalorder %s37, 0
      %p142 = por %p140, %p141
      %p143 = scmp.ne.s32.totalorder %s131, %s132
      %p144 = scmp.eq.s32.totalorder %s38, 7
      %p145 = por %p143, %p144
      %p147 = scmp.ne.s32.totalorder %s132, %s146
      %p148 = scmp.eq.s32.totalorder %s38, 0
      %p149 = por %p147, %p148
      %s151 = sadd.s32 %s150, 1
      %p154 = scmp.eq.s32.totalorder %s32, 7
      %p155 = scmp.ne.s32.totalorder %s150, %s152
      %p156 = scmp.eq.s32.totalorder %s32, 0
      %p157 = por %p155, %p156
      %p158 = scmp.ne.s32.totalorder %s150, %s152
      %p159 = scmp.eq.s32.totalorder %s37, 7
      %p160 = por %p158, %p159
      %p161 = scmp.ne.s32.totalorder %s152, %s153
      %p162 = scmp.eq.s32.totalorder %s37, 0
      %p163 = por %p161, %p162
      %p164 = scmp.ne.s32.totalorder %s152, %s153
      %p165 = scmp.eq.s32.totalorder %s38, 7
      %p166 = por %p164, %p165
      %p168 = scmp.ne.s32.totalorder %s153, %s167
      %p169 = scmp.eq.s32.totalorder %s38, 0
      %p170 = por %p168, %p169
      %s172 = sadd.s32 %s171, 1
      %p175 = scmp.eq.s32.totalorder %s32, 7
      %p176 = scmp.ne.s32.totalorder %s171, %s173
      %p177 = scmp.eq.s32.totalorder %s32, 0
      %p178 = por %p176, %p177
      %p179 = scmp.ne.s32.totalorder %s171, %s173
      %p180 = scmp.eq.s32.totalorder %s37, 7
      %p181 = por %p179, %p180
      %p182 = scmp.ne.s32.totalorder %s173, %s174
      %p183 = scmp.eq.s32.totalorder %s37, 0
      %p184 = por %p182, %p183
      %p185 = scmp.ne.s32.totalorder %s173, %s174
      %p186 = scmp.eq.s32.totalorder %s38, 7
      %p187 = por %p185, %p186
      %p189 = scmp.ne.s32.totalorder %s174, %s188
      %p190 = scmp.eq.s32.totalorder %s38, 0
      %p191 = por %p189, %p190
      %s193 = sadd.s32 %s192, 1
      %p196 = scmp.eq.s32.totalorder %s32, 7
      %p197 = scmp.ne.s32.totalorder %s192, %s194
      %p198 = scmp.eq.s32.totalorder %s32, 0
      %p199 = por %p197, %p198
      %p200 = scmp.ne.s32.totalorder %s192, %s194
      %p201 = scmp.eq.s32.totalorder %s37, 7
      %p202 = por %p200, %p201
      %p203 = scmp.ne.s32.totalorder %s194, %s195
      %p204 = scmp.eq.s32.totalorder %s37, 0
      %p205 = por %p203, %p204
      %p206 = scmp.ne.s32.totalorder %s194, %s195
      %p207 = scmp.eq.s32.totalorder %s38, 7
      %p208 = por %p206, %p207
      %p210 = scmp.ne.s32.totalorder %s195, %s209
      %p211 = scmp.eq.s32.totalorder %s38, 0
      %p212 = por %p210, %p211
      %s214 = sadd.s32 %s213, 1
      %p217 = scmp.eq.s32.totalorder %s32, 7
      %p218 = scmp.ne.s32.totalorder %s213, %s215
      %p219 = scmp.eq.s32.totalorder %s32, 0
      %p220 = por %p218, %p219
      %p221 = scmp.ne.s32.totalorder %s213, %s215
      %p222 = scmp.eq.s32.totalorder %s37, 7
      %p223 = por %p221, %p222
      %p224 = scmp.ne.s32.totalorder %s215, %s216
      %p225 = scmp.eq.s32.totalorder %s37, 0
      %p226 = por %p224, %p225
      %p227 = scmp.ne.s32.totalorder %s215, %s216
      %p228 = scmp.eq.s32.totalorder %s38, 7
      %p229 = por %p227, %p228
      %p231 = scmp.ne.s32.totalorder %s216, %s230
      %p232 = scmp.eq.s32.totalorder %s38, 0
      %p233 = por %p231, %p232
      %s235 = sadd.s32 %s234, 1
      %p238 = scmp.eq.s32.totalorder %s32, 7
      %p239 = scmp.ne.s32.totalorder %s234, %s236
      %p240 = scmp.eq.s32.totalorder %s32, 0
      %p241 = por %p239, %p240
      %p242 = scmp.ne.s32.totalorder %s234, %s236
      %p243 = scmp.eq.s32.totalorder %s37, 7
      %p244 = por %p242, %p243
      %p245 = scmp.ne.s32.totalorder %s236, %s237
      %p246 = scmp.eq.s32.totalorder %s37, 0
      %p247 = por %p245, %p246
      %p248 = scmp.ne.s32.totalorder %s236, %s237
      %p249 = scmp.eq.s32.totalorder %s38, 7
      %p250 = por %p248, %p249
      %p252 = scmp.ne.s32.totalorder %s237, %s251
      %p253 = scmp.eq.s32.totalorder %s38, 0
      %p254 = por %p252, %p253
      %s256 = sadd.s32 %s255, 1
      %p259 = scmp.eq.s32.totalorder %s32, 7
      %p260 = scmp.ne.s32.totalorder %s255, %s257
      %p261 = scmp.eq.s32.totalorder %s32, 0
      %p262 = por %p260, %p261
      %p263 = scmp.ne.s32.totalorder %s255, %s257
      %p264 = scmp.eq.s32.totalorder %s37, 7
      %p265 = por %p263, %p264
      %p266 = scmp.ne.s32.totalorder %s257, %s258
      %p267 = scmp.eq.s32.totalorder %s37, 0
      %p268 = por %p266, %p267
      %p269 = scmp.ne.s32.totalorder %s257, %s258
      %p270 = scmp.eq.s32.totalorder %s38, 7
      %p271 = por %p269, %p270
      %p273 = scmp.ne.s32.totalorder %s258, %s272
      %p274 = scmp.eq.s32.totalorder %s38, 0
      %p275 = por %p273, %p274
      %s277 = sadd.s32 %s276, 1
      %p280 = scmp.eq.s32.totalorder %s32, 7
      %p281 = scmp.ne.s32.totalorder %s276, %s278
      %p282 = scmp.eq.s32.totalorder %s32, 0
      %p283 = por %p281, %p282
      %p284 = scmp.ne.s32.totalorder %s276, %s278
      %p285 = scmp.eq.s32.totalorder %s37, 7
      %p286 = por %p284, %p285
      %p287 = scmp.ne.s32.totalorder %s278, %s279
      %p288 = scmp.eq.s32.totalorder %s37, 0
      %p289 = por %p287, %p288
      %p290 = scmp.ne.s32.totalorder %s278, %s279
      %p291 = scmp.eq.s32.totalorder %s38, 7
      %p292 = por %p290, %p291
      %p294 = scmp.ne.s32.totalorder %s279, %s293
      %p295 = scmp.eq.s32.totalorder %s38, 0
      %p296 = por %p294, %p295
      %s298 = sadd.s32 %s297, 1
      %p301 = scmp.eq.s32.totalorder %s32, 7
      %p302 = scmp.ne.s32.totalorder %s297, %s299
      %p303 = scmp.eq.s32.totalorder %s32, 0
      %p304 = por %p302, %p303
      %p305 = scmp.ne.s32.totalorder %s297, %s299
      %p306 = scmp.eq.s32.totalorder %s37, 7
      %p307 = por %p305, %p306
      %p308 = scmp.ne.s32.totalorder %s299, %s300
      %p309 = scmp.eq.s32.totalorder %s37, 0
      %p310 = por %p308, %p309
      %p311 = scmp.ne.s32.totalorder %s299, %s300
      %p312 = scmp.eq.s32.totalorder %s38, 7
      %p313 = por %p311, %p312
      %p315 = scmp.ne.s32.totalorder %s300, %s314
      %p316 = scmp.eq.s32.totalorder %s38, 0
      %p317 = por %p315, %p316
      %s319 = sadd.s32 %s318, 1
      %p322 = scmp.eq.s32.totalorder %s32, 7
      %p323 = scmp.ne.s32.totalorder %s318, %s320
      %p324 = scmp.eq.s32.totalorder %s32, 0
      %p325 = por %p323, %p324
      %p326 = scmp.ne.s32.totalorder %s318, %s320
      %p327 = scmp.eq.s32.totalorder %s37, 7
      %p328 = por %p326, %p327
      %p329 = scmp.ne.s32.totalorder %s320, %s321
      %p330 = scmp.eq.s32.totalorder %s37, 0
      %p331 = por %p329, %p330
      %p332 = scmp.ne.s32.totalorder %s320, %s321
      %p333 = scmp.eq.s32.totalorder %s38, 7
      %p334 = por %p332, %p333
      %p336 = scmp.ne.s32.totalorder %s321, %s335
      %p337 = scmp.eq.s32.totalorder %s38, 0
      %p338 = por %p336, %p337
      %s340 = sadd.s32 %s339, 1
      %p343 = scmp.eq.s32.totalorder %s32, 7
      %p344 = scmp.ne.s32.totalorder %s339, %s341
      %p345 = scmp.eq.s32.totalorder %s32, 0
      %p346 = por %p344, %p345
      %p347 = scmp.ne.s32.totalorder %s339, %s341
      %p348 = scmp.eq.s32.totalorder %s37, 7
      %p349 = por %p347, %p348
      %p350 = scmp.ne.s32.totalorder %s341, %s342
      %p351 = scmp.eq.s32.totalorder %s37, 0
      %p352 = por %p350, %p351
      %p353 = scmp.ne.s32.totalorder %s341, %s342
      %p354 = scmp.eq.s32.totalorder %s38, 7
      %p355 = por %p353, %p354
      %p357 = scmp.ne.s32.totalorder %s342, %s356
      %p358 = scmp.eq.s32.totalorder %s38, 0
      %p359 = por %p357, %p358
      %s361 = sadd.s32 %s360, 1
      %p364 = scmp.eq.s32.totalorder %s32, 7
      %p365 = scmp.ne.s32.totalorder %s360, %s362
      %p366 = scmp.eq.s32.totalorder %s32, 0
      %p367 = por %p365, %p366
      %p368 = scmp.ne.s32.totalorder %s360, %s362
      %p369 = scmp.eq.s32.totalorder %s37, 7
      %p370 = por %p368, %p369
      %p371 = scmp.ne.s32.totalorder %s362, %s363
      %p372 = scmp.eq.s32.totalorder %s37, 0
      %p373 = por %p371, %p372
      %p374 = scmp.ne.s32.totalorder %s362, %s363
      %p375 = scmp.eq.s32.totalorder %s38, 7
      %p376 = por %p374, %p375
      %p378 = scmp.ne.s32.totalorder %s363, %s377
      %p379 = scmp.eq.s32.totalorder %s38, 0
      %p380 = por %p378, %p379
      %s382 = sadd.s32 %s381, 1
      %p385 = scmp.eq.s32.totalorder %s32, 7
      %p386 = scmp.ne.s32.totalorder %s381, %s383
      %p387 = scmp.eq.s32.totalorder %s32, 0
      %p388 = por %p386, %p387
      %p389 = scmp.ne.s32.totalorder %s381, %s383
      %p390 = scmp.eq.s32.totalorder %s37, 7
      %p391 = por %p389, %p390
      %p392 = scmp.ne.s32.totalorder %s383, %s384
      %p393 = scmp.eq.s32.totalorder %s37, 0
      %p394 = por %p392, %p393
      %p395 = scmp.ne.s32.totalorder %s383, %s384
      %p396 = scmp.eq.s32.totalorder %s38, 7
      %p397 = por %p395, %p396
      %p399 = scmp.ne.s32.totalorder %s384, %s398
      %p400 = scmp.eq.s32.totalorder %s38, 0
      %p401 = por %p399, %p400
      %s403 = sadd.s32 %s402, 1
      %p406 = scmp.eq.s32.totalorder %s32, 7
      %p407 = scmp.ne.s32.totalorder %s402, %s404
      %p408 = scmp.eq.s32.totalorder %s32, 0
      %p409 = por %p407, %p408
      %p410 = scmp.ne.s32.totalorder %s402, %s404
      %p411 = scmp.eq.s32.totalorder %s37, 7
      %p412 = por %p410, %p411
      %p413 = scmp.ne.s32.totalorder %s404, %s405
      %p414 = scmp.eq.s32.totalorder %s37, 0
      %p415 = por %p413, %p414
      %p416 = scmp.ne.s32.totalorder %s404, %s405
      %p417 = scmp.eq.s32.totalorder %s38, 7
      %p418 = por %p416, %p417
      %p420 = scmp.ne.s32.totalorder %s405, %s419
      %p421 = scmp.eq.s32.totalorder %s38, 0
      %p422 = por %p420, %p421
      %s424 = sadd.s32 %s423, 1
      %p427 = scmp.eq.s32.totalorder %s32, 7
      %p428 = scmp.ne.s32.totalorder %s423, %s425
      %p429 = scmp.eq.s32.totalorder %s32, 0
      %p430 = por %p428, %p429
      %p431 = scmp.ne.s32.totalorder %s423, %s425
      %p432 = scmp.eq.s32.totalorder %s37, 7
      %p433 = por %p431, %p432
      %p434 = scmp.ne.s32.totalorder %s425, %s426
      %p435 = scmp.eq.s32.totalorder %s37, 0
      %p436 = por %p434, %p435
      %p437 = scmp.ne.s32.totalorder %s425, %s426
      %p438 = scmp.eq.s32.totalorder %s38, 7
      %p439 = por %p437, %p438
      %p441 = scmp.ne.s32.totalorder %s426, %s440
      %p442 = scmp.eq.s32.totalorder %s38, 0
      %p443 = por %p441, %p442
      %s444 = ssub.s32 %s32, %s39
      %p445 = scmp.eq.s32.totalorder %s444, 0
      %s447 = sadd.s32 %s446, 1
      %s448 = scalar_select %p445, %s446, %s447
      %p451 = pneg %p445
      %p452 = scmp.eq.s32.totalorder %s32, 7
      %p453 = por %p451, %p452
      %p454 = scmp.ne.s32.totalorder %s446, %s449
      %p455 = scmp.eq.s32.totalorder %s32, 0
      %p456 = por %p454, %p455
      %p457 = scmp.ne.s32.totalorder %s446, %s449
      %p458 = scmp.eq.s32.totalorder %s37, 7
      %p459 = por %p457, %p458
      %p460 = scmp.ne.s32.totalorder %s449, %s450
      %p461 = scmp.eq.s32.totalorder %s37, 0
      %p462 = por %p460, %p461
      %p463 = scmp.ne.s32.totalorder %s449, %s450
      %p464 = scmp.eq.s32.totalorder %s38, 7
      %p465 = por %p463, %p464
      %p467 = scmp.ne.s32.totalorder %s450, %s466
      %p468 = scmp.eq.s32.totalorder %s38, 0
      %p469 = por %p467, %p468
      %p470 = scmp.le.s32.totalorder 1, %s32
      %p471 = scmp.lt.s32.totalorder %s32, 9
      %p472 = pnand %p470, %p471
      %p473 = pneg %p472
      // Predicated region
      $region9: #{tpu_custom_call.1} parent=5 // pred_check
        _
      $region10: #{tpu_custom_call.1} parent=5 // pred_check_branch
        %475 = sbr.rel (%p472) target = $region12
      $region11: #{tpu_custom_call.1} parent=5 // pred_region
        %s476 = ssub.s32 %s32, 1
        // Predicated region
        $region13: #{tpu_custom_call.1} parent=11 // pred_check
          %p477 = pneg %p79
        $region14: #{tpu_custom_call.1} parent=11 // pred_check_branch
          %479 = sbr.rel (%p477) target = $region16
        $region15: #{tpu_custom_call.1} parent=11 // pred_region
          _
        $region16: #{tpu_custom_call.1} parent=11 // pred_fallthru
          _
        // Predicated region
        $region17: #{tpu_custom_call.1} parent=11 // pred_check
          %p480 = pneg %p100
        $region18: #{tpu_custom_call.1} parent=11 // pred_check_branch
          %482 = sbr.rel (%p480) target = $region20
        $region19: #{tpu_custom_call.1} parent=11 // pred_region
          _
        $region20: #{tpu_custom_call.1} parent=11 // pred_fallthru
          _
        // Predicated region
        $region21: #{tpu_custom_call.1} parent=11 // pred_check
          %p483 = pneg %p121
        $region22: #{tpu_custom_call.1} parent=11 // pred_check_branch
          %485 = sbr.rel (%p483) target = $region24
        $region23: #{tpu_custom_call.1} parent=11 // pred_region
          _
        $region24: #{tpu_custom_call.1} parent=11 // pred_fallthru
          _
        // Predicated region
        $region25: #{tpu_custom_call.1} parent=11 // pred_check
          %p486 = pneg %p142
        $region26: #{tpu_custom_call.1} parent=11 // pred_check_branch
          %488 = sbr.rel (%p486) target = $region28
        $region27: #{tpu_custom_call.1} parent=11 // pred_region
          _
        $region28: #{tpu_custom_call.1} parent=11 // pred_fallthru
          _
        // Predicated region
        $region29: #{tpu_custom_call.1} parent=11 // pred_check
          %p489 = pneg %p163
        $region30: #{tpu_custom_call.1} parent=11 // pred_check_branch
          %491 = sbr.rel (%p489) target = $region32
        $region31: #{tpu_custom_call.1} parent=11 // pred_region
          _
        $region32: #{tpu_custom_call.1} parent=11 // pred_fallthru
          _
        // Predicated region
        $region33: #{tpu_custom_call.1} parent=11 // pred_check
          %p492 = pneg %p184
        $region34: #{tpu_custom_call.1} parent=11 // pred_check_branch
          %494 = sbr.rel (%p492) target = $region36
        $region35: #{tpu_custom_call.1} parent=11 // pred_region
          _
        $region36: #{tpu_custom_call.1} parent=11 // pred_fallthru
          _
        // Predicated region
        $region37: #{tpu_custom_call.1} parent=11 // pred_check
          %p495 = pneg %p205
        $region38: #{tpu_custom_call.1} parent=11 // pred_check_branch
          %497 = sbr.rel (%p495) target = $region40
        $region39: #{tpu_custom_call.1} parent=11 // pred_region
          _
        $region40: #{tpu_custom_call.1} parent=11 // pred_fallthru
          _
        // Predicated region
        $region41: #{tpu_custom_call.1} parent=11 // pred_check
          %p498 = pneg %p226
        $region42: #{tpu_custom_call.1} parent=11 // pred_check_branch
          %500 = sbr.rel (%p498) target = $region44
        $region43: #{tpu_custom_call.1} parent=11 // pred_region
          _
        $region44: #{tpu_custom_call.1} parent=11 // pred_fallthru
          _
        // Predicated region
        $region45: #{tpu_custom_call.1} parent=11 // pred_check
          %p501 = pneg %p247
        $region46: #{tpu_custom_call.1} parent=11 // pred_check_branch
          %503 = sbr.rel (%p501) target = $region48
        $region47: #{tpu_custom_call.1} parent=11 // pred_region
          _
        $region48: #{tpu_custom_call.1} parent=11 // pred_fallthru
          _
        // Predicated region
        $region49: #{tpu_custom_call.1} parent=11 // pred_check
          %p504 = pneg %p268
        $region50: #{tpu_custom_call.1} parent=11 // pred_check_branch
          %506 = sbr.rel (%p504) target = $region52
        $region51: #{tpu_custom_call.1} parent=11 // pred_region
          %s508 = ssub.s32 512, 512
          %509 = vsyncadd [#allocation4], %s508
          %s510 = sshll.u32 [#allocation3], 4
          %s511 = int_to_ptr.vmem [resolvable:$true] %s510
          %516 = dma.hbm_to_vmem [thread:$0]  %s10, 512, %s511, [#allocation4], 128, 128, 8
        $region52: #{tpu_custom_call.1} parent=11 // pred_fallthru
          _
        // Predicated region
        $region53: #{tpu_custom_call.1} parent=11 // pred_check
          %p517 = pneg %p289
        $region54: #{tpu_custom_call.1} parent=11 // pred_check_branch
          %519 = sbr.rel (%p517) target = $region56
        $region55: #{tpu_custom_call.1} parent=11 // pred_region
          _
        $region56: #{tpu_custom_call.1} parent=11 // pred_fallthru
          _
        // Predicated region
        $region57: #{tpu_custom_call.1} parent=11 // pred_check
          %p520 = pneg %p310
        $region58: #{tpu_custom_call.1} parent=11 // pred_check_branch
          %522 = sbr.rel (%p520) target = $region60
        $region59: #{tpu_custom_call.1} parent=11 // pred_region
          _
        $region60: #{tpu_custom_call.1} parent=11 // pred_fallthru
          _
        // Predicated region
        $region61: #{tpu_custom_call.1} parent=11 // pred_check
          %p523 = pneg %p331
        $region62: #{tpu_custom_call.1} parent=11 // pred_check_branch
          %525 = sbr.rel (%p523) target = $region64
        $region63: #{tpu_custom_call.1} parent=11 // pred_region
          %s527 = ssub.s32 512, 512
          %528 = vsyncadd [#allocation7], %s527
          %s529 = sshll.u32 [#allocation6], 4
          %s530 = int_to_ptr.vmem [resolvable:$true] %s529
          %535 = dma.hbm_to_vmem [thread:$0]  %s13, 512, %s530, [#allocation7], 128, 128, 8
        $region64: #{tpu_custom_call.1} parent=11 // pred_fallthru
          _
        // Predicated region
        $region65: #{tpu_custom_call.1} parent=11 // pred_check
          %p536 = pneg %p352
        $region66: #{tpu_custom_call.1} parent=11 // pred_check_branch
          %538 = sbr.rel (%p536) target = $region68
        $region67: #{tpu_custom_call.1} parent=11 // pred_region
          _
        $region68: #{tpu_custom_call.1} parent=11 // pred_fallthru
          _
        // Predicated region
        $region69: #{tpu_custom_call.1} parent=11 // pred_check
          %p539 = pneg %p373
        $region70: #{tpu_custom_call.1} parent=11 // pred_check_branch
          %541 = sbr.rel (%p539) target = $region72
        $region71: #{tpu_custom_call.1} parent=11 // pred_region
          %s543 = ssub.s32 512, 512
          %544 = vsyncadd [#allocation7], %s543
          %s545 = sshll.u32 [#allocation8], 4
          %s546 = int_to_ptr.vmem [resolvable:$true] %s545
          %551 = dma.hbm_to_vmem [thread:$0]  %s15, 512, %s546, [#allocation7], 128, 128, 8
        $region72: #{tpu_custom_call.1} parent=11 // pred_fallthru
          _
        // Predicated region
        $region73: #{tpu_custom_call.1} parent=11 // pred_check
          %p552 = pneg %p394
        $region74: #{tpu_custom_call.1} parent=11 // pred_check_branch
          %554 = sbr.rel (%p552) target = $region76
        $region75: #{tpu_custom_call.1} parent=11 // pred_region
          _
        $region76: #{tpu_custom_call.1} parent=11 // pred_fallthru
          _
        // Predicated region
        $region77: #{tpu_custom_call.1} parent=11 // pred_check
          %p555 = pneg %p415
        $region78: #{tpu_custom_call.1} parent=11 // pred_check_branch
          %557 = sbr.rel (%p555) target = $region80
        $region79: #{tpu_custom_call.1} parent=11 // pred_region
          _
        $region80: #{tpu_custom_call.1} parent=11 // pred_fallthru
          _
        // Predicated region
        $region81: #{tpu_custom_call.1} parent=11 // pred_check
          %p558 = pneg %p436
        $region82: #{tpu_custom_call.1} parent=11 // pred_check_branch
          %560 = sbr.rel (%p558) target = $region84
        $region83: #{tpu_custom_call.1} parent=11 // pred_region
          _
        $region84: #{tpu_custom_call.1} parent=11 // pred_fallthru
          _
      $region12: #{tpu_custom_call.1} parent=5 // pred_fallthru
        _
      %p561 = scmp.lt.s32.totalorder %s32, 8
      // Predicated region
      $region85: #{tpu_custom_call.1} parent=5 // pred_check
        %p562 = pneg %p561
      $region86: #{tpu_custom_call.1} parent=5 // pred_check_branch
        %564 = sbr.rel (%p562) target = $region88
      $region87: #{tpu_custom_call.1} parent=5 // pred_region
        // Predicated region
        $region89: #{tpu_custom_call.1} parent=87 // pred_check
          %p565 = pneg %p52
        $region90: #{tpu_custom_call.1} parent=87 // pred_check_branch
          %567 = sbr.rel (%p565) target = $region92
        $region91: #{tpu_custom_call.1} parent=87 // pred_region
          %s568 = smul.u32 4, %s32
          %p569 = scmp.lt.s32.totalorder %s568, 31
          %s570 = scalar_select %p569, %s568, 31
          %s571 = smul.addr %s570, 4
          %s572 = scalar_lea.vmem %s0, %s571
          %s573 = smul.u32 4, %s32
        $region92: #{tpu_custom_call.1} parent=87 // pred_fallthru
          _
      $region88: #{tpu_custom_call.1} parent=5 // pred_fallthru
        _
      %p574 = scmp.le.s32.totalorder 1, %s32
      %p575 = scmp.lt.s32.totalorder %s32, 9
      %p576 = pnand %p574, %p575
      %p577 = pneg %p576
      // Predicated region
      $region93: #{tpu_custom_call.1} parent=5 // pred_check
        _
      $region94: #{tpu_custom_call.1} parent=5 // pred_check_branch
        %579 = sbr.rel (%p576) target = $region96
      $region95: #{tpu_custom_call.1} parent=5 // pred_region
        %s580 = ssub.s32 %s32, 1
        // Predicated region
        $region97: #{tpu_custom_call.1} parent=95 // pred_check
          %p581 = pneg %p268
        $region98: #{tpu_custom_call.1} parent=95 // pred_check_branch
          %583 = sbr.rel (%p581) target = $region100
        $region99: #{tpu_custom_call.1} parent=95 // pred_region
          %584 = dma.done [#allocation4], 512
        $region100: #{tpu_custom_call.1} parent=95 // pred_fallthru
          _
        // Predicated region
        $region101: #{tpu_custom_call.1} parent=95 // pred_check
          %p585 = pneg %p331
        $region102: #{tpu_custom_call.1} parent=95 // pred_check_branch
          %587 = sbr.rel (%p585) target = $region104
        $region103: #{tpu_custom_call.1} parent=95 // pred_region
          %588 = dma.done [#allocation7], 512
        $region104: #{tpu_custom_call.1} parent=95 // pred_fallthru
          _
        // Predicated region
        $region105: #{tpu_custom_call.1} parent=95 // pred_check
          %p589 = pneg %p373
        $region106: #{tpu_custom_call.1} parent=95 // pred_check_branch
          %591 = sbr.rel (%p589) target = $region108
        $region107: #{tpu_custom_call.1} parent=95 // pred_region
          %592 = dma.done [#allocation7], 512
        $region108: #{tpu_custom_call.1} parent=95 // pred_fallthru
          _
        %s593 = smul.u32 4, %s37
        %p594 = scmp.lt.s32.totalorder %s593, 31
        %s595 = scalar_select %p594, %s593, 31
        %s596 = smul.addr %s595, 4
        %s597 = scalar_lea.vmem %s0, %s596
        %p598 = pneg %p58
        %p599 = pneg %p55
        %p600 = pneg %p79
        %p601 = pneg %p76
        %p602 = pneg %p100
        %p603 = pneg %p97
        %p604 = pneg %p121
        %p605 = pneg %p118
        %p606 = pneg %p142
        %p607 = pneg %p139
        %p608 = pneg %p163
        %p609 = pneg %p160
        %p610 = pneg %p184
        %p611 = pneg %p181
        %p612 = pneg %p205
        %p613 = pneg %p202
        %p614 = pneg %p226
        %p615 = pneg %p223
        %p616 = pneg %p247
        %p617 = pneg %p244
        %p618 = pneg %p268
        %p619 = pneg %p265
        %p620 = pneg %p289
        %p621 = pneg %p286
        %p622 = pneg %p310
        %p623 = pneg %p307
        %p624 = pneg %p331
        %p625 = pneg %p328
        %p626 = pneg %p352
        %p627 = pneg %p349
        %p628 = pneg %p373
        %p629 = pneg %p370
        %p630 = pneg %p394
        %p631 = pneg %p391
        %p632 = pneg %p415
        %p633 = pneg %p412
        %p634 = pneg %p436
        %p635 = pneg %p433
        %p636 = pneg %p462
        %p637 = pneg %p459
        %s638 = sand.u32 %s449, 1
        %s639 = scalar_lea.sflag [#allocation5], %s638
        %s640 = sand.u32 %s449, 1
        %s641 = smul.addr %s640, 4
        %s642 = scalar_lea.vmem [#allocation9], %s641
        %s643 = smul.u32 4, %s37
        %p644 = scmp.lt.s32.totalorder %s643, 31
        %s645 = scalar_select %p644, %s643, 31
        %s646 = smul.addr %s645, 4
        %s647 = scalar_lea.vmem %s0, %s646
        %s648 = smul.u32 4, %s37
        %s649 = smul.u32 4, %s37
        %v650 = vld [vmem:[%s647] sm:$0x77]
        %v651 = vld [vmem:[%s647 + $0x8] sm:$0x77]
        %v652 = vmul.f32 %v650, 5.0
        %v653 = vmul.f32 %v651, 5.0
        %v654 = vld [vmem:[%s1] sm:$0xff]
        %v655 = vld [vmem:[%s1 + $0x8] sm:$0xff]
        %v656 = vld [vmem:[%s1 + $0x10] sm:$0xff]
        %v657 = vld [vmem:[%s1 + $0x18] sm:$0xff]
        %v660 = vcombine.high %v652, %v652
        %v661 = vcombine.high %v653, %v653
        %vm662 = vcmask 23552
        %v664 = vsel %vm662, %v654, 0
        %v667 = vsel %vm662, %v655, 0
        %v670 = vsel %vm662, %v656, 0
        %v673 = vsel %vm662, %v657, 0
        %vm675 = vcmask 1042432
        %v676 = vsel %vm675, %v652, 0
        %v678 = vsel %vm675, %v660, 0
        %v680 = vsel %vm675, %v653, 0
        %v682 = vsel %vm675, %v661, 0
        %684 = vmatprep.subr.mxu0 0.0
        %685 = vmatpush1.msra.mxu0 0.0
        %686 = vmatprep.subr.mxu0 0.0
        %687 = vmatpush1.msra.mxu0 0.0
        %688 = vmatprep.subr.mxu0 0.0
        %689 = vmatpush1.msra.mxu0 0.0
        %690 = vmatprep.subr.mxu0 0.0
        %691 = vmatpush1.msra.mxu0 0.0
        %692 = vmatprep.subr.mxu0 0.0
        %693 = vmatpush1.msra.mxu0 0.0
        %694 = vmatprep.subr.mxu0 0.0
        %695 = vmatpush1.msra.mxu0 0.0
        %696 = vmatprep.subr.mxu0 0.0
        %697 = vmatpush1.msra.mxu0 0.0
        %698 = vmatprep.subr.mxu0 0.0
        %699 = vmatpush1.msra.mxu0 0.0
        %700 = vmatprep.subr.mxu0 0.0
        %701 = vmatpush1.msra.mxu0 0.0
        %702 = vmatprep.subr.mxu0 0.0
        %703 = vmatpush1.msra.mxu0 0.0
        %704 = vmatprep.subr.mxu0 0.0
        %705 = vmatpush1.msra.mxu0 0.0
        %706 = vmatprep.subr.mxu0 0.0
        %707 = vmatpush1.msra.mxu0 0.0
        %708 = vmatprep.subr.mxu0 0.0
        %709 = vmatpush1.msra.mxu0 0.0
        %710 = vmatprep.subr.mxu0 0.0
        %711 = vmatpush1.msra.mxu0 0.0
        %712 = vmatprep.subr.mxu0 0.0
        %713 = vmatpush1.msra.mxu0 0.0
        %714 = vmatprep.subr.mxu0 %v678
        %715 = vmatpush1.msra.mxu0 %v676
        %716 = vmatprep.subr.mxu0 0.0
        %717 = vmatpush2.msra.mxu0 0.0
        %718 = vmatprep.subr.mxu0 0.0
        %719 = vmatpush2.msra.mxu0 0.0
        %720 = vmatprep.subr.mxu0 0.0
        %721 = vmatpush2.msra.mxu0 0.0
        %722 = vmatprep.subr.mxu0 0.0
        %723 = vmatpush2.msra.mxu0 0.0
        %724 = vmatprep.subr.mxu0 0.0
        %725 = vmatpush2.msra.mxu0 0.0
        %726 = vmatprep.subr.mxu0 0.0
        %727 = vmatpush2.msra.mxu0 0.0
        %728 = vmatprep.subr.mxu0 0.0
        %729 = vmatpush2.msra.mxu0 0.0
        %730 = vmatprep.subr.mxu0 0.0
        %731 = vmatpush2.msra.mxu0 0.0
        %732 = vmatprep.subr.mxu0 0.0
        %733 = vmatpush2.msra.mxu0 0.0
        %734 = vmatprep.subr.mxu0 0.0
        %735 = vmatpush2.msra.mxu0 0.0
        %736 = vmatprep.subr.mxu0 0.0
        %737 = vmatpush2.msra.mxu0 0.0
        %738 = vmatprep.subr.mxu0 0.0
        %739 = vmatpush2.msra.mxu0 0.0
        %740 = vmatprep.subr.mxu0 0.0
        %741 = vmatpush2.msra.mxu0 0.0
        %742 = vmatprep.subr.mxu0 0.0
        %743 = vmatpush2.msra.mxu0 0.0
        %744 = vmatprep.subr.mxu0 0.0
        %745 = vmatpush2.msra.mxu0 0.0
        %746 = vmatprep.subr.mxu0 0.0
        %747 = vmatpush2.msra.mxu0 0.0
        %748 = vmatprep.mubr.f32.mxu0 0.0
        %749 = vmatmul.mubr.f32.gmra.mxu0 %v664
        %v750 = vpop.f32.mrf.mxu0
        %v751 = vadd.f32 0.0, %v750
        %v752 = vpop.f32.mrf.mxu0
        %v753 = vadd.f32 0.0, %v752
        %754 = vmatprep.mubr.f32.mxu0 0.0
        %755 = vmatmul.mubr.f32.gmra.mxu0 %v667
        %v756 = vpop.f32.mrf.mxu0
        %v757 = vadd.f32 0.0, %v756
        %v758 = vpop.f32.mrf.mxu0
        %v759 = vadd.f32 0.0, %v758
        %760 = vmatprep.mubr.f32.mxu0 0.0
        %761 = vmatmul.mubr.f32.gmra.mxu0 %v670
        %v762 = vpop.f32.mrf.mxu0
        %v763 = vadd.f32 0.0, %v762
        %v764 = vpop.f32.mrf.mxu0
        %v765 = vadd.f32 0.0, %v764
        %766 = vmatprep.mubr.f32.mxu0 0.0
        %767 = vmatmul.mubr.f32.gmra.mxu0 %v673
        %v768 = vpop.f32.mrf.mxu0
        %v769 = vadd.f32 0.0, %v768
        %v770 = vpop.f32.mrf.mxu0
        %v771 = vadd.f32 0.0, %v770
        %772 = vdwg.mxu0
        %773 = vmatprep.subr.mxu0 0.0
        %774 = vmatpush1.msra.mxu0 0.0
        %775 = vmatprep.subr.mxu0 0.0
        %776 = vmatpush1.msra.mxu0 0.0
        %777 = vmatprep.subr.mxu0 0.0
        %778 = vmatpush1.msra.mxu0 0.0
        %779 = vmatprep.subr.mxu0 0.0
        %780 = vmatpush1.msra.mxu0 0.0
        %781 = vmatprep.subr.mxu0 0.0
        %782 = vmatpush1.msra.mxu0 0.0
        %783 = vmatprep.subr.mxu0 0.0
        %784 = vmatpush1.msra.mxu0 0.0
        %785 = vmatprep.subr.mxu0 0.0
        %786 = vmatpush1.msra.mxu0 0.0
        %787 = vmatprep.subr.mxu0 0.0
        %788 = vmatpush1.msra.mxu0 0.0
        %789 = vmatprep.subr.mxu0 0.0
        %790 = vmatpush1.msra.mxu0 0.0
        %791 = vmatprep.subr.mxu0 0.0
        %792 = vmatpush1.msra.mxu0 0.0
        %793 = vmatprep.subr.mxu0 0.0
        %794 = vmatpush1.msra.mxu0 0.0
        %795 = vmatprep.subr.mxu0 0.0
        %796 = vmatpush1.msra.mxu0 0.0
        %797 = vmatprep.subr.mxu0 0.0
        %798 = vmatpush1.msra.mxu0 0.0
        %799 = vmatprep.subr.mxu0 0.0
        %800 = vmatpush1.msra.mxu0 0.0
        %801 = vmatprep.subr.mxu0 0.0
        %802 = vmatpush1.msra.mxu0 0.0
        %803 = vmatprep.subr.mxu0 %v682
        %804 = vmatpush1.msra.mxu0 %v680
        %805 = vmatprep.subr.mxu0 0.0
        %806 = vmatpush2.msra.mxu0 0.0
        %807 = vmatprep.subr.mxu0 0.0
        %808 = vmatpush2.msra.mxu0 0.0
        %809 = vmatprep.subr.mxu0 0.0
        %810 = vmatpush2.msra.mxu0 0.0
        %811 = vmatprep.subr.mxu0 0.0
        %812 = vmatpush2.msra.mxu0 0.0
        %813 = vmatprep.subr.mxu0 0.0
        %814 = vmatpush2.msra.mxu0 0.0
        %815 = vmatprep.subr.mxu0 0.0
        %816 = vmatpush2.msra.mxu0 0.0
        %817 = vmatprep.subr.mxu0 0.0
        %818 = vmatpush2.msra.mxu0 0.0
        %819 = vmatprep.subr.mxu0 0.0
        %820 = vmatpush2.msra.mxu0 0.0
        %821 = vmatprep.subr.mxu0 0.0
        %822 = vmatpush2.msra.mxu0 0.0
        %823 = vmatprep.subr.mxu0 0.0
        %824 = vmatpush2.msra.mxu0 0.0
        %825 = vmatprep.subr.mxu0 0.0
        %826 = vmatpush2.msra.mxu0 0.0
        %827 = vmatprep.subr.mxu0 0.0
        %828 = vmatpush2.msra.mxu0 0.0
        %829 = vmatprep.subr.mxu0 0.0
        %830 = vmatpush2.msra.mxu0 0.0
        %831 = vmatprep.subr.mxu0 0.0
        %832 = vmatpush2.msra.mxu0 0.0
        %833 = vmatprep.subr.mxu0 0.0
        %834 = vmatpush2.msra.mxu0 0.0
        %835 = vmatprep.subr.mxu0 0.0
        %836 = vmatpush2.msra.mxu0 0.0
        %837 = vmatprep.mubr.f32.mxu0 0.0
        %838 = vmatmul.mubr.f32.gmra.mxu0 %v664
        %v839 = vpop.f32.mrf.mxu0
        %v840 = vadd.f32 0.0, %v839
        %v841 = vpop.f32.mrf.mxu0
        %v842 = vadd.f32 0.0, %v841
        %843 = vmatprep.mubr.f32.mxu0 0.0
        %844 = vmatmul.mubr.f32.gmra.mxu0 %v667
        %v845 = vpop.f32.mrf.mxu0
        %v846 = vadd.f32 0.0, %v845
        %v847 = vpop.f32.mrf.mxu0
        %v848 = vadd.f32 0.0, %v847
        %849 = vmatprep.mubr.f32.mxu0 0.0
        %850 = vmatmul.mubr.f32.gmra.mxu0 %v670
        %v851 = vpop.f32.mrf.mxu0
        %v852 = vadd.f32 0.0, %v851
        %v853 = vpop.f32.mrf.mxu0
        %v854 = vadd.f32 0.0, %v853
        %855 = vmatprep.mubr.f32.mxu0 0.0
        %856 = vmatmul.mubr.f32.gmra.mxu0 %v673
        %v857 = vpop.f32.mrf.mxu0
        %v858 = vadd.f32 0.0, %v857
        %v859 = vpop.f32.mrf.mxu0
        %v860 = vadd.f32 0.0, %v859
        %861 = vdwg.mxu0
        %v862 = vlaneseq
        %v863 = vshrl.u32 %v862, 7
        %v864 = vadd.s32 %v863, 8
        %v865 = vadd.s32 %v863, 16
        %v866 = vadd.s32 %v863, 24
        %vm867 = vcmp.lt.s32.totalorder %v863, 15
        %vm868 = vcmp.lt.s32.totalorder %v864, 15
        %vm869 = vcmp.lt.s32.totalorder %v865, 15
        %vm870 = vcmp.lt.s32.totalorder %v866, 15
        %v871 = vadd.f32 %v751, 1.5707964
        %v872 = vadd.f32 %v753, 1.5707964
        %v873 = vadd.f32 %v840, 1.5707964
        %v874 = vadd.f32 %v842, 1.5707964
        %v875 = vadd.f32 %v757, 1.5707964
        %v876 = vadd.f32 %v759, 1.5707964
        %v877 = vadd.f32 %v846, 1.5707964
        %v878 = vadd.f32 %v848, 1.5707964
        %v879 = vadd.f32 %v763, 1.5707964
        %v880 = vadd.f32 %v765, 1.5707964
        %v881 = vadd.f32 %v852, 1.5707964
        %v882 = vadd.f32 %v854, 1.5707964
        %v883 = vadd.f32 %v769, 1.5707964
        %v884 = vadd.f32 %v771, 1.5707964
        %v885 = vadd.f32 %v858, 1.5707964
        %v886 = vadd.f32 %v860, 1.5707964
        %v887 = vsel %vm867, %v751, %v871
        %v888 = vsel %vm867, %v753, %v872
        %v889 = vsel %vm867, %v840, %v873
        %v890 = vsel %vm867, %v842, %v874
        %v891 = vsel %vm868, %v757, %v875
        %v892 = vsel %vm868, %v759, %v876
        %v893 = vsel %vm868, %v846, %v877
        %v894 = vsel %vm868, %v848, %v878
        %v895 = vsel %vm869, %v763, %v879
        %v896 = vsel %vm869, %v765, %v880
        %v897 = vsel %vm869, %v852, %v881
        %v898 = vsel %vm869, %v854, %v882
        %v899 = vsel %vm870, %v769, %v883
        %v900 = vsel %vm870, %v771, %v884
        %v901 = vsel %vm870, %v858, %v885
        %v902 = vsel %vm870, %v860, %v886
        %v903 = vand.u32 2147483647, %v887
        %vm904 = vcmp.le.f32.partialorder %v903, 0.7853982
        %vm905 = vcmp.lt.s32.totalorder %v887, 0
        %v906 = vand.u32 %v887, 2139095040
        %v907 = vshrl.u32 %v906, 23
        %v908 = vsub.s32 %v907, 127
        %v909 = vand.u32 2147483647, %v887
        %v910 = vand.u32 %v909, 8388607
        %v911 = vor.u32 %v910, 8388608
        %v912 = vsub.s32 0, %v911
        %v913 = vadd.s32 %v908, 1
        %vm914 = vcmp.gt.s32.totalorder %v913, 0
        %v915 = vsel %vm914, %v913, 0
        %v916 = vshrl.u32 %v915, 5
        %v917 = vand.u32 %v915, 31
        %v918 = vsub.s32 32, %v917
        %v919 = vshrl.u32 683565275, %v918
        %v920 = vshll.u32 683565275, %v917
        %v921 = vshrl.u32 2475754826, %v918
        %v922 = vor.u32 %v920, %v921
        %v923 = vshll.u32 2475754826, %v917
        %v924 = vshrl.u32 2131351028, %v918
        %v925 = vor.u32 %v923, %v924
        %v926 = vshll.u32 2131351028, %v917
        %v927 = vshrl.u32 2102212464, %v918
        %v928 = vor.u32 %v926, %v927
        %v929 = vshll.u32 2102212464, %v917
        %v930 = vshrl.u32 920167782, %v918
        %v931 = vor.u32 %v929, %v930
        %v932 = vshll.u32 920167782, %v917
        %v933 = vshrl.u32 1326507024, %v918
        %v934 = vor.u32 %v932, %v933
        %vm935 = vcmp.lt.s32.totalorder %v916, 1
        %vm936 = vcmp.lt.s32.totalorder %v916, 2
        %vm937 = vcmp.lt.s32.totalorder %v916, 3
        %vm938 = vcmp.lt.s32.totalorder %v916, 4
        %v939 = vsel %vm935, %v919, %v922
        %v940 = vsel %vm938, %v928, 2102212464
        %v941 = vsel %vm937, %v925, %v940
        %v942 = vsel %vm936, %v939, %v941
        %v943 = vsel %vm935, %v922, %v925
        %v944 = vsel %vm938, %v931, 920167782
        %v945 = vsel %vm937, %v928, %v944
        %v946 = vsel %vm936, %v943, %v945
        %v947 = vsel %vm935, %v925, %v928
        %v948 = vsel %vm938, %v934, 1326507024
        %v949 = vsel %vm937, %v931, %v948
        %v950 = vsel %vm936, %v947, %v949
        %v951 = vshll.u32 %v911, 8
        %v952 = vmul.u32.u64.compose %v951, %v950
        %v953 = vextract.low.u32 %v952
        %v954 = vextract.high.u32 %v952
        %v955 = vmul.u32.u64.compose %v951, %v946
        %v956 = vextract.low.u32 %v955
        %v957 = vextract.high.u32 %v955
        %v958 = vmul.u32 %v951, %v942
        %v959 = vadd.s32 %v954, %v956
        %vm960 = vc.u32 %v954, %v956
        %v961 = vadd.s32 %v957, 1
        %v962 = vsel %vm960, %v961, %v957
        %v963 = vadd.s32 %v958, %v962
        %v964 = vadd.s32 %v963, 536870912
        %v965 = vshrl.u32 %v964, 30
        %v966 = vshll.u32 %v965, 30
        %v967 = vsub.s32 %v963, %v966
        %vm968 = vcmp.lt.s32.totalorder %v967, 0
        %v969 = vsub.s32 0, %v967
        %v970 = vsel %vm968, %v969, %v967
        %v971 = vclz %v970
        %v972 = vsub.s32 %v971, 2
        %vm973 = vcmp.gt.s32.totalorder 0, %v972
        %v974 = vsel %vm973, 0, %v972
        %v975 = vsub.s32 32, %v974
        %v976 = vshll.u32 %v967, %v974
        %v977 = vshrl.u32 %v959, %v975
        %v978 = vor.u32 %v976, %v977
        %v979 = vsub.s32 4294967266, %v974
        %v980 = vadd.s32 %v979, 127
        %v981 = vshll.u32 %v980, 23
        %v982 = vor.u32 4788187, %v981
        %v983 = vand.u32 2147483647, %v982
        %v985 = vcvt.s32.f32 %v978
        %v986 = vmul.f32 %v985, %v983
        %v987 = vxor.u32 %v986, 2147483648
        %v988 = vsel %vm905, %v987, %v986
        %v989 = vsub.s32 4, %v965
        %v990 = vsel %vm905, %v989, %v965
        %v991 = vsel %vm904, %v887, %v988
        %v992 = vsel %vm904, 0, %v990
        %v993 = vcosq.f32.pop %v991
        %v994 = vsinq.f32.pop %v991
        %vm995 = vweird.f32 %v887
        %v996 = vadd.s32 %v992, 3
        %v997 = vand.u32 %v996, 3
        %vm998 = vcmp.lt.s32.totalorder %v997, 2
        %vm999 = vcmp.eq.s32.totalorder %v997, 0
        %v1000 = vxor.u32 %v994, 2147483648
        %v1001 = vsel %vm999, %v993, %v1000
        %vm1002 = vcmp.eq.s32.totalorder %v997, 2
        %v1003 = vxor.u32 %v993, 2147483648
        %v1004 = vsel %vm1002, %v1003, %v994
        %v1005 = vsel %vm998, %v1001, %v1004
        %v1006 = vsel %vm995, nan, %v1005
        %v1007 = vand.u32 2147483647, %v888
        %vm1008 = vcmp.le.f32.partialorder %v1007, 0.7853982
        %vm1009 = vcmp.lt.s32.totalorder %v888, 0
        %v1010 = vand.u32 %v888, 2139095040
        %v1011 = vshrl.u32 %v1010, 23
        %v1012 = vsub.s32 %v1011, 127
        %v1013 = vand.u32 2147483647, %v888
        %v1014 = vand.u32 %v1013, 8388607
        %v1015 = vor.u32 %v1014, 8388608
        %v1016 = vsub.s32 0, %v1015
        %v1017 = vadd.s32 %v1012, 1
        %vm1018 = vcmp.gt.s32.totalorder %v1017, 0
        %v1019 = vsel %vm1018, %v1017, 0
        %v1020 = vshrl.u32 %v1019, 5
        %v1021 = vand.u32 %v1019, 31
        %v1022 = vsub.s32 32, %v1021
        %v1023 = vshrl.u32 683565275, %v1022
        %v1024 = vshll.u32 683565275, %v1021
        %v1025 = vshrl.u32 2475754826, %v1022
        %v1026 = vor.u32 %v1024, %v1025
        %v1027 = vshll.u32 2475754826, %v1021
        %v1028 = vshrl.u32 2131351028, %v1022
        %v1029 = vor.u32 %v1027, %v1028
        %v1030 = vshll.u32 2131351028, %v1021
        %v1031 = vshrl.u32 2102212464, %v1022
        %v1032 = vor.u32 %v1030, %v1031
        %v1033 = vshll.u32 2102212464, %v1021
        %v1034 = vshrl.u32 920167782, %v1022
        %v1035 = vor.u32 %v1033, %v1034
        %v1036 = vshll.u32 920167782, %v1021
        %v1037 = vshrl.u32 1326507024, %v1022
        %v1038 = vor.u32 %v1036, %v1037
        %vm1039 = vcmp.lt.s32.totalorder %v1020, 1
        %vm1040 = vcmp.lt.s32.totalorder %v1020, 2
        %vm1041 = vcmp.lt.s32.totalorder %v1020, 3
        %vm1042 = vcmp.lt.s32.totalorder %v1020, 4
        %v1043 = vsel %vm1039, %v1023, %v1026
        %v1044 = vsel %vm1042, %v1032, 2102212464
        %v1045 = vsel %vm1041, %v1029, %v1044
        %v1046 = vsel %vm1040, %v1043, %v1045
        %v1047 = vsel %vm1039, %v1026, %v1029
        %v1048 = vsel %vm1042, %v1035, 920167782
        %v1049 = vsel %vm1041, %v1032, %v1048
        %v1050 = vsel %vm1040, %v1047, %v1049
        %v1051 = vsel %vm1039, %v1029, %v1032
        %v1052 = vsel %vm1042, %v1038, 1326507024
        %v1053 = vsel %vm1041, %v1035, %v1052
        %v1054 = vsel %vm1040, %v1051, %v1053
        %v1055 = vshll.u32 %v1015, 8
        %v1056 = vmul.u32.u64.compose %v1055, %v1054
        %v1057 = vextract.low.u32 %v1056
        %v1058 = vextract.high.u32 %v1056
        %v1059 = vmul.u32.u64.compose %v1055, %v1050
        %v1060 = vextract.low.u32 %v1059
        %v1061 = vextract.high.u32 %v1059
        %v1062 = vmul.u32 %v1055, %v1046
        %v1063 = vadd.s32 %v1058, %v1060
        %vm1064 = vc.u32 %v1058, %v1060
        %v1065 = vadd.s32 %v1061, 1
        %v1066 = vsel %vm1064, %v1065, %v1061
        %v1067 = vadd.s32 %v1062, %v1066
        %v1068 = vadd.s32 %v1067, 536870912
        %v1069 = vshrl.u32 %v1068, 30
        %v1070 = vshll.u32 %v1069, 30
        %v1071 = vsub.s32 %v1067, %v1070
        %vm1072 = vcmp.lt.s32.totalorder %v1071, 0
        %v1073 = vsub.s32 0, %v1071
        %v1074 = vsel %vm1072, %v1073, %v1071
        %v1075 = vclz %v1074
        %v1076 = vsub.s32 %v1075, 2
        %vm1077 = vcmp.gt.s32.totalorder 0, %v1076
        %v1078 = vsel %vm1077, 0, %v1076
        %v1079 = vsub.s32 32, %v1078
        %v1080 = vshll.u32 %v1071, %v1078
        %v1081 = vshrl.u32 %v1063, %v1079
        %v1082 = vor.u32 %v1080, %v1081
        %v1083 = vsub.s32 4294967266, %v1078
        %v1084 = vadd.s32 %v1083, 127
        %v1085 = vshll.u32 %v1084, 23
        %v1086 = vor.u32 4788187, %v1085
        %v1087 = vand.u32 2147483647, %v1086
        %v1089 = vcvt.s32.f32 %v1082
        %v1090 = vmul.f32 %v1089, %v1087
        %v1091 = vxor.u32 %v1090, 2147483648
        %v1092 = vsel %vm1009, %v1091, %v1090
        %v1093 = vsub.s32 4, %v1069
        %v1094 = vsel %vm1009, %v1093, %v1069
        %v1095 = vsel %vm1008, %v888, %v1092
        %v1096 = vsel %vm1008, 0, %v1094
        %v1097 = vcosq.f32.pop %v1095
        %v1098 = vsinq.f32.pop %v1095
        %vm1099 = vweird.f32 %v888
        %v1100 = vadd.s32 %v1096, 3
        %v1101 = vand.u32 %v1100, 3
        %vm1102 = vcmp.lt.s32.totalorder %v1101, 2
        %vm1103 = vcmp.eq.s32.totalorder %v1101, 0
        %v1104 = vxor.u32 %v1098, 2147483648
        %v1105 = vsel %vm1103, %v1097, %v1104
        %vm1106 = vcmp.eq.s32.totalorder %v1101, 2
        %v1107 = vxor.u32 %v1097, 2147483648
        %v1108 = vsel %vm1106, %v1107, %v1098
        %v1109 = vsel %vm1102, %v1105, %v1108
        %v1110 = vsel %vm1099, nan, %v1109
        %v1111 = vand.u32 2147483647, %v889
        %vm1112 = vcmp.le.f32.partialorder %v1111, 0.7853982
        %vm1113 = vcmp.lt.s32.totalorder %v889, 0
        %v1114 = vand.u32 %v889, 2139095040
        %v1115 = vshrl.u32 %v1114, 23
        %v1116 = vsub.s32 %v1115, 127
        %v1117 = vand.u32 2147483647, %v889
        %v1118 = vand.u32 %v1117, 8388607
        %v1119 = vor.u32 %v1118, 8388608
        %v1120 = vsub.s32 0, %v1119
        %v1121 = vadd.s32 %v1116, 1
        %vm1122 = vcmp.gt.s32.totalorder %v1121, 0
        %v1123 = vsel %vm1122, %v1121, 0
        %v1124 = vshrl.u32 %v1123, 5
        %v1125 = vand.u32 %v1123, 31
        %v1126 = vsub.s32 32, %v1125
        %v1127 = vshrl.u32 683565275, %v1126
        %v1128 = vshll.u32 683565275, %v1125
        %v1129 = vshrl.u32 2475754826, %v1126
        %v1130 = vor.u32 %v1128, %v1129
        %v1131 = vshll.u32 2475754826, %v1125
        %v1132 = vshrl.u32 2131351028, %v1126
        %v1133 = vor.u32 %v1131, %v1132
        %v1134 = vshll.u32 2131351028, %v1125
        %v1135 = vshrl.u32 2102212464, %v1126
        %v1136 = vor.u32 %v1134, %v1135
        %v1137 = vshll.u32 2102212464, %v1125
        %v1138 = vshrl.u32 920167782, %v1126
        %v1139 = vor.u32 %v1137, %v1138
        %v1140 = vshll.u32 920167782, %v1125
        %v1141 = vshrl.u32 1326507024, %v1126
        %v1142 = vor.u32 %v1140, %v1141
        %vm1143 = vcmp.lt.s32.totalorder %v1124, 1
        %vm1144 = vcmp.lt.s32.totalorder %v1124, 2
        %vm1145 = vcmp.lt.s32.totalorder %v1124, 3
        %vm1146 = vcmp.lt.s32.totalorder %v1124, 4
        %v1147 = vsel %vm1143, %v1127, %v1130
        %v1148 = vsel %vm1146, %v1136, 2102212464
        %v1149 = vsel %vm1145, %v1133, %v1148
        %v1150 = vsel %vm1144, %v1147, %v1149
        %v1151 = vsel %vm1143, %v1130, %v1133
        %v1152 = vsel %vm1146, %v1139, 920167782
        %v1153 = vsel %vm1145, %v1136, %v1152
        %v1154 = vsel %vm1144, %v1151, %v1153
        %v1155 = vsel %vm1143, %v1133, %v1136
        %v1156 = vsel %vm1146, %v1142, 1326507024
        %v1157 = vsel %vm1145, %v1139, %v1156
        %v1158 = vsel %vm1144, %v1155, %v1157
        %v1159 = vshll.u32 %v1119, 8
        %v1160 = vmul.u32.u64.compose %v1159, %v1158
        %v1161 = vextract.low.u32 %v1160
        %v1162 = vextract.high.u32 %v1160
        %v1163 = vmul.u32.u64.compose %v1159, %v1154
        %v1164 = vextract.low.u32 %v1163
        %v1165 = vextract.high.u32 %v1163
        %v1166 = vmul.u32 %v1159, %v1150
        %v1167 = vadd.s32 %v1162, %v1164
        %vm1168 = vc.u32 %v1162, %v1164
        %v1169 = vadd.s32 %v1165, 1
        %v1170 = vsel %vm1168, %v1169, %v1165
        %v1171 = vadd.s32 %v1166, %v1170
        %v1172 = vadd.s32 %v1171, 536870912
        %v1173 = vshrl.u32 %v1172, 30
        %v1174 = vshll.u32 %v1173, 30
        %v1175 = vsub.s32 %v1171, %v1174
        %vm1176 = vcmp.lt.s32.totalorder %v1175, 0
        %v1177 = vsub.s32 0, %v1175
        %v1178 = vsel %vm1176, %v1177, %v1175
        %v1179 = vclz %v1178
        %v1180 = vsub.s32 %v1179, 2
        %vm1181 = vcmp.gt.s32.totalorder 0, %v1180
        %v1182 = vsel %vm1181, 0, %v1180
        %v1183 = vsub.s32 32, %v1182
        %v1184 = vshll.u32 %v1175, %v1182
        %v1185 = vshrl.u32 %v1167, %v1183
        %v1186 = vor.u32 %v1184, %v1185
        %v1187 = vsub.s32 4294967266, %v1182
        %v1188 = vadd.s32 %v1187, 127
        %v1189 = vshll.u32 %v1188, 23
        %v1190 = vor.u32 4788187, %v1189
        %v1191 = vand.u32 2147483647, %v1190
        %v1193 = vcvt.s32.f32 %v1186
        %v1194 = vmul.f32 %v1193, %v1191
        %v1195 = vxor.u32 %v1194, 2147483648
        %v1196 = vsel %vm1113, %v1195, %v1194
        %v1197 = vsub.s32 4, %v1173
        %v1198 = vsel %vm1113, %v1197, %v1173
        %v1199 = vsel %vm1112, %v889, %v1196
        %v1200 = vsel %vm1112, 0, %v1198
        %v1201 = vcosq.f32.pop %v1199
        %v1202 = vsinq.f32.pop %v1199
        %vm1203 = vweird.f32 %v889
        %v1204 = vadd.s32 %v1200, 3
        %v1205 = vand.u32 %v1204, 3
        %vm1206 = vcmp.lt.s32.totalorder %v1205, 2
        %vm1207 = vcmp.eq.s32.totalorder %v1205, 0
        %v1208 = vxor.u32 %v1202, 2147483648
        %v1209 = vsel %vm1207, %v1201, %v1208
        %vm1210 = vcmp.eq.s32.totalorder %v1205, 2
        %v1211 = vxor.u32 %v1201, 2147483648
        %v1212 = vsel %vm1210, %v1211, %v1202
        %v1213 = vsel %vm1206, %v1209, %v1212
        %v1214 = vsel %vm1203, nan, %v1213
        %v1215 = vand.u32 2147483647, %v890
        %vm1216 = vcmp.le.f32.partialorder %v1215, 0.7853982
        %vm1217 = vcmp.lt.s32.totalorder %v890, 0
        %v1218 = vand.u32 %v890, 2139095040
        %v1219 = vshrl.u32 %v1218, 23
        %v1220 = vsub.s32 %v1219, 127
        %v1221 = vand.u32 2147483647, %v890
        %v1222 = vand.u32 %v1221, 8388607
        %v1223 = vor.u32 %v1222, 8388608
        %v1224 = vsub.s32 0, %v1223
        %v1225 = vadd.s32 %v1220, 1
        %vm1226 = vcmp.gt.s32.totalorder %v1225, 0
        %v1227 = vsel %vm1226, %v1225, 0
        %v1228 = vshrl.u32 %v1227, 5
        %v1229 = vand.u32 %v1227, 31
        %v1230 = vsub.s32 32, %v1229
        %v1231 = vshrl.u32 683565275, %v1230
        %v1232 = vshll.u32 683565275, %v1229
        %v1233 = vshrl.u32 2475754826, %v1230
        %v1234 = vor.u32 %v1232, %v1233
        %v1235 = vshll.u32 2475754826, %v1229
        %v1236 = vshrl.u32 2131351028, %v1230
        %v1237 = vor.u32 %v1235, %v1236
        %v1238 = vshll.u32 2131351028, %v1229
        %v1239 = vshrl.u32 2102212464, %v1230
        %v1240 = vor.u32 %v1238, %v1239
        %v1241 = vshll.u32 2102212464, %v1229
        %v1242 = vshrl.u32 920167782, %v1230
        %v1243 = vor.u32 %v1241, %v1242
        %v1244 = vshll.u32 920167782, %v1229
        %v1245 = vshrl.u32 1326507024, %v1230
        %v1246 = vor.u32 %v1244, %v1245
        %vm1247 = vcmp.lt.s32.totalorder %v1228, 1
        %vm1248 = vcmp.lt.s32.totalorder %v1228, 2
        %vm1249 = vcmp.lt.s32.totalorder %v1228, 3
        %vm1250 = vcmp.lt.s32.totalorder %v1228, 4
        %v1251 = vsel %vm1247, %v1231, %v1234
        %v1252 = vsel %vm1250, %v1240, 2102212464
        %v1253 = vsel %vm1249, %v1237, %v1252
        %v1254 = vsel %vm1248, %v1251, %v1253
        %v1255 = vsel %vm1247, %v1234, %v1237
        %v1256 = vsel %vm1250, %v1243, 920167782
        %v1257 = vsel %vm1249, %v1240, %v1256
        %v1258 = vsel %vm1248, %v1255, %v1257
        %v1259 = vsel %vm1247, %v1237, %v1240
        %v1260 = vsel %vm1250, %v1246, 1326507024
        %v1261 = vsel %vm1249, %v1243, %v1260
        %v1262 = vsel %vm1248, %v1259, %v1261
        %v1263 = vshll.u32 %v1223, 8
        %v1264 = vmul.u32.u64.compose %v1263, %v1262
        %v1265 = vextract.low.u32 %v1264
        %v1266 = vextract.high.u32 %v1264
        %v1267 = vmul.u32.u64.compose %v1263, %v1258
        %v1268 = vextract.low.u32 %v1267
        %v1269 = vextract.high.u32 %v1267
        %v1270 = vmul.u32 %v1263, %v1254
        %v1271 = vadd.s32 %v1266, %v1268
        %vm1272 = vc.u32 %v1266, %v1268
        %v1273 = vadd.s32 %v1269, 1
        %v1274 = vsel %vm1272, %v1273, %v1269
        %v1275 = vadd.s32 %v1270, %v1274
        %v1276 = vadd.s32 %v1275, 536870912
        %v1277 = vshrl.u32 %v1276, 30
        %v1278 = vshll.u32 %v1277, 30
        %v1279 = vsub.s32 %v1275, %v1278
        %vm1280 = vcmp.lt.s32.totalorder %v1279, 0
        %v1281 = vsub.s32 0, %v1279
        %v1282 = vsel %vm1280, %v1281, %v1279
        %v1283 = vclz %v1282
        %v1284 = vsub.s32 %v1283, 2
        %vm1285 = vcmp.gt.s32.totalorder 0, %v1284
        %v1286 = vsel %vm1285, 0, %v1284
        %v1287 = vsub.s32 32, %v1286
        %v1288 = vshll.u32 %v1279, %v1286
        %v1289 = vshrl.u32 %v1271, %v1287
        %v1290 = vor.u32 %v1288, %v1289
        %v1291 = vsub.s32 4294967266, %v1286
        %v1292 = vadd.s32 %v1291, 127
        %v1293 = vshll.u32 %v1292, 23
        %v1294 = vor.u32 4788187, %v1293
        %v1295 = vand.u32 2147483647, %v1294
        %v1297 = vcvt.s32.f32 %v1290
        %v1298 = vmul.f32 %v1297, %v1295
        %v1299 = vxor.u32 %v1298, 2147483648
        %v1300 = vsel %vm1217, %v1299, %v1298
        %v1301 = vsub.s32 4, %v1277
        %v1302 = vsel %vm1217, %v1301, %v1277
        %v1303 = vsel %vm1216, %v890, %v1300
        %v1304 = vsel %vm1216, 0, %v1302
        %v1305 = vcosq.f32.pop %v1303
        %v1306 = vsinq.f32.pop %v1303
        %vm1307 = vweird.f32 %v890
        %v1308 = vadd.s32 %v1304, 3
        %v1309 = vand.u32 %v1308, 3
        %vm1310 = vcmp.lt.s32.totalorder %v1309, 2
        %vm1311 = vcmp.eq.s32.totalorder %v1309, 0
        %v1312 = vxor.u32 %v1306, 2147483648
        %v1313 = vsel %vm1311, %v1305, %v1312
        %vm1314 = vcmp.eq.s32.totalorder %v1309, 2
        %v1315 = vxor.u32 %v1305, 2147483648
        %v1316 = vsel %vm1314, %v1315, %v1306
        %v1317 = vsel %vm1310, %v1313, %v1316
        %v1318 = vsel %vm1307, nan, %v1317
        %v1319 = vand.u32 2147483647, %v891
        %vm1320 = vcmp.le.f32.partialorder %v1319, 0.7853982
        %vm1321 = vcmp.lt.s32.totalorder %v891, 0
        %v1322 = vand.u32 %v891, 2139095040
        %v1323 = vshrl.u32 %v1322, 23
        %v1324 = vsub.s32 %v1323, 127
        %v1325 = vand.u32 2147483647, %v891
        %v1326 = vand.u32 %v1325, 8388607
        %v1327 = vor.u32 %v1326, 8388608
        %v1328 = vsub.s32 0, %v1327
        %v1329 = vadd.s32 %v1324, 1
        %vm1330 = vcmp.gt.s32.totalorder %v1329, 0
        %v1331 = vsel %vm1330, %v1329, 0
        %v1332 = vshrl.u32 %v1331, 5
        %v1333 = vand.u32 %v1331, 31
        %v1334 = vsub.s32 32, %v1333
        %v1335 = vshrl.u32 683565275, %v1334
        %v1336 = vshll.u32 683565275, %v1333
        %v1337 = vshrl.u32 2475754826, %v1334
        %v1338 = vor.u32 %v1336, %v1337
        %v1339 = vshll.u32 2475754826, %v1333
        %v1340 = vshrl.u32 2131351028, %v1334
        %v1341 = vor.u32 %v1339, %v1340
        %v1342 = vshll.u32 2131351028, %v1333
        %v1343 = vshrl.u32 2102212464, %v1334
        %v1344 = vor.u32 %v1342, %v1343
        %v1345 = vshll.u32 2102212464, %v1333
        %v1346 = vshrl.u32 920167782, %v1334
        %v1347 = vor.u32 %v1345, %v1346
        %v1348 = vshll.u32 920167782, %v1333
        %v1349 = vshrl.u32 1326507024, %v1334
        %v1350 = vor.u32 %v1348, %v1349
        %vm1351 = vcmp.lt.s32.totalorder %v1332, 1
        %vm1352 = vcmp.lt.s32.totalorder %v1332, 2
        %vm1353 = vcmp.lt.s32.totalorder %v1332, 3
        %vm1354 = vcmp.lt.s32.totalorder %v1332, 4
        %v1355 = vsel %vm1351, %v1335, %v1338
        %v1356 = vsel %vm1354, %v1344, 2102212464
        %v1357 = vsel %vm1353, %v1341, %v1356
        %v1358 = vsel %vm1352, %v1355, %v1357
        %v1359 = vsel %vm1351, %v1338, %v1341
        %v1360 = vsel %vm1354, %v1347, 920167782
        %v1361 = vsel %vm1353, %v1344, %v1360
        %v1362 = vsel %vm1352, %v1359, %v1361
        %v1363 = vsel %vm1351, %v1341, %v1344
        %v1364 = vsel %vm1354, %v1350, 1326507024
        %v1365 = vsel %vm1353, %v1347, %v1364
        %v1366 = vsel %vm1352, %v1363, %v1365
        %v1367 = vshll.u32 %v1327, 8
        %v1368 = vmul.u32.u64.compose %v1367, %v1366
        %v1369 = vextract.low.u32 %v1368
        %v1370 = vextract.high.u32 %v1368
        %v1371 = vmul.u32.u64.compose %v1367, %v1362
        %v1372 = vextract.low.u32 %v1371
        %v1373 = vextract.high.u32 %v1371
        %v1374 = vmul.u32 %v1367, %v1358
        %v1375 = vadd.s32 %v1370, %v1372
        %vm1376 = vc.u32 %v1370, %v1372
        %v1377 = vadd.s32 %v1373, 1
        %v1378 = vsel %vm1376, %v1377, %v1373
        %v1379 = vadd.s32 %v1374, %v1378
        %v1380 = vadd.s32 %v1379, 536870912
        %v1381 = vshrl.u32 %v1380, 30
        %v1382 = vshll.u32 %v1381, 30
        %v1383 = vsub.s32 %v1379, %v1382
        %vm1384 = vcmp.lt.s32.totalorder %v1383, 0
        %v1385 = vsub.s32 0, %v1383
        %v1386 = vsel %vm1384, %v1385, %v1383
        %v1387 = vclz %v1386
        %v1388 = vsub.s32 %v1387, 2
        %vm1389 = vcmp.gt.s32.totalorder 0, %v1388
        %v1390 = vsel %vm1389, 0, %v1388
        %v1391 = vsub.s32 32, %v1390
        %v1392 = vshll.u32 %v1383, %v1390
        %v1393 = vshrl.u32 %v1375, %v1391
        %v1394 = vor.u32 %v1392, %v1393
        %v1395 = vsub.s32 4294967266, %v1390
        %v1396 = vadd.s32 %v1395, 127
        %v1397 = vshll.u32 %v1396, 23
        %v1398 = vor.u32 4788187, %v1397
        %v1399 = vand.u32 2147483647, %v1398
        %v1401 = vcvt.s32.f32 %v1394
        %v1402 = vmul.f32 %v1401, %v1399
        %v1403 = vxor.u32 %v1402, 2147483648
        %v1404 = vsel %vm1321, %v1403, %v1402
        %v1405 = vsub.s32 4, %v1381
        %v1406 = vsel %vm1321, %v1405, %v1381
        %v1407 = vsel %vm1320, %v891, %v1404
        %v1408 = vsel %vm1320, 0, %v1406
        %v1409 = vcosq.f32.pop %v1407
        %v1410 = vsinq.f32.pop %v1407
        %vm1411 = vweird.f32 %v891
        %v1412 = vadd.s32 %v1408, 3
        %v1413 = vand.u32 %v1412, 3
        %vm1414 = vcmp.lt.s32.totalorder %v1413, 2
        %vm1415 = vcmp.eq.s32.totalorder %v1413, 0
        %v1416 = vxor.u32 %v1410, 2147483648
        %v1417 = vsel %vm1415, %v1409, %v1416
        %vm1418 = vcmp.eq.s32.totalorder %v1413, 2
        %v1419 = vxor.u32 %v1409, 2147483648
        %v1420 = vsel %vm1418, %v1419, %v1410
        %v1421 = vsel %vm1414, %v1417, %v1420
        %v1422 = vsel %vm1411, nan, %v1421
        %v1423 = vand.u32 2147483647, %v892
        %vm1424 = vcmp.le.f32.partialorder %v1423, 0.7853982
        %vm1425 = vcmp.lt.s32.totalorder %v892, 0
        %v1426 = vand.u32 %v892, 2139095040
        %v1427 = vshrl.u32 %v1426, 23
        %v1428 = vsub.s32 %v1427, 127
        %v1429 = vand.u32 2147483647, %v892
        %v1430 = vand.u32 %v1429, 8388607
        %v1431 = vor.u32 %v1430, 8388608
        %v1432 = vsub.s32 0, %v1431
        %v1433 = vadd.s32 %v1428, 1
        %vm1434 = vcmp.gt.s32.totalorder %v1433, 0
        %v1435 = vsel %vm1434, %v1433, 0
        %v1436 = vshrl.u32 %v1435, 5
        %v1437 = vand.u32 %v1435, 31
        %v1438 = vsub.s32 32, %v1437
        %v1439 = vshrl.u32 683565275, %v1438
        %v1440 = vshll.u32 683565275, %v1437
        %v1441 = vshrl.u32 2475754826, %v1438
        %v1442 = vor.u32 %v1440, %v1441
        %v1443 = vshll.u32 2475754826, %v1437
        %v1444 = vshrl.u32 2131351028, %v1438
        %v1445 = vor.u32 %v1443, %v1444
        %v1446 = vshll.u32 2131351028, %v1437
        %v1447 = vshrl.u32 2102212464, %v1438
        %v1448 = vor.u32 %v1446, %v1447
        %v1449 = vshll.u32 2102212464, %v1437
        %v1450 = vshrl.u32 920167782, %v1438
        %v1451 = vor.u32 %v1449, %v1450
        %v1452 = vshll.u32 920167782, %v1437
        %v1453 = vshrl.u32 1326507024, %v1438
        %v1454 = vor.u32 %v1452, %v1453
        %vm1455 = vcmp.lt.s32.totalorder %v1436, 1
        %vm1456 = vcmp.lt.s32.totalorder %v1436, 2
        %vm1457 = vcmp.lt.s32.totalorder %v1436, 3
        %vm1458 = vcmp.lt.s32.totalorder %v1436, 4
        %v1459 = vsel %vm1455, %v1439, %v1442
        %v1460 = vsel %vm1458, %v1448, 2102212464
        %v1461 = vsel %vm1457, %v1445, %v1460
        %v1462 = vsel %vm1456, %v1459, %v1461
        %v1463 = vsel %vm1455, %v1442, %v1445
        %v1464 = vsel %vm1458, %v1451, 920167782
        %v1465 = vsel %vm1457, %v1448, %v1464
        %v1466 = vsel %vm1456, %v1463, %v1465
        %v1467 = vsel %vm1455, %v1445, %v1448
        %v1468 = vsel %vm1458, %v1454, 1326507024
        %v1469 = vsel %vm1457, %v1451, %v1468
        %v1470 = vsel %vm1456, %v1467, %v1469
        %v1471 = vshll.u32 %v1431, 8
        %v1472 = vmul.u32.u64.compose %v1471, %v1470
        %v1473 = vextract.low.u32 %v1472
        %v1474 = vextract.high.u32 %v1472
        %v1475 = vmul.u32.u64.compose %v1471, %v1466
        %v1476 = vextract.low.u32 %v1475
        %v1477 = vextract.high.u32 %v1475
        %v1478 = vmul.u32 %v1471, %v1462
        %v1479 = vadd.s32 %v1474, %v1476
        %vm1480 = vc.u32 %v1474, %v1476
        %v1481 = vadd.s32 %v1477, 1
        %v1482 = vsel %vm1480, %v1481, %v1477
        %v1483 = vadd.s32 %v1478, %v1482
        %v1484 = vadd.s32 %v1483, 536870912
        %v1485 = vshrl.u32 %v1484, 30
        %v1486 = vshll.u32 %v1485, 30
        %v1487 = vsub.s32 %v1483, %v1486
        %vm1488 = vcmp.lt.s32.totalorder %v1487, 0
        %v1489 = vsub.s32 0, %v1487
        %v1490 = vsel %vm1488, %v1489, %v1487
        %v1491 = vclz %v1490
        %v1492 = vsub.s32 %v1491, 2
        %vm1493 = vcmp.gt.s32.totalorder 0, %v1492
        %v1494 = vsel %vm1493, 0, %v1492
        %v1495 = vsub.s32 32, %v1494
        %v1496 = vshll.u32 %v1487, %v1494
        %v1497 = vshrl.u32 %v1479, %v1495
        %v1498 = vor.u32 %v1496, %v1497
        %v1499 = vsub.s32 4294967266, %v1494
        %v1500 = vadd.s32 %v1499, 127
        %v1501 = vshll.u32 %v1500, 23
        %v1502 = vor.u32 4788187, %v1501
        %v1503 = vand.u32 2147483647, %v1502
        %v1505 = vcvt.s32.f32 %v1498
        %v1506 = vmul.f32 %v1505, %v1503
        %v1507 = vxor.u32 %v1506, 2147483648
        %v1508 = vsel %vm1425, %v1507, %v1506
        %v1509 = vsub.s32 4, %v1485
        %v1510 = vsel %vm1425, %v1509, %v1485
        %v1511 = vsel %vm1424, %v892, %v1508
        %v1512 = vsel %vm1424, 0, %v1510
        %v1513 = vcosq.f32.pop %v1511
        %v1514 = vsinq.f32.pop %v1511
        %vm1515 = vweird.f32 %v892
        %v1516 = vadd.s32 %v1512, 3
        %v1517 = vand.u32 %v1516, 3
        %vm1518 = vcmp.lt.s32.totalorder %v1517, 2
        %vm1519 = vcmp.eq.s32.totalorder %v1517, 0
        %v1520 = vxor.u32 %v1514, 2147483648
        %v1521 = vsel %vm1519, %v1513, %v1520
        %vm1522 = vcmp.eq.s32.totalorder %v1517, 2
        %v1523 = vxor.u32 %v1513, 2147483648
        %v1524 = vsel %vm1522, %v1523, %v1514
        %v1525 = vsel %vm1518, %v1521, %v1524
        %v1526 = vsel %vm1515, nan, %v1525
        %v1527 = vand.u32 2147483647, %v893
        %vm1528 = vcmp.le.f32.partialorder %v1527, 0.7853982
        %vm1529 = vcmp.lt.s32.totalorder %v893, 0
        %v1530 = vand.u32 %v893, 2139095040
        %v1531 = vshrl.u32 %v1530, 23
        %v1532 = vsub.s32 %v1531, 127
        %v1533 = vand.u32 2147483647, %v893
        %v1534 = vand.u32 %v1533, 8388607
        %v1535 = vor.u32 %v1534, 8388608
        %v1536 = vsub.s32 0, %v1535
        %v1537 = vadd.s32 %v1532, 1
        %vm1538 = vcmp.gt.s32.totalorder %v1537, 0
        %v1539 = vsel %vm1538, %v1537, 0
        %v1540 = vshrl.u32 %v1539, 5
        %v1541 = vand.u32 %v1539, 31
        %v1542 = vsub.s32 32, %v1541
        %v1543 = vshrl.u32 683565275, %v1542
        %v1544 = vshll.u32 683565275, %v1541
        %v1545 = vshrl.u32 2475754826, %v1542
        %v1546 = vor.u32 %v1544, %v1545
        %v1547 = vshll.u32 2475754826, %v1541
        %v1548 = vshrl.u32 2131351028, %v1542
        %v1549 = vor.u32 %v1547, %v1548
        %v1550 = vshll.u32 2131351028, %v1541
        %v1551 = vshrl.u32 2102212464, %v1542
        %v1552 = vor.u32 %v1550, %v1551
        %v1553 = vshll.u32 2102212464, %v1541
        %v1554 = vshrl.u32 920167782, %v1542
        %v1555 = vor.u32 %v1553, %v1554
        %v1556 = vshll.u32 920167782, %v1541
        %v1557 = vshrl.u32 1326507024, %v1542
        %v1558 = vor.u32 %v1556, %v1557
        %vm1559 = vcmp.lt.s32.totalorder %v1540, 1
        %vm1560 = vcmp.lt.s32.totalorder %v1540, 2
        %vm1561 = vcmp.lt.s32.totalorder %v1540, 3
        %vm1562 = vcmp.lt.s32.totalorder %v1540, 4
        %v1563 = vsel %vm1559, %v1543, %v1546
        %v1564 = vsel %vm1562, %v1552, 2102212464
        %v1565 = vsel %vm1561, %v1549, %v1564
        %v1566 = vsel %vm1560, %v1563, %v1565
        %v1567 = vsel %vm1559, %v1546, %v1549
        %v1568 = vsel %vm1562, %v1555, 920167782
        %v1569 = vsel %vm1561, %v1552, %v1568
        %v1570 = vsel %vm1560, %v1567, %v1569
        %v1571 = vsel %vm1559, %v1549, %v1552
        %v1572 = vsel %vm1562, %v1558, 1326507024
        %v1573 = vsel %vm1561, %v1555, %v1572
        %v1574 = vsel %vm1560, %v1571, %v1573
        %v1575 = vshll.u32 %v1535, 8
        %v1576 = vmul.u32.u64.compose %v1575, %v1574
        %v1577 = vextract.low.u32 %v1576
        %v1578 = vextract.high.u32 %v1576
        %v1579 = vmul.u32.u64.compose %v1575, %v1570
        %v1580 = vextract.low.u32 %v1579
        %v1581 = vextract.high.u32 %v1579
        %v1582 = vmul.u32 %v1575, %v1566
        %v1583 = vadd.s32 %v1578, %v1580
        %vm1584 = vc.u32 %v1578, %v1580
        %v1585 = vadd.s32 %v1581, 1
        %v1586 = vsel %vm1584, %v1585, %v1581
        %v1587 = vadd.s32 %v1582, %v1586
        %v1588 = vadd.s32 %v1587, 536870912
        %v1589 = vshrl.u32 %v1588, 30
        %v1590 = vshll.u32 %v1589, 30
        %v1591 = vsub.s32 %v1587, %v1590
        %vm1592 = vcmp.lt.s32.totalorder %v1591, 0
        %v1593 = vsub.s32 0, %v1591
        %v1594 = vsel %vm1592, %v1593, %v1591
        %v1595 = vclz %v1594
        %v1596 = vsub.s32 %v1595, 2
        %vm1597 = vcmp.gt.s32.totalorder 0, %v1596
        %v1598 = vsel %vm1597, 0, %v1596
        %v1599 = vsub.s32 32, %v1598
        %v1600 = vshll.u32 %v1591, %v1598
        %v1601 = vshrl.u32 %v1583, %v1599
        %v1602 = vor.u32 %v1600, %v1601
        %v1603 = vsub.s32 4294967266, %v1598
        %v1604 = vadd.s32 %v1603, 127
        %v1605 = vshll.u32 %v1604, 23
        %v1606 = vor.u32 4788187, %v1605
        %v1607 = vand.u32 2147483647, %v1606
        %v1609 = vcvt.s32.f32 %v1602
        %v1610 = vmul.f32 %v1609, %v1607
        %v1611 = vxor.u32 %v1610, 2147483648
        %v1612 = vsel %vm1529, %v1611, %v1610
        %v1613 = vsub.s32 4, %v1589
        %v1614 = vsel %vm1529, %v1613, %v1589
        %v1615 = vsel %vm1528, %v893, %v1612
        %v1616 = vsel %vm1528, 0, %v1614
        %v1617 = vcosq.f32.pop %v1615
        %v1618 = vsinq.f32.pop %v1615
        %vm1619 = vweird.f32 %v893
        %v1620 = vadd.s32 %v1616, 3
        %v1621 = vand.u32 %v1620, 3
        %vm1622 = vcmp.lt.s32.totalorder %v1621, 2
        %vm1623 = vcmp.eq.s32.totalorder %v1621, 0
        %v1624 = vxor.u32 %v1618, 2147483648
        %v1625 = vsel %vm1623, %v1617, %v1624
        %vm1626 = vcmp.eq.s32.totalorder %v1621, 2
        %v1627 = vxor.u32 %v1617, 2147483648
        %v1628 = vsel %vm1626, %v1627, %v1618
        %v1629 = vsel %vm1622, %v1625, %v1628
        %v1630 = vsel %vm1619, nan, %v1629
        %v1631 = vand.u32 2147483647, %v894
        %vm1632 = vcmp.le.f32.partialorder %v1631, 0.7853982
        %vm1633 = vcmp.lt.s32.totalorder %v894, 0
        %v1634 = vand.u32 %v894, 2139095040
        %v1635 = vshrl.u32 %v1634, 23
        %v1636 = vsub.s32 %v1635, 127
        %v1637 = vand.u32 2147483647, %v894
        %v1638 = vand.u32 %v1637, 8388607
        %v1639 = vor.u32 %v1638, 8388608
        %v1640 = vsub.s32 0, %v1639
        %v1641 = vadd.s32 %v1636, 1
        %vm1642 = vcmp.gt.s32.totalorder %v1641, 0
        %v1643 = vsel %vm1642, %v1641, 0
        %v1644 = vshrl.u32 %v1643, 5
        %v1645 = vand.u32 %v1643, 31
        %v1646 = vsub.s32 32, %v1645
        %v1647 = vshrl.u32 683565275, %v1646
        %v1648 = vshll.u32 683565275, %v1645
        %v1649 = vshrl.u32 2475754826, %v1646
        %v1650 = vor.u32 %v1648, %v1649
        %v1651 = vshll.u32 2475754826, %v1645
        %v1652 = vshrl.u32 2131351028, %v1646
        %v1653 = vor.u32 %v1651, %v1652
        %v1654 = vshll.u32 2131351028, %v1645
        %v1655 = vshrl.u32 2102212464, %v1646
        %v1656 = vor.u32 %v1654, %v1655
        %v1657 = vshll.u32 2102212464, %v1645
        %v1658 = vshrl.u32 920167782, %v1646
        %v1659 = vor.u32 %v1657, %v1658
        %v1660 = vshll.u32 920167782, %v1645
        %v1661 = vshrl.u32 1326507024, %v1646
        %v1662 = vor.u32 %v1660, %v1661
        %vm1663 = vcmp.lt.s32.totalorder %v1644, 1
        %vm1664 = vcmp.lt.s32.totalorder %v1644, 2
        %vm1665 = vcmp.lt.s32.totalorder %v1644, 3
        %vm1666 = vcmp.lt.s32.totalorder %v1644, 4
        %v1667 = vsel %vm1663, %v1647, %v1650
        %v1668 = vsel %vm1666, %v1656, 2102212464
        %v1669 = vsel %vm1665, %v1653, %v1668
        %v1670 = vsel %vm1664, %v1667, %v1669
        %v1671 = vsel %vm1663, %v1650, %v1653
        %v1672 = vsel %vm1666, %v1659, 920167782
        %v1673 = vsel %vm1665, %v1656, %v1672
        %v1674 = vsel %vm1664, %v1671, %v1673
        %v1675 = vsel %vm1663, %v1653, %v1656
        %v1676 = vsel %vm1666, %v1662, 1326507024
        %v1677 = vsel %vm1665, %v1659, %v1676
        %v1678 = vsel %vm1664, %v1675, %v1677
        %v1679 = vshll.u32 %v1639, 8
        %v1680 = vmul.u32.u64.compose %v1679, %v1678
        %v1681 = vextract.low.u32 %v1680
        %v1682 = vextract.high.u32 %v1680
        %v1683 = vmul.u32.u64.compose %v1679, %v1674
        %v1684 = vextract.low.u32 %v1683
        %v1685 = vextract.high.u32 %v1683
        %v1686 = vmul.u32 %v1679, %v1670
        %v1687 = vadd.s32 %v1682, %v1684
        %vm1688 = vc.u32 %v1682, %v1684
        %v1689 = vadd.s32 %v1685, 1
        %v1690 = vsel %vm1688, %v1689, %v1685
        %v1691 = vadd.s32 %v1686, %v1690
        %v1692 = vadd.s32 %v1691, 536870912
        %v1693 = vshrl.u32 %v1692, 30
        %v1694 = vshll.u32 %v1693, 30
        %v1695 = vsub.s32 %v1691, %v1694
        %vm1696 = vcmp.lt.s32.totalorder %v1695, 0
        %v1697 = vsub.s32 0, %v1695
        %v1698 = vsel %vm1696, %v1697, %v1695
        %v1699 = vclz %v1698
        %v1700 = vsub.s32 %v1699, 2
        %vm1701 = vcmp.gt.s32.totalorder 0, %v1700
        %v1702 = vsel %vm1701, 0, %v1700
        %v1703 = vsub.s32 32, %v1702
        %v1704 = vshll.u32 %v1695, %v1702
        %v1705 = vshrl.u32 %v1687, %v1703
        %v1706 = vor.u32 %v1704, %v1705
        %v1707 = vsub.s32 4294967266, %v1702
        %v1708 = vadd.s32 %v1707, 127
        %v1709 = vshll.u32 %v1708, 23
        %v1710 = vor.u32 4788187, %v1709
        %v1711 = vand.u32 2147483647, %v1710
        %v1713 = vcvt.s32.f32 %v1706
        %v1714 = vmul.f32 %v1713, %v1711
        %v1715 = vxor.u32 %v1714, 2147483648
        %v1716 = vsel %vm1633, %v1715, %v1714
        %v1717 = vsub.s32 4, %v1693
        %v1718 = vsel %vm1633, %v1717, %v1693
        %v1719 = vsel %vm1632, %v894, %v1716
        %v1720 = vsel %vm1632, 0, %v1718
        %v1721 = vcosq.f32.pop %v1719
        %v1722 = vsinq.f32.pop %v1719
        %vm1723 = vweird.f32 %v894
        %v1724 = vadd.s32 %v1720, 3
        %v1725 = vand.u32 %v1724, 3
        %vm1726 = vcmp.lt.s32.totalorder %v1725, 2
        %vm1727 = vcmp.eq.s32.totalorder %v1725, 0
        %v1728 = vxor.u32 %v1722, 2147483648
        %v1729 = vsel %vm1727, %v1721, %v1728
        %vm1730 = vcmp.eq.s32.totalorder %v1725, 2
        %v1731 = vxor.u32 %v1721, 2147483648
        %v1732 = vsel %vm1730, %v1731, %v1722
        %v1733 = vsel %vm1726, %v1729, %v1732
        %v1734 = vsel %vm1723, nan, %v1733
        %v1735 = vand.u32 2147483647, %v895
        %vm1736 = vcmp.le.f32.partialorder %v1735, 0.7853982
        %vm1737 = vcmp.lt.s32.totalorder %v895, 0
        %v1738 = vand.u32 %v895, 2139095040
        %v1739 = vshrl.u32 %v1738, 23
        %v1740 = vsub.s32 %v1739, 127
        %v1741 = vand.u32 2147483647, %v895
        %v1742 = vand.u32 %v1741, 8388607
        %v1743 = vor.u32 %v1742, 8388608
        %v1744 = vsub.s32 0, %v1743
        %v1745 = vadd.s32 %v1740, 1
        %vm1746 = vcmp.gt.s32.totalorder %v1745, 0
        %v1747 = vsel %vm1746, %v1745, 0
        %v1748 = vshrl.u32 %v1747, 5
        %v1749 = vand.u32 %v1747, 31
        %v1750 = vsub.s32 32, %v1749
        %v1751 = vshrl.u32 683565275, %v1750
        %v1752 = vshll.u32 683565275, %v1749
        %v1753 = vshrl.u32 2475754826, %v1750
        %v1754 = vor.u32 %v1752, %v1753
        %v1755 = vshll.u32 2475754826, %v1749
        %v1756 = vshrl.u32 2131351028, %v1750
        %v1757 = vor.u32 %v1755, %v1756
        %v1758 = vshll.u32 2131351028, %v1749
        %v1759 = vshrl.u32 2102212464, %v1750
        %v1760 = vor.u32 %v1758, %v1759
        %v1761 = vshll.u32 2102212464, %v1749
        %v1762 = vshrl.u32 920167782, %v1750
        %v1763 = vor.u32 %v1761, %v1762
        %v1764 = vshll.u32 920167782, %v1749
        %v1765 = vshrl.u32 1326507024, %v1750
        %v1766 = vor.u32 %v1764, %v1765
        %vm1767 = vcmp.lt.s32.totalorder %v1748, 1
        %vm1768 = vcmp.lt.s32.totalorder %v1748, 2
        %vm1769 = vcmp.lt.s32.totalorder %v1748, 3
        %vm1770 = vcmp.lt.s32.totalorder %v1748, 4
        %v1771 = vsel %vm1767, %v1751, %v1754
        %v1772 = vsel %vm1770, %v1760, 2102212464
        %v1773 = vsel %vm1769, %v1757, %v1772
        %v1774 = vsel %vm1768, %v1771, %v1773
        %v1775 = vsel %vm1767, %v1754, %v1757
        %v1776 = vsel %vm1770, %v1763, 920167782
        %v1777 = vsel %vm1769, %v1760, %v1776
        %v1778 = vsel %vm1768, %v1775, %v1777
        %v1779 = vsel %vm1767, %v1757, %v1760
        %v1780 = vsel %vm1770, %v1766, 1326507024
        %v1781 = vsel %vm1769, %v1763, %v1780
        %v1782 = vsel %vm1768, %v1779, %v1781
        %v1783 = vshll.u32 %v1743, 8
        %v1784 = vmul.u32.u64.compose %v1783, %v1782
        %v1785 = vextract.low.u32 %v1784
        %v1786 = vextract.high.u32 %v1784
        %v1787 = vmul.u32.u64.compose %v1783, %v1778
        %v1788 = vextract.low.u32 %v1787
        %v1789 = vextract.high.u32 %v1787
        %v1790 = vmul.u32 %v1783, %v1774
        %v1791 = vadd.s32 %v1786, %v1788
        %vm1792 = vc.u32 %v1786, %v1788
        %v1793 = vadd.s32 %v1789, 1
        %v1794 = vsel %vm1792, %v1793, %v1789
        %v1795 = vadd.s32 %v1790, %v1794
        %v1796 = vadd.s32 %v1795, 536870912
        %v1797 = vshrl.u32 %v1796, 30
        %v1798 = vshll.u32 %v1797, 30
        %v1799 = vsub.s32 %v1795, %v1798
        %vm1800 = vcmp.lt.s32.totalorder %v1799, 0
        %v1801 = vsub.s32 0, %v1799
        %v1802 = vsel %vm1800, %v1801, %v1799
        %v1803 = vclz %v1802
        %v1804 = vsub.s32 %v1803, 2
        %vm1805 = vcmp.gt.s32.totalorder 0, %v1804
        %v1806 = vsel %vm1805, 0, %v1804
        %v1807 = vsub.s32 32, %v1806
        %v1808 = vshll.u32 %v1799, %v1806
        %v1809 = vshrl.u32 %v1791, %v1807
        %v1810 = vor.u32 %v1808, %v1809
        %v1811 = vsub.s32 4294967266, %v1806
        %v1812 = vadd.s32 %v1811, 127
        %v1813 = vshll.u32 %v1812, 23
        %v1814 = vor.u32 4788187, %v1813
        %v1815 = vand.u32 2147483647, %v1814
        %v1817 = vcvt.s32.f32 %v1810
        %v1818 = vmul.f32 %v1817, %v1815
        %v1819 = vxor.u32 %v1818, 2147483648
        %v1820 = vsel %vm1737, %v1819, %v1818
        %v1821 = vsub.s32 4, %v1797
        %v1822 = vsel %vm1737, %v1821, %v1797
        %v1823 = vsel %vm1736, %v895, %v1820
        %v1824 = vsel %vm1736, 0, %v1822
        %v1825 = vcosq.f32.pop %v1823
        %v1826 = vsinq.f32.pop %v1823
        %vm1827 = vweird.f32 %v895
        %v1828 = vadd.s32 %v1824, 3
        %v1829 = vand.u32 %v1828, 3
        %vm1830 = vcmp.lt.s32.totalorder %v1829, 2
        %vm1831 = vcmp.eq.s32.totalorder %v1829, 0
        %v1832 = vxor.u32 %v1826, 2147483648
        %v1833 = vsel %vm1831, %v1825, %v1832
        %vm1834 = vcmp.eq.s32.totalorder %v1829, 2
        %v1835 = vxor.u32 %v1825, 2147483648
        %v1836 = vsel %vm1834, %v1835, %v1826
        %v1837 = vsel %vm1830, %v1833, %v1836
        %v1838 = vsel %vm1827, nan, %v1837
        %v1839 = vand.u32 2147483647, %v896
        %vm1840 = vcmp.le.f32.partialorder %v1839, 0.7853982
        %vm1841 = vcmp.lt.s32.totalorder %v896, 0
        %v1842 = vand.u32 %v896, 2139095040
        %v1843 = vshrl.u32 %v1842, 23
        %v1844 = vsub.s32 %v1843, 127
        %v1845 = vand.u32 2147483647, %v896
        %v1846 = vand.u32 %v1845, 8388607
        %v1847 = vor.u32 %v1846, 8388608
        %v1848 = vsub.s32 0, %v1847
        %v1849 = vadd.s32 %v1844, 1
        %vm1850 = vcmp.gt.s32.totalorder %v1849, 0
        %v1851 = vsel %vm1850, %v1849, 0
        %v1852 = vshrl.u32 %v1851, 5
        %v1853 = vand.u32 %v1851, 31
        %v1854 = vsub.s32 32, %v1853
        %v1855 = vshrl.u32 683565275, %v1854
        %v1856 = vshll.u32 683565275, %v1853
        %v1857 = vshrl.u32 2475754826, %v1854
        %v1858 = vor.u32 %v1856, %v1857
        %v1859 = vshll.u32 2475754826, %v1853
        %v1860 = vshrl.u32 2131351028, %v1854
        %v1861 = vor.u32 %v1859, %v1860
        %v1862 = vshll.u32 2131351028, %v1853
        %v1863 = vshrl.u32 2102212464, %v1854
        %v1864 = vor.u32 %v1862, %v1863
        %v1865 = vshll.u32 2102212464, %v1853
        %v1866 = vshrl.u32 920167782, %v1854
        %v1867 = vor.u32 %v1865, %v1866
        %v1868 = vshll.u32 920167782, %v1853
        %v1869 = vshrl.u32 1326507024, %v1854
        %v1870 = vor.u32 %v1868, %v1869
        %vm1871 = vcmp.lt.s32.totalorder %v1852, 1
        %vm1872 = vcmp.lt.s32.totalorder %v1852, 2
        %vm1873 = vcmp.lt.s32.totalorder %v1852, 3
        %vm1874 = vcmp.lt.s32.totalorder %v1852, 4
        %v1875 = vsel %vm1871, %v1855, %v1858
        %v1876 = vsel %vm1874, %v1864, 2102212464
        %v1877 = vsel %vm1873, %v1861, %v1876
        %v1878 = vsel %vm1872, %v1875, %v1877
        %v1879 = vsel %vm1871, %v1858, %v1861
        %v1880 = vsel %vm1874, %v1867, 920167782
        %v1881 = vsel %vm1873, %v1864, %v1880
        %v1882 = vsel %vm1872, %v1879, %v1881
        %v1883 = vsel %vm1871, %v1861, %v1864
        %v1884 = vsel %vm1874, %v1870, 1326507024
        %v1885 = vsel %vm1873, %v1867, %v1884
        %v1886 = vsel %vm1872, %v1883, %v1885
        %v1887 = vshll.u32 %v1847, 8
        %v1888 = vmul.u32.u64.compose %v1887, %v1886
        %v1889 = vextract.low.u32 %v1888
        %v1890 = vextract.high.u32 %v1888
        %v1891 = vmul.u32.u64.compose %v1887, %v1882
        %v1892 = vextract.low.u32 %v1891
        %v1893 = vextract.high.u32 %v1891
        %v1894 = vmul.u32 %v1887, %v1878
        %v1895 = vadd.s32 %v1890, %v1892
        %vm1896 = vc.u32 %v1890, %v1892
        %v1897 = vadd.s32 %v1893, 1
        %v1898 = vsel %vm1896, %v1897, %v1893
        %v1899 = vadd.s32 %v1894, %v1898
        %v1900 = vadd.s32 %v1899, 536870912
        %v1901 = vshrl.u32 %v1900, 30
        %v1902 = vshll.u32 %v1901, 30
        %v1903 = vsub.s32 %v1899, %v1902
        %vm1904 = vcmp.lt.s32.totalorder %v1903, 0
        %v1905 = vsub.s32 0, %v1903
        %v1906 = vsel %vm1904, %v1905, %v1903
        %v1907 = vclz %v1906
        %v1908 = vsub.s32 %v1907, 2
        %vm1909 = vcmp.gt.s32.totalorder 0, %v1908
        %v1910 = vsel %vm1909, 0, %v1908
        %v1911 = vsub.s32 32, %v1910
        %v1912 = vshll.u32 %v1903, %v1910
        %v1913 = vshrl.u32 %v1895, %v1911
        %v1914 = vor.u32 %v1912, %v1913
        %v1915 = vsub.s32 4294967266, %v1910
        %v1916 = vadd.s32 %v1915, 127
        %v1917 = vshll.u32 %v1916, 23
        %v1918 = vor.u32 4788187, %v1917
        %v1919 = vand.u32 2147483647, %v1918
        %v1921 = vcvt.s32.f32 %v1914
        %v1922 = vmul.f32 %v1921, %v1919
        %v1923 = vxor.u32 %v1922, 2147483648
        %v1924 = vsel %vm1841, %v1923, %v1922
        %v1925 = vsub.s32 4, %v1901
        %v1926 = vsel %vm1841, %v1925, %v1901
        %v1927 = vsel %vm1840, %v896, %v1924
        %v1928 = vsel %vm1840, 0, %v1926
        %v1929 = vcosq.f32.pop %v1927
        %v1930 = vsinq.f32.pop %v1927
        %vm1931 = vweird.f32 %v896
        %v1932 = vadd.s32 %v1928, 3
        %v1933 = vand.u32 %v1932, 3
        %vm1934 = vcmp.lt.s32.totalorder %v1933, 2
        %vm1935 = vcmp.eq.s32.totalorder %v1933, 0
        %v1936 = vxor.u32 %v1930, 2147483648
        %v1937 = vsel %vm1935, %v1929, %v1936
        %vm1938 = vcmp.eq.s32.totalorder %v1933, 2
        %v1939 = vxor.u32 %v1929, 2147483648
        %v1940 = vsel %vm1938, %v1939, %v1930
        %v1941 = vsel %vm1934, %v1937, %v1940
        %v1942 = vsel %vm1931, nan, %v1941
        %v1943 = vand.u32 2147483647, %v897
        %vm1944 = vcmp.le.f32.partialorder %v1943, 0.7853982
        %vm1945 = vcmp.lt.s32.totalorder %v897, 0
        %v1946 = vand.u32 %v897, 2139095040
        %v1947 = vshrl.u32 %v1946, 23
        %v1948 = vsub.s32 %v1947, 127
        %v1949 = vand.u32 2147483647, %v897
        %v1950 = vand.u32 %v1949, 8388607
        %v1951 = vor.u32 %v1950, 8388608
        %v1952 = vsub.s32 0, %v1951
        %v1953 = vadd.s32 %v1948, 1
        %vm1954 = vcmp.gt.s32.totalorder %v1953, 0
        %v1955 = vsel %vm1954, %v1953, 0
        %v1956 = vshrl.u32 %v1955, 5
        %v1957 = vand.u32 %v1955, 31
        %v1958 = vsub.s32 32, %v1957
        %v1959 = vshrl.u32 683565275, %v1958
        %v1960 = vshll.u32 683565275, %v1957
        %v1961 = vshrl.u32 2475754826, %v1958
        %v1962 = vor.u32 %v1960, %v1961
        %v1963 = vshll.u32 2475754826, %v1957
        %v1964 = vshrl.u32 2131351028, %v1958
        %v1965 = vor.u32 %v1963, %v1964
        %v1966 = vshll.u32 2131351028, %v1957
        %v1967 = vshrl.u32 2102212464, %v1958
        %v1968 = vor.u32 %v1966, %v1967
        %v1969 = vshll.u32 2102212464, %v1957
        %v1970 = vshrl.u32 920167782, %v1958
        %v1971 = vor.u32 %v1969, %v1970
        %v1972 = vshll.u32 920167782, %v1957
        %v1973 = vshrl.u32 1326507024, %v1958
        %v1974 = vor.u32 %v1972, %v1973
        %vm1975 = vcmp.lt.s32.totalorder %v1956, 1
        %vm1976 = vcmp.lt.s32.totalorder %v1956, 2
        %vm1977 = vcmp.lt.s32.totalorder %v1956, 3
        %vm1978 = vcmp.lt.s32.totalorder %v1956, 4
        %v1979 = vsel %vm1975, %v1959, %v1962
        %v1980 = vsel %vm1978, %v1968, 2102212464
        %v1981 = vsel %vm1977, %v1965, %v1980
        %v1982 = vsel %vm1976, %v1979, %v1981
        %v1983 = vsel %vm1975, %v1962, %v1965
        %v1984 = vsel %vm1978, %v1971, 920167782
        %v1985 = vsel %vm1977, %v1968, %v1984
        %v1986 = vsel %vm1976, %v1983, %v1985
        %v1987 = vsel %vm1975, %v1965, %v1968
        %v1988 = vsel %vm1978, %v1974, 1326507024
        %v1989 = vsel %vm1977, %v1971, %v1988
        %v1990 = vsel %vm1976, %v1987, %v1989
        %v1991 = vshll.u32 %v1951, 8
        %v1992 = vmul.u32.u64.compose %v1991, %v1990
        %v1993 = vextract.low.u32 %v1992
        %v1994 = vextract.high.u32 %v1992
        %v1995 = vmul.u32.u64.compose %v1991, %v1986
        %v1996 = vextract.low.u32 %v1995
        %v1997 = vextract.high.u32 %v1995
        %v1998 = vmul.u32 %v1991, %v1982
        %v1999 = vadd.s32 %v1994, %v1996
        %vm2000 = vc.u32 %v1994, %v1996
        %v2001 = vadd.s32 %v1997, 1
        %v2002 = vsel %vm2000, %v2001, %v1997
        %v2003 = vadd.s32 %v1998, %v2002
        %v2004 = vadd.s32 %v2003, 536870912
        %v2005 = vshrl.u32 %v2004, 30
        %v2006 = vshll.u32 %v2005, 30
        %v2007 = vsub.s32 %v2003, %v2006
        %vm2008 = vcmp.lt.s32.totalorder %v2007, 0
        %v2009 = vsub.s32 0, %v2007
        %v2010 = vsel %vm2008, %v2009, %v2007
        %v2011 = vclz %v2010
        %v2012 = vsub.s32 %v2011, 2
        %vm2013 = vcmp.gt.s32.totalorder 0, %v2012
        %v2014 = vsel %vm2013, 0, %v2012
        %v2015 = vsub.s32 32, %v2014
        %v2016 = vshll.u32 %v2007, %v2014
        %v2017 = vshrl.u32 %v1999, %v2015
        %v2018 = vor.u32 %v2016, %v2017
        %v2019 = vsub.s32 4294967266, %v2014
        %v2020 = vadd.s32 %v2019, 127
        %v2021 = vshll.u32 %v2020, 23
        %v2022 = vor.u32 4788187, %v2021
        %v2023 = vand.u32 2147483647, %v2022
        %v2025 = vcvt.s32.f32 %v2018
        %v2026 = vmul.f32 %v2025, %v2023
        %v2027 = vxor.u32 %v2026, 2147483648
        %v2028 = vsel %vm1945, %v2027, %v2026
        %v2029 = vsub.s32 4, %v2005
        %v2030 = vsel %vm1945, %v2029, %v2005
        %v2031 = vsel %vm1944, %v897, %v2028
        %v2032 = vsel %vm1944, 0, %v2030
        %v2033 = vcosq.f32.pop %v2031
        %v2034 = vsinq.f32.pop %v2031
        %vm2035 = vweird.f32 %v897
        %v2036 = vadd.s32 %v2032, 3
        %v2037 = vand.u32 %v2036, 3
        %vm2038 = vcmp.lt.s32.totalorder %v2037, 2
        %vm2039 = vcmp.eq.s32.totalorder %v2037, 0
        %v2040 = vxor.u32 %v2034, 2147483648
        %v2041 = vsel %vm2039, %v2033, %v2040
        %vm2042 = vcmp.eq.s32.totalorder %v2037, 2
        %v2043 = vxor.u32 %v2033, 2147483648
        %v2044 = vsel %vm2042, %v2043, %v2034
        %v2045 = vsel %vm2038, %v2041, %v2044
        %v2046 = vsel %vm2035, nan, %v2045
        %v2047 = vand.u32 2147483647, %v898
        %vm2048 = vcmp.le.f32.partialorder %v2047, 0.7853982
        %vm2049 = vcmp.lt.s32.totalorder %v898, 0
        %v2050 = vand.u32 %v898, 2139095040
        %v2051 = vshrl.u32 %v2050, 23
        %v2052 = vsub.s32 %v2051, 127
        %v2053 = vand.u32 2147483647, %v898
        %v2054 = vand.u32 %v2053, 8388607
        %v2055 = vor.u32 %v2054, 8388608
        %v2056 = vsub.s32 0, %v2055
        %v2057 = vadd.s32 %v2052, 1
        %vm2058 = vcmp.gt.s32.totalorder %v2057, 0
        %v2059 = vsel %vm2058, %v2057, 0
        %v2060 = vshrl.u32 %v2059, 5
        %v2061 = vand.u32 %v2059, 31
        %v2062 = vsub.s32 32, %v2061
        %v2063 = vshrl.u32 683565275, %v2062
        %v2064 = vshll.u32 683565275, %v2061
        %v2065 = vshrl.u32 2475754826, %v2062
        %v2066 = vor.u32 %v2064, %v2065
        %v2067 = vshll.u32 2475754826, %v2061
        %v2068 = vshrl.u32 2131351028, %v2062
        %v2069 = vor.u32 %v2067, %v2068
        %v2070 = vshll.u32 2131351028, %v2061
        %v2071 = vshrl.u32 2102212464, %v2062
        %v2072 = vor.u32 %v2070, %v2071
        %v2073 = vshll.u32 2102212464, %v2061
        %v2074 = vshrl.u32 920167782, %v2062
        %v2075 = vor.u32 %v2073, %v2074
        %v2076 = vshll.u32 920167782, %v2061
        %v2077 = vshrl.u32 1326507024, %v2062
        %v2078 = vor.u32 %v2076, %v2077
        %vm2079 = vcmp.lt.s32.totalorder %v2060, 1
        %vm2080 = vcmp.lt.s32.totalorder %v2060, 2
        %vm2081 = vcmp.lt.s32.totalorder %v2060, 3
        %vm2082 = vcmp.lt.s32.totalorder %v2060, 4
        %v2083 = vsel %vm2079, %v2063, %v2066
        %v2084 = vsel %vm2082, %v2072, 2102212464
        %v2085 = vsel %vm2081, %v2069, %v2084
        %v2086 = vsel %vm2080, %v2083, %v2085
        %v2087 = vsel %vm2079, %v2066, %v2069
        %v2088 = vsel %vm2082, %v2075, 920167782
        %v2089 = vsel %vm2081, %v2072, %v2088
        %v2090 = vsel %vm2080, %v2087, %v2089
        %v2091 = vsel %vm2079, %v2069, %v2072
        %v2092 = vsel %vm2082, %v2078, 1326507024
        %v2093 = vsel %vm2081, %v2075, %v2092
        %v2094 = vsel %vm2080, %v2091, %v2093
        %v2095 = vshll.u32 %v2055, 8
        %v2096 = vmul.u32.u64.compose %v2095, %v2094
        %v2097 = vextract.low.u32 %v2096
        %v2098 = vextract.high.u32 %v2096
        %v2099 = vmul.u32.u64.compose %v2095, %v2090
        %v2100 = vextract.low.u32 %v2099
        %v2101 = vextract.high.u32 %v2099
        %v2102 = vmul.u32 %v2095, %v2086
        %v2103 = vadd.s32 %v2098, %v2100
        %vm2104 = vc.u32 %v2098, %v2100
        %v2105 = vadd.s32 %v2101, 1
        %v2106 = vsel %vm2104, %v2105, %v2101
        %v2107 = vadd.s32 %v2102, %v2106
        %v2108 = vadd.s32 %v2107, 536870912
        %v2109 = vshrl.u32 %v2108, 30
        %v2110 = vshll.u32 %v2109, 30
        %v2111 = vsub.s32 %v2107, %v2110
        %vm2112 = vcmp.lt.s32.totalorder %v2111, 0
        %v2113 = vsub.s32 0, %v2111
        %v2114 = vsel %vm2112, %v2113, %v2111
        %v2115 = vclz %v2114
        %v2116 = vsub.s32 %v2115, 2
        %vm2117 = vcmp.gt.s32.totalorder 0, %v2116
        %v2118 = vsel %vm2117, 0, %v2116
        %v2119 = vsub.s32 32, %v2118
        %v2120 = vshll.u32 %v2111, %v2118
        %v2121 = vshrl.u32 %v2103, %v2119
        %v2122 = vor.u32 %v2120, %v2121
        %v2123 = vsub.s32 4294967266, %v2118
        %v2124 = vadd.s32 %v2123, 127
        %v2125 = vshll.u32 %v2124, 23
        %v2126 = vor.u32 4788187, %v2125
        %v2127 = vand.u32 2147483647, %v2126
        %v2129 = vcvt.s32.f32 %v2122
        %v2130 = vmul.f32 %v2129, %v2127
        %v2131 = vxor.u32 %v2130, 2147483648
        %v2132 = vsel %vm2049, %v2131, %v2130
        %v2133 = vsub.s32 4, %v2109
        %v2134 = vsel %vm2049, %v2133, %v2109
        %v2135 = vsel %vm2048, %v898, %v2132
        %v2136 = vsel %vm2048, 0, %v2134
        %v2137 = vcosq.f32.pop %v2135
        %v2138 = vsinq.f32.pop %v2135
        %vm2139 = vweird.f32 %v898
        %v2140 = vadd.s32 %v2136, 3
        %v2141 = vand.u32 %v2140, 3
        %vm2142 = vcmp.lt.s32.totalorder %v2141, 2
        %vm2143 = vcmp.eq.s32.totalorder %v2141, 0
        %v2144 = vxor.u32 %v2138, 2147483648
        %v2145 = vsel %vm2143, %v2137, %v2144
        %vm2146 = vcmp.eq.s32.totalorder %v2141, 2
        %v2147 = vxor.u32 %v2137, 2147483648
        %v2148 = vsel %vm2146, %v2147, %v2138
        %v2149 = vsel %vm2142, %v2145, %v2148
        %v2150 = vsel %vm2139, nan, %v2149
        %v2151 = vand.u32 2147483647, %v899
        %vm2152 = vcmp.le.f32.partialorder %v2151, 0.7853982
        %vm2153 = vcmp.lt.s32.totalorder %v899, 0
        %v2154 = vand.u32 %v899, 2139095040
        %v2155 = vshrl.u32 %v2154, 23
        %v2156 = vsub.s32 %v2155, 127
        %v2157 = vand.u32 2147483647, %v899
        %v2158 = vand.u32 %v2157, 8388607
        %v2159 = vor.u32 %v2158, 8388608
        %v2160 = vsub.s32 0, %v2159
        %v2161 = vadd.s32 %v2156, 1
        %vm2162 = vcmp.gt.s32.totalorder %v2161, 0
        %v2163 = vsel %vm2162, %v2161, 0
        %v2164 = vshrl.u32 %v2163, 5
        %v2165 = vand.u32 %v2163, 31
        %v2166 = vsub.s32 32, %v2165
        %v2167 = vshrl.u32 683565275, %v2166
        %v2168 = vshll.u32 683565275, %v2165
        %v2169 = vshrl.u32 2475754826, %v2166
        %v2170 = vor.u32 %v2168, %v2169
        %v2171 = vshll.u32 2475754826, %v2165
        %v2172 = vshrl.u32 2131351028, %v2166
        %v2173 = vor.u32 %v2171, %v2172
        %v2174 = vshll.u32 2131351028, %v2165
        %v2175 = vshrl.u32 2102212464, %v2166
        %v2176 = vor.u32 %v2174, %v2175
        %v2177 = vshll.u32 2102212464, %v2165
        %v2178 = vshrl.u32 920167782, %v2166
        %v2179 = vor.u32 %v2177, %v2178
        %v2180 = vshll.u32 920167782, %v2165
        %v2181 = vshrl.u32 1326507024, %v2166
        %v2182 = vor.u32 %v2180, %v2181
        %vm2183 = vcmp.lt.s32.totalorder %v2164, 1
        %vm2184 = vcmp.lt.s32.totalorder %v2164, 2
        %vm2185 = vcmp.lt.s32.totalorder %v2164, 3
        %vm2186 = vcmp.lt.s32.totalorder %v2164, 4
        %v2187 = vsel %vm2183, %v2167, %v2170
        %v2188 = vsel %vm2186, %v2176, 2102212464
        %v2189 = vsel %vm2185, %v2173, %v2188
        %v2190 = vsel %vm2184, %v2187, %v2189
        %v2191 = vsel %vm2183, %v2170, %v2173
        %v2192 = vsel %vm2186, %v2179, 920167782
        %v2193 = vsel %vm2185, %v2176, %v2192
        %v2194 = vsel %vm2184, %v2191, %v2193
        %v2195 = vsel %vm2183, %v2173, %v2176
        %v2196 = vsel %vm2186, %v2182, 1326507024
        %v2197 = vsel %vm2185, %v2179, %v2196
        %v2198 = vsel %vm2184, %v2195, %v2197
        %v2199 = vshll.u32 %v2159, 8
        %v2200 = vmul.u32.u64.compose %v2199, %v2198
        %v2201 = vextract.low.u32 %v2200
        %v2202 = vextract.high.u32 %v2200
        %v2203 = vmul.u32.u64.compose %v2199, %v2194
        %v2204 = vextract.low.u32 %v2203
        %v2205 = vextract.high.u32 %v2203
        %v2206 = vmul.u32 %v2199, %v2190
        %v2207 = vadd.s32 %v2202, %v2204
        %vm2208 = vc.u32 %v2202, %v2204
        %v2209 = vadd.s32 %v2205, 1
        %v2210 = vsel %vm2208, %v2209, %v2205
        %v2211 = vadd.s32 %v2206, %v2210
        %v2212 = vadd.s32 %v2211, 536870912
        %v2213 = vshrl.u32 %v2212, 30
        %v2214 = vshll.u32 %v2213, 30
        %v2215 = vsub.s32 %v2211, %v2214
        %vm2216 = vcmp.lt.s32.totalorder %v2215, 0
        %v2217 = vsub.s32 0, %v2215
        %v2218 = vsel %vm2216, %v2217, %v2215
        %v2219 = vclz %v2218
        %v2220 = vsub.s32 %v2219, 2
        %vm2221 = vcmp.gt.s32.totalorder 0, %v2220
        %v2222 = vsel %vm2221, 0, %v2220
        %v2223 = vsub.s32 32, %v2222
        %v2224 = vshll.u32 %v2215, %v2222
        %v2225 = vshrl.u32 %v2207, %v2223
        %v2226 = vor.u32 %v2224, %v2225
        %v2227 = vsub.s32 4294967266, %v2222
        %v2228 = vadd.s32 %v2227, 127
        %v2229 = vshll.u32 %v2228, 23
        %v2230 = vor.u32 4788187, %v2229
        %v2231 = vand.u32 2147483647, %v2230
        %v2233 = vcvt.s32.f32 %v2226
        %v2234 = vmul.f32 %v2233, %v2231
        %v2235 = vxor.u32 %v2234, 2147483648
        %v2236 = vsel %vm2153, %v2235, %v2234
        %v2237 = vsub.s32 4, %v2213
        %v2238 = vsel %vm2153, %v2237, %v2213
        %v2239 = vsel %vm2152, %v899, %v2236
        %v2240 = vsel %vm2152, 0, %v2238
        %v2241 = vcosq.f32.pop %v2239
        %v2242 = vsinq.f32.pop %v2239
        %vm2243 = vweird.f32 %v899
        %v2244 = vadd.s32 %v2240, 3
        %v2245 = vand.u32 %v2244, 3
        %vm2246 = vcmp.lt.s32.totalorder %v2245, 2
        %vm2247 = vcmp.eq.s32.totalorder %v2245, 0
        %v2248 = vxor.u32 %v2242, 2147483648
        %v2249 = vsel %vm2247, %v2241, %v2248
        %vm2250 = vcmp.eq.s32.totalorder %v2245, 2
        %v2251 = vxor.u32 %v2241, 2147483648
        %v2252 = vsel %vm2250, %v2251, %v2242
        %v2253 = vsel %vm2246, %v2249, %v2252
        %v2254 = vsel %vm2243, nan, %v2253
        %v2255 = vand.u32 2147483647, %v900
        %vm2256 = vcmp.le.f32.partialorder %v2255, 0.7853982
        %vm2257 = vcmp.lt.s32.totalorder %v900, 0
        %v2258 = vand.u32 %v900, 2139095040
        %v2259 = vshrl.u32 %v2258, 23
        %v2260 = vsub.s32 %v2259, 127
        %v2261 = vand.u32 2147483647, %v900
        %v2262 = vand.u32 %v2261, 8388607
        %v2263 = vor.u32 %v2262, 8388608
        %v2264 = vsub.s32 0, %v2263
        %v2265 = vadd.s32 %v2260, 1
        %vm2266 = vcmp.gt.s32.totalorder %v2265, 0
        %v2267 = vsel %vm2266, %v2265, 0
        %v2268 = vshrl.u32 %v2267, 5
        %v2269 = vand.u32 %v2267, 31
        %v2270 = vsub.s32 32, %v2269
        %v2271 = vshrl.u32 683565275, %v2270
        %v2272 = vshll.u32 683565275, %v2269
        %v2273 = vshrl.u32 2475754826, %v2270
        %v2274 = vor.u32 %v2272, %v2273
        %v2275 = vshll.u32 2475754826, %v2269
        %v2276 = vshrl.u32 2131351028, %v2270
        %v2277 = vor.u32 %v2275, %v2276
        %v2278 = vshll.u32 2131351028, %v2269
        %v2279 = vshrl.u32 2102212464, %v2270
        %v2280 = vor.u32 %v2278, %v2279
        %v2281 = vshll.u32 2102212464, %v2269
        %v2282 = vshrl.u32 920167782, %v2270
        %v2283 = vor.u32 %v2281, %v2282
        %v2284 = vshll.u32 920167782, %v2269
        %v2285 = vshrl.u32 1326507024, %v2270
        %v2286 = vor.u32 %v2284, %v2285
        %vm2287 = vcmp.lt.s32.totalorder %v2268, 1
        %vm2288 = vcmp.lt.s32.totalorder %v2268, 2
        %vm2289 = vcmp.lt.s32.totalorder %v2268, 3
        %vm2290 = vcmp.lt.s32.totalorder %v2268, 4
        %v2291 = vsel %vm2287, %v2271, %v2274
        %v2292 = vsel %vm2290, %v2280, 2102212464
        %v2293 = vsel %vm2289, %v2277, %v2292
        %v2294 = vsel %vm2288, %v2291, %v2293
        %v2295 = vsel %vm2287, %v2274, %v2277
        %v2296 = vsel %vm2290, %v2283, 920167782
        %v2297 = vsel %vm2289, %v2280, %v2296
        %v2298 = vsel %vm2288, %v2295, %v2297
        %v2299 = vsel %vm2287, %v2277, %v2280
        %v2300 = vsel %vm2290, %v2286, 1326507024
        %v2301 = vsel %vm2289, %v2283, %v2300
        %v2302 = vsel %vm2288, %v2299, %v2301
        %v2303 = vshll.u32 %v2263, 8
        %v2304 = vmul.u32.u64.compose %v2303, %v2302
        %v2305 = vextract.low.u32 %v2304
        %v2306 = vextract.high.u32 %v2304
        %v2307 = vmul.u32.u64.compose %v2303, %v2298
        %v2308 = vextract.low.u32 %v2307
        %v2309 = vextract.high.u32 %v2307
        %v2310 = vmul.u32 %v2303, %v2294
        %v2311 = vadd.s32 %v2306, %v2308
        %vm2312 = vc.u32 %v2306, %v2308
        %v2313 = vadd.s32 %v2309, 1
        %v2314 = vsel %vm2312, %v2313, %v2309
        %v2315 = vadd.s32 %v2310, %v2314
        %v2316 = vadd.s32 %v2315, 536870912
        %v2317 = vshrl.u32 %v2316, 30
        %v2318 = vshll.u32 %v2317, 30
        %v2319 = vsub.s32 %v2315, %v2318
        %vm2320 = vcmp.lt.s32.totalorder %v2319, 0
        %v2321 = vsub.s32 0, %v2319
        %v2322 = vsel %vm2320, %v2321, %v2319
        %v2323 = vclz %v2322
        %v2324 = vsub.s32 %v2323, 2
        %vm2325 = vcmp.gt.s32.totalorder 0, %v2324
        %v2326 = vsel %vm2325, 0, %v2324
        %v2327 = vsub.s32 32, %v2326
        %v2328 = vshll.u32 %v2319, %v2326
        %v2329 = vshrl.u32 %v2311, %v2327
        %v2330 = vor.u32 %v2328, %v2329
        %v2331 = vsub.s32 4294967266, %v2326
        %v2332 = vadd.s32 %v2331, 127
        %v2333 = vshll.u32 %v2332, 23
        %v2334 = vor.u32 4788187, %v2333
        %v2335 = vand.u32 2147483647, %v2334
        %v2337 = vcvt.s32.f32 %v2330
        %v2338 = vmul.f32 %v2337, %v2335
        %v2339 = vxor.u32 %v2338, 2147483648
        %v2340 = vsel %vm2257, %v2339, %v2338
        %v2341 = vsub.s32 4, %v2317
        %v2342 = vsel %vm2257, %v2341, %v2317
        %v2343 = vsel %vm2256, %v900, %v2340
        %v2344 = vsel %vm2256, 0, %v2342
        %v2345 = vcosq.f32.pop %v2343
        %v2346 = vsinq.f32.pop %v2343
        %vm2347 = vweird.f32 %v900
        %v2348 = vadd.s32 %v2344, 3
        %v2349 = vand.u32 %v2348, 3
        %vm2350 = vcmp.lt.s32.totalorder %v2349, 2
        %vm2351 = vcmp.eq.s32.totalorder %v2349, 0
        %v2352 = vxor.u32 %v2346, 2147483648
        %v2353 = vsel %vm2351, %v2345, %v2352
        %vm2354 = vcmp.eq.s32.totalorder %v2349, 2
        %v2355 = vxor.u32 %v2345, 2147483648
        %v2356 = vsel %vm2354, %v2355, %v2346
        %v2357 = vsel %vm2350, %v2353, %v2356
        %v2358 = vsel %vm2347, nan, %v2357
        %v2359 = vand.u32 2147483647, %v901
        %vm2360 = vcmp.le.f32.partialorder %v2359, 0.7853982
        %vm2361 = vcmp.lt.s32.totalorder %v901, 0
        %v2362 = vand.u32 %v901, 2139095040
        %v2363 = vshrl.u32 %v2362, 23
        %v2364 = vsub.s32 %v2363, 127
        %v2365 = vand.u32 2147483647, %v901
        %v2366 = vand.u32 %v2365, 8388607
        %v2367 = vor.u32 %v2366, 8388608
        %v2368 = vsub.s32 0, %v2367
        %v2369 = vadd.s32 %v2364, 1
        %vm2370 = vcmp.gt.s32.totalorder %v2369, 0
        %v2371 = vsel %vm2370, %v2369, 0
        %v2372 = vshrl.u32 %v2371, 5
        %v2373 = vand.u32 %v2371, 31
        %v2374 = vsub.s32 32, %v2373
        %v2375 = vshrl.u32 683565275, %v2374
        %v2376 = vshll.u32 683565275, %v2373
        %v2377 = vshrl.u32 2475754826, %v2374
        %v2378 = vor.u32 %v2376, %v2377
        %v2379 = vshll.u32 2475754826, %v2373
        %v2380 = vshrl.u32 2131351028, %v2374
        %v2381 = vor.u32 %v2379, %v2380
        %v2382 = vshll.u32 2131351028, %v2373
        %v2383 = vshrl.u32 2102212464, %v2374
        %v2384 = vor.u32 %v2382, %v2383
        %v2385 = vshll.u32 2102212464, %v2373
        %v2386 = vshrl.u32 920167782, %v2374
        %v2387 = vor.u32 %v2385, %v2386
        %v2388 = vshll.u32 920167782, %v2373
        %v2389 = vshrl.u32 1326507024, %v2374
        %v2390 = vor.u32 %v2388, %v2389
        %vm2391 = vcmp.lt.s32.totalorder %v2372, 1
        %vm2392 = vcmp.lt.s32.totalorder %v2372, 2
        %vm2393 = vcmp.lt.s32.totalorder %v2372, 3
        %vm2394 = vcmp.lt.s32.totalorder %v2372, 4
        %v2395 = vsel %vm2391, %v2375, %v2378
        %v2396 = vsel %vm2394, %v2384, 2102212464
        %v2397 = vsel %vm2393, %v2381, %v2396
        %v2398 = vsel %vm2392, %v2395, %v2397
        %v2399 = vsel %vm2391, %v2378, %v2381
        %v2400 = vsel %vm2394, %v2387, 920167782
        %v2401 = vsel %vm2393, %v2384, %v2400
        %v2402 = vsel %vm2392, %v2399, %v2401
        %v2403 = vsel %vm2391, %v2381, %v2384
        %v2404 = vsel %vm2394, %v2390, 1326507024
        %v2405 = vsel %vm2393, %v2387, %v2404
        %v2406 = vsel %vm2392, %v2403, %v2405
        %v2407 = vshll.u32 %v2367, 8
        %v2408 = vmul.u32.u64.compose %v2407, %v2406
        %v2409 = vextract.low.u32 %v2408
        %v2410 = vextract.high.u32 %v2408
        %v2411 = vmul.u32.u64.compose %v2407, %v2402
        %v2412 = vextract.low.u32 %v2411
        %v2413 = vextract.high.u32 %v2411
        %v2414 = vmul.u32 %v2407, %v2398
        %v2415 = vadd.s32 %v2410, %v2412
        %vm2416 = vc.u32 %v2410, %v2412
        %v2417 = vadd.s32 %v2413, 1
        %v2418 = vsel %vm2416, %v2417, %v2413
        %v2419 = vadd.s32 %v2414, %v2418
        %v2420 = vadd.s32 %v2419, 536870912
        %v2421 = vshrl.u32 %v2420, 30
        %v2422 = vshll.u32 %v2421, 30
        %v2423 = vsub.s32 %v2419, %v2422
        %vm2424 = vcmp.lt.s32.totalorder %v2423, 0
        %v2425 = vsub.s32 0, %v2423
        %v2426 = vsel %vm2424, %v2425, %v2423
        %v2427 = vclz %v2426
        %v2428 = vsub.s32 %v2427, 2
        %vm2429 = vcmp.gt.s32.totalorder 0, %v2428
        %v2430 = vsel %vm2429, 0, %v2428
        %v2431 = vsub.s32 32, %v2430
        %v2432 = vshll.u32 %v2423, %v2430
        %v2433 = vshrl.u32 %v2415, %v2431
        %v2434 = vor.u32 %v2432, %v2433
        %v2435 = vsub.s32 4294967266, %v2430
        %v2436 = vadd.s32 %v2435, 127
        %v2437 = vshll.u32 %v2436, 23
        %v2438 = vor.u32 4788187, %v2437
        %v2439 = vand.u32 2147483647, %v2438
        %v2441 = vcvt.s32.f32 %v2434
        %v2442 = vmul.f32 %v2441, %v2439
        %v2443 = vxor.u32 %v2442, 2147483648
        %v2444 = vsel %vm2361, %v2443, %v2442
        %v2445 = vsub.s32 4, %v2421
        %v2446 = vsel %vm2361, %v2445, %v2421
        %v2447 = vsel %vm2360, %v901, %v2444
        %v2448 = vsel %vm2360, 0, %v2446
        %v2449 = vcosq.f32.pop %v2447
        %v2450 = vsinq.f32.pop %v2447
        %vm2451 = vweird.f32 %v901
        %v2452 = vadd.s32 %v2448, 3
        %v2453 = vand.u32 %v2452, 3
        %vm2454 = vcmp.lt.s32.totalorder %v2453, 2
        %vm2455 = vcmp.eq.s32.totalorder %v2453, 0
        %v2456 = vxor.u32 %v2450, 2147483648
        %v2457 = vsel %vm2455, %v2449, %v2456
        %vm2458 = vcmp.eq.s32.totalorder %v2453, 2
        %v2459 = vxor.u32 %v2449, 2147483648
        %v2460 = vsel %vm2458, %v2459, %v2450
        %v2461 = vsel %vm2454, %v2457, %v2460
        %v2462 = vsel %vm2451, nan, %v2461
        %v2463 = vand.u32 2147483647, %v902
        %vm2464 = vcmp.le.f32.partialorder %v2463, 0.7853982
        %vm2465 = vcmp.lt.s32.totalorder %v902, 0
        %v2466 = vand.u32 %v902, 2139095040
        %v2467 = vshrl.u32 %v2466, 23
        %v2468 = vsub.s32 %v2467, 127
        %v2469 = vand.u32 2147483647, %v902
        %v2470 = vand.u32 %v2469, 8388607
        %v2471 = vor.u32 %v2470, 8388608
        %v2472 = vsub.s32 0, %v2471
        %v2473 = vadd.s32 %v2468, 1
        %vm2474 = vcmp.gt.s32.totalorder %v2473, 0
        %v2475 = vsel %vm2474, %v2473, 0
        %v2476 = vshrl.u32 %v2475, 5
        %v2477 = vand.u32 %v2475, 31
        %v2478 = vsub.s32 32, %v2477
        %v2479 = vshrl.u32 683565275, %v2478
        %v2480 = vshll.u32 683565275, %v2477
        %v2481 = vshrl.u32 2475754826, %v2478
        %v2482 = vor.u32 %v2480, %v2481
        %v2483 = vshll.u32 2475754826, %v2477
        %v2484 = vshrl.u32 2131351028, %v2478
        %v2485 = vor.u32 %v2483, %v2484
        %v2486 = vshll.u32 2131351028, %v2477
        %v2487 = vshrl.u32 2102212464, %v2478
        %v2488 = vor.u32 %v2486, %v2487
        %v2489 = vshll.u32 2102212464, %v2477
        %v2490 = vshrl.u32 920167782, %v2478
        %v2491 = vor.u32 %v2489, %v2490
        %v2492 = vshll.u32 920167782, %v2477
        %v2493 = vshrl.u32 1326507024, %v2478
        %v2494 = vor.u32 %v2492, %v2493
        %vm2495 = vcmp.lt.s32.totalorder %v2476, 1
        %vm2496 = vcmp.lt.s32.totalorder %v2476, 2
        %vm2497 = vcmp.lt.s32.totalorder %v2476, 3
        %vm2498 = vcmp.lt.s32.totalorder %v2476, 4
        %v2499 = vsel %vm2495, %v2479, %v2482
        %v2500 = vsel %vm2498, %v2488, 2102212464
        %v2501 = vsel %vm2497, %v2485, %v2500
        %v2502 = vsel %vm2496, %v2499, %v2501
        %v2503 = vsel %vm2495, %v2482, %v2485
        %v2504 = vsel %vm2498, %v2491, 920167782
        %v2505 = vsel %vm2497, %v2488, %v2504
        %v2506 = vsel %vm2496, %v2503, %v2505
        %v2507 = vsel %vm2495, %v2485, %v2488
        %v2508 = vsel %vm2498, %v2494, 1326507024
        %v2509 = vsel %vm2497, %v2491, %v2508
        %v2510 = vsel %vm2496, %v2507, %v2509
        %v2511 = vshll.u32 %v2471, 8
        %v2512 = vmul.u32.u64.compose %v2511, %v2510
        %v2513 = vextract.low.u32 %v2512
        %v2514 = vextract.high.u32 %v2512
        %v2515 = vmul.u32.u64.compose %v2511, %v2506
        %v2516 = vextract.low.u32 %v2515
        %v2517 = vextract.high.u32 %v2515
        %v2518 = vmul.u32 %v2511, %v2502
        %v2519 = vadd.s32 %v2514, %v2516
        %vm2520 = vc.u32 %v2514, %v2516
        %v2521 = vadd.s32 %v2517, 1
        %v2522 = vsel %vm2520, %v2521, %v2517
        %v2523 = vadd.s32 %v2518, %v2522
        %v2524 = vadd.s32 %v2523, 536870912
        %v2525 = vshrl.u32 %v2524, 30
        %v2526 = vshll.u32 %v2525, 30
        %v2527 = vsub.s32 %v2523, %v2526
        %vm2528 = vcmp.lt.s32.totalorder %v2527, 0
        %v2529 = vsub.s32 0, %v2527
        %v2530 = vsel %vm2528, %v2529, %v2527
        %v2531 = vclz %v2530
        %v2532 = vsub.s32 %v2531, 2
        %vm2533 = vcmp.gt.s32.totalorder 0, %v2532
        %v2534 = vsel %vm2533, 0, %v2532
        %v2535 = vsub.s32 32, %v2534
        %v2536 = vshll.u32 %v2527, %v2534
        %v2537 = vshrl.u32 %v2519, %v2535
        %v2538 = vor.u32 %v2536, %v2537
        %v2539 = vsub.s32 4294967266, %v2534
        %v2540 = vadd.s32 %v2539, 127
        %v2541 = vshll.u32 %v2540, 23
        %v2542 = vor.u32 4788187, %v2541
        %v2543 = vand.u32 2147483647, %v2542
        %v2545 = vcvt.s32.f32 %v2538
        %v2546 = vmul.f32 %v2545, %v2543
        %v2547 = vxor.u32 %v2546, 2147483648
        %v2548 = vsel %vm2465, %v2547, %v2546
        %v2549 = vsub.s32 4, %v2525
        %v2550 = vsel %vm2465, %v2549, %v2525
        %v2551 = vsel %vm2464, %v902, %v2548
        %v2552 = vsel %vm2464, 0, %v2550
        %v2553 = vcosq.f32.pop %v2551
        %v2554 = vsinq.f32.pop %v2551
        %vm2555 = vweird.f32 %v902
        %v2556 = vadd.s32 %v2552, 3
        %v2557 = vand.u32 %v2556, 3
        %vm2558 = vcmp.lt.s32.totalorder %v2557, 2
        %vm2559 = vcmp.eq.s32.totalorder %v2557, 0
        %v2560 = vxor.u32 %v2554, 2147483648
        %v2561 = vsel %vm2559, %v2553, %v2560
        %vm2562 = vcmp.eq.s32.totalorder %v2557, 2
        %v2563 = vxor.u32 %v2553, 2147483648
        %v2564 = vsel %vm2562, %v2563, %v2554
        %v2565 = vsel %vm2558, %v2561, %v2564
        %v2566 = vsel %vm2555, nan, %v2565
        %vm2567 = vcmp.lt.s32.totalorder %v863, 3
        %vm2568 = vcmp.lt.s32.totalorder %v864, 3
        %vm2569 = vcmp.lt.s32.totalorder %v865, 3
        %vm2570 = vcmp.lt.s32.totalorder %v866, 3
        %vm2571 = vcmp.lt.s32.totalorder %v863, 27
        %vm2572 = vcmp.lt.s32.totalorder %v864, 27
        %vm2573 = vcmp.lt.s32.totalorder %v865, 27
        %vm2574 = vcmp.lt.s32.totalorder %v866, 27
        %v2575 = vsel %vm2571, %v1006, 0.0
        %v2576 = vsel %vm2571, %v1110, 0.0
        %v2577 = vsel %vm2571, %v1214, 0.0
        %v2578 = vsel %vm2571, %v1318, 0.0
        %v2579 = vsel %vm2572, %v1422, 0.0
        %v2580 = vsel %vm2572, %v1526, 0.0
        %v2581 = vsel %vm2572, %v1630, 0.0
        %v2582 = vsel %vm2572, %v1734, 0.0
        %v2583 = vsel %vm2573, %v1838, 0.0
        %v2584 = vsel %vm2573, %v1942, 0.0
        %v2585 = vsel %vm2573, %v2046, 0.0
        %v2586 = vsel %vm2573, %v2150, 0.0
        %v2587 = vsel %vm2574, %v2254, 0.0
        %v2588 = vsel %vm2574, %v2358, 0.0
        %v2589 = vsel %vm2574, %v2462, 0.0
        %v2590 = vsel %vm2574, %v2566, 0.0
        %v2591 = vsel %vm2567, %v751, %v2575
        %v2592 = vsel %vm2567, %v753, %v2576
        %v2593 = vsel %vm2567, %v840, %v2577
        %v2594 = vsel %vm2567, %v842, %v2578
        %v2595 = vsel %vm2568, %v757, %v2579
        %v2596 = vsel %vm2568, %v759, %v2580
        %v2597 = vsel %vm2568, %v846, %v2581
        %v2598 = vsel %vm2568, %v848, %v2582
        %v2599 = vsel %vm2569, %v763, %v2583
        %v2600 = vsel %vm2569, %v765, %v2584
        %v2601 = vsel %vm2569, %v852, %v2585
        %v2602 = vsel %vm2569, %v854, %v2586
        %v2603 = vsel %vm2570, %v769, %v2587
        %v2604 = vsel %vm2570, %v771, %v2588
        %v2605 = vsel %vm2570, %v858, %v2589
        %v2606 = vsel %vm2570, %v860, %v2590
        %v2607 = vld [vmem:[%s2] sm:$0xff]
        %v2608 = vld [vmem:[%s2 + $0x8] sm:$0xff]
        %v2609 = vld [vmem:[%s2 + $0x10] sm:$0xff]
        %v2610 = vld [vmem:[%s2 + $0x18] sm:$0xff]
        %v2611 = vld [vmem:[%s3] sm:$0xff]
        %v2612 = vld [vmem:[%s3 + $0x8] sm:$0xff]
        %v2613 = vld [vmem:[%s3 + $0x10] sm:$0xff]
        %v2614 = vld [vmem:[%s3 + $0x18] sm:$0xff]
        %2616 = vset.pattern.permute.xlu0 0
        %2617 = vperm.xlu0 %2616, %v2611
        %v2618 = vpop.permute.xlu0 %2617
        %2621 = vset.pattern.permute.xlu0 0
        %2622 = vperm.xlu0 %2621, %v2612
        %v2623 = vpop.permute.xlu0 %2622
        %2626 = vset.pattern.permute.xlu0 0
        %2627 = vperm.xlu0 %2626, %v2613
        %v2628 = vpop.permute.xlu0 %2627
        %2631 = vset.pattern.permute.xlu0 0
        %2632 = vperm.xlu0 %2631, %v2614
        %v2633 = vpop.permute.xlu0 %2632
        %vm2635 = vcmask 261120
        %v2637 = vsel %vm2635, %v2607, 0
        %v2640 = vsel %vm2635, %v2608, 0
        %v2643 = vsel %vm2635, %v2609, 0
        %v2646 = vsel %vm2635, %v2610, 0
        %2648 = vmatprep.subr.mxu0 0.0
        %2649 = vmatpush1.msra.mxu0 0.0
        %2650 = vmatprep.subr.mxu0 0.0
        %2651 = vmatpush1.msra.mxu0 0.0
        %2652 = vmatprep.subr.mxu0 0.0
        %2653 = vmatpush1.msra.mxu0 0.0
        %2654 = vmatprep.subr.mxu0 0.0
        %2655 = vmatpush1.msra.mxu0 0.0
        %2656 = vmatprep.subr.mxu0 0.0
        %2657 = vmatpush1.msra.mxu0 0.0
        %2658 = vmatprep.subr.mxu0 0.0
        %2659 = vmatpush1.msra.mxu0 0.0
        %2660 = vmatprep.subr.mxu0 0.0
        %2661 = vmatpush1.msra.mxu0 0.0
        %2662 = vmatprep.subr.mxu0 0.0
        %2663 = vmatpush1.msra.mxu0 0.0
        %2664 = vmatprep.subr.mxu0 0.0
        %2665 = vmatpush1.msra.mxu0 0.0
        %2666 = vmatprep.subr.mxu0 0.0
        %2667 = vmatpush1.msra.mxu0 0.0
        %2668 = vmatprep.subr.mxu0 0.0
        %2669 = vmatpush1.msra.mxu0 0.0
        %2670 = vmatprep.subr.mxu0 0.0
        %2671 = vmatpush1.msra.mxu0 0.0
        %2672 = vmatprep.subr.mxu0 %v2604
        %2673 = vmatpush1.msra.mxu0 %v2603
        %2674 = vmatprep.subr.mxu0 %v2600
        %2675 = vmatpush1.msra.mxu0 %v2599
        %2676 = vmatprep.subr.mxu0 %v2596
        %2677 = vmatpush1.msra.mxu0 %v2595
        %2678 = vmatprep.subr.mxu0 %v2592
        %2679 = vmatpush1.msra.mxu0 %v2591
        %2680 = vmatprep.subr.mxu0 0.0
        %2681 = vmatpush2.msra.mxu0 0.0
        %2682 = vmatprep.subr.mxu0 0.0
        %2683 = vmatpush2.msra.mxu0 0.0
        %2684 = vmatprep.subr.mxu0 0.0
        %2685 = vmatpush2.msra.mxu0 0.0
        %2686 = vmatprep.subr.mxu0 0.0
        %2687 = vmatpush2.msra.mxu0 0.0
        %2688 = vmatprep.subr.mxu0 0.0
        %2689 = vmatpush2.msra.mxu0 0.0
        %2690 = vmatprep.subr.mxu0 0.0
        %2691 = vmatpush2.msra.mxu0 0.0
        %2692 = vmatprep.subr.mxu0 0.0
        %2693 = vmatpush2.msra.mxu0 0.0
        %2694 = vmatprep.subr.mxu0 0.0
        %2695 = vmatpush2.msra.mxu0 0.0
        %2696 = vmatprep.subr.mxu0 0.0
        %2697 = vmatpush2.msra.mxu0 0.0
        %2698 = vmatprep.subr.mxu0 0.0
        %2699 = vmatpush2.msra.mxu0 0.0
        %2700 = vmatprep.subr.mxu0 0.0
        %2701 = vmatpush2.msra.mxu0 0.0
        %2702 = vmatprep.subr.mxu0 0.0
        %2703 = vmatpush2.msra.mxu0 0.0
        %2704 = vmatprep.subr.mxu0 0.0
        %2705 = vmatpush2.msra.mxu0 0.0
        %2706 = vmatprep.subr.mxu0 0.0
        %2707 = vmatpush2.msra.mxu0 0.0
        %2708 = vmatprep.subr.mxu0 0.0
        %2709 = vmatpush2.msra.mxu0 0.0
        %2710 = vmatprep.subr.mxu0 0.0
        %2711 = vmatpush2.msra.mxu0 0.0
        %2712 = vmatprep.mubr.f32.mxu0 0.0
        %2713 = vmatmul.mubr.f32.gmra.mxu0 %v2637
        %v2714 = vpop.f32.mrf.mxu0
        %v2715 = vadd.f32 %v2618, %v2714
        %v2716 = vpop.f32.mrf.mxu0
        %v2717 = vadd.f32 %v2618, %v2716
        %2718 = vmatprep.mubr.f32.mxu0 0.0
        %2719 = vmatmul.mubr.f32.gmra.mxu0 %v2640
        %v2720 = vpop.f32.mrf.mxu0
        %v2721 = vadd.f32 %v2623, %v2720
        %v2722 = vpop.f32.mrf.mxu0
        %v2723 = vadd.f32 %v2623, %v2722
        %2724 = vmatprep.mubr.f32.mxu0 0.0
        %2725 = vmatmul.mubr.f32.gmra.mxu0 %v2643
        %v2726 = vpop.f32.mrf.mxu0
        %v2727 = vadd.f32 %v2628, %v2726
        %v2728 = vpop.f32.mrf.mxu0
        %v2729 = vadd.f32 %v2628, %v2728
        %2730 = vmatprep.mubr.f32.mxu0 0.0
        %2731 = vmatmul.mubr.f32.gmra.mxu0 %v2646
        %v2732 = vpop.f32.mrf.mxu0
        %v2733 = vadd.f32 %v2633, %v2732
        %v2734 = vpop.f32.mrf.mxu0
        %v2735 = vadd.f32 %v2633, %v2734
        %2736 = vdwg.mxu0
        %2737 = vmatprep.subr.mxu0 0.0
        %2738 = vmatpush1.msra.mxu0 0.0
        %2739 = vmatprep.subr.mxu0 0.0
        %2740 = vmatpush1.msra.mxu0 0.0
        %2741 = vmatprep.subr.mxu0 0.0
        %2742 = vmatpush1.msra.mxu0 0.0
        %2743 = vmatprep.subr.mxu0 0.0
        %2744 = vmatpush1.msra.mxu0 0.0
        %2745 = vmatprep.subr.mxu0 0.0
        %2746 = vmatpush1.msra.mxu0 0.0
        %2747 = vmatprep.subr.mxu0 0.0
        %2748 = vmatpush1.msra.mxu0 0.0
        %2749 = vmatprep.subr.mxu0 0.0
        %2750 = vmatpush1.msra.mxu0 0.0
        %2751 = vmatprep.subr.mxu0 0.0
        %2752 = vmatpush1.msra.mxu0 0.0
        %2753 = vmatprep.subr.mxu0 0.0
        %2754 = vmatpush1.msra.mxu0 0.0
        %2755 = vmatprep.subr.mxu0 0.0
        %2756 = vmatpush1.msra.mxu0 0.0
        %2757 = vmatprep.subr.mxu0 0.0
        %2758 = vmatpush1.msra.mxu0 0.0
        %2759 = vmatprep.subr.mxu0 0.0
        %2760 = vmatpush1.msra.mxu0 0.0
        %2761 = vmatprep.subr.mxu0 %v2606
        %2762 = vmatpush1.msra.mxu0 %v2605
        %2763 = vmatprep.subr.mxu0 %v2602
        %2764 = vmatpush1.msra.mxu0 %v2601
        %2765 = vmatprep.subr.mxu0 %v2598
        %2766 = vmatpush1.msra.mxu0 %v2597
        %2767 = vmatprep.subr.mxu0 %v2594
        %2768 = vmatpush1.msra.mxu0 %v2593
        %2769 = vmatprep.subr.mxu0 0.0
        %2770 = vmatpush2.msra.mxu0 0.0
        %2771 = vmatprep.subr.mxu0 0.0
        %2772 = vmatpush2.msra.mxu0 0.0
        %2773 = vmatprep.subr.mxu0 0.0
        %2774 = vmatpush2.msra.mxu0 0.0
        %2775 = vmatprep.subr.mxu0 0.0
        %2776 = vmatpush2.msra.mxu0 0.0
        %2777 = vmatprep.subr.mxu0 0.0
        %2778 = vmatpush2.msra.mxu0 0.0
        %2779 = vmatprep.subr.mxu0 0.0
        %2780 = vmatpush2.msra.mxu0 0.0
        %2781 = vmatprep.subr.mxu0 0.0
        %2782 = vmatpush2.msra.mxu0 0.0
        %2783 = vmatprep.subr.mxu0 0.0
        %2784 = vmatpush2.msra.mxu0 0.0
        %2785 = vmatprep.subr.mxu0 0.0
        %2786 = vmatpush2.msra.mxu0 0.0
        %2787 = vmatprep.subr.mxu0 0.0
        %2788 = vmatpush2.msra.mxu0 0.0
        %2789 = vmatprep.subr.mxu0 0.0
        %2790 = vmatpush2.msra.mxu0 0.0
        %2791 = vmatprep.subr.mxu0 0.0
        %2792 = vmatpush2.msra.mxu0 0.0
        %2793 = vmatprep.subr.mxu0 0.0
        %2794 = vmatpush2.msra.mxu0 0.0
        %2795 = vmatprep.subr.mxu0 0.0
        %2796 = vmatpush2.msra.mxu0 0.0
        %2797 = vmatprep.subr.mxu0 0.0
        %2798 = vmatpush2.msra.mxu0 0.0
        %2799 = vmatprep.subr.mxu0 0.0
        %2800 = vmatpush2.msra.mxu0 0.0
        %2801 = vmatprep.mubr.f32.mxu0 0.0
        %2802 = vmatmul.mubr.f32.gmra.mxu0 %v2637
        %v2803 = vpop.f32.mrf.mxu0
        %v2804 = vadd.f32 %v2618, %v2803
        %v2805 = vpop.f32.mrf.mxu0
        %v2806 = vadd.f32 %v2618, %v2805
        %2807 = vmatprep.mubr.f32.mxu0 0.0
        %2808 = vmatmul.mubr.f32.gmra.mxu0 %v2640
        %v2809 = vpop.f32.mrf.mxu0
        %v2810 = vadd.f32 %v2623, %v2809
        %v2811 = vpop.f32.mrf.mxu0
        %v2812 = vadd.f32 %v2623, %v2811
        %2813 = vmatprep.mubr.f32.mxu0 0.0
        %2814 = vmatmul.mubr.f32.gmra.mxu0 %v2643
        %v2815 = vpop.f32.mrf.mxu0
        %v2816 = vadd.f32 %v2628, %v2815
        %v2817 = vpop.f32.mrf.mxu0
        %v2818 = vadd.f32 %v2628, %v2817
        %2819 = vmatprep.mubr.f32.mxu0 0.0
        %2820 = vmatmul.mubr.f32.gmra.mxu0 %v2646
        %v2821 = vpop.f32.mrf.mxu0
        %v2822 = vadd.f32 %v2633, %v2821
        %v2823 = vpop.f32.mrf.mxu0
        %v2824 = vadd.f32 %v2633, %v2823
        %2825 = vdwg.mxu0
        %vm2826 = vcmp.ge.f32.partialorder %v2715, 0.0
        %vm2827 = vcmp.ge.f32.partialorder %v2717, 0.0
        %vm2828 = vcmp.ge.f32.partialorder %v2804, 0.0
        %vm2829 = vcmp.ge.f32.partialorder %v2806, 0.0
        %vm2830 = vcmp.ge.f32.partialorder %v2721, 0.0
        %vm2831 = vcmp.ge.f32.partialorder %v2723, 0.0
        %vm2832 = vcmp.ge.f32.partialorder %v2810, 0.0
        %vm2833 = vcmp.ge.f32.partialorder %v2812, 0.0
        %vm2834 = vcmp.ge.f32.partialorder %v2727, 0.0
        %vm2835 = vcmp.ge.f32.partialorder %v2729, 0.0
        %vm2836 = vcmp.ge.f32.partialorder %v2816, 0.0
        %vm2837 = vcmp.ge.f32.partialorder %v2818, 0.0
        %vm2838 = vcmp.ge.f32.partialorder %v2733, 0.0
        %vm2839 = vcmp.ge.f32.partialorder %v2735, 0.0
        %vm2840 = vcmp.ge.f32.partialorder %v2822, 0.0
        %vm2841 = vcmp.ge.f32.partialorder %v2824, 0.0
        %v2842 = vmul.f32 %v2715, 0.01
        %v2843 = vmul.f32 %v2717, 0.01
        %v2844 = vmul.f32 %v2804, 0.01
        %v2845 = vmul.f32 %v2806, 0.01
        %v2846 = vmul.f32 %v2721, 0.01
        %v2847 = vmul.f32 %v2723, 0.01
        %v2848 = vmul.f32 %v2810, 0.01
        %v2849 = vmul.f32 %v2812, 0.01
        %v2850 = vmul.f32 %v2727, 0.01
        %v2851 = vmul.f32 %v2729, 0.01
        %v2852 = vmul.f32 %v2816, 0.01
        %v2853 = vmul.f32 %v2818, 0.01
        %v2854 = vmul.f32 %v2733, 0.01
        %v2855 = vmul.f32 %v2735, 0.01
        %v2856 = vmul.f32 %v2822, 0.01
        %v2857 = vmul.f32 %v2824, 0.01
        %v2858 = vsel %vm2826, %v2715, %v2842
        %v2859 = vsel %vm2827, %v2717, %v2843
        %v2860 = vsel %vm2828, %v2804, %v2844
        %v2861 = vsel %vm2829, %v2806, %v2845
        %v2862 = vsel %vm2830, %v2721, %v2846
        %v2863 = vsel %vm2831, %v2723, %v2847
        %v2864 = vsel %vm2832, %v2810, %v2848
        %v2865 = vsel %vm2833, %v2812, %v2849
        %v2866 = vsel %vm2834, %v2727, %v2850
        %v2867 = vsel %vm2835, %v2729, %v2851
        %v2868 = vsel %vm2836, %v2816, %v2852
        %v2869 = vsel %vm2837, %v2818, %v2853
        %v2870 = vsel %vm2838, %v2733, %v2854
        %v2871 = vsel %vm2839, %v2735, %v2855
        %v2872 = vsel %vm2840, %v2822, %v2856
        %v2873 = vsel %vm2841, %v2824, %v2857
        %v2874 = vld [vmem:[%s4] sm:$0xff]
        %v2875 = vld [vmem:[%s4 + $0x8] sm:$0xff]
        %v2876 = vld [vmem:[%s4 + $0x10] sm:$0xff]
        %v2877 = vld [vmem:[%s4 + $0x18] sm:$0xff]
        %v2878 = vld [vmem:[%s5] sm:$0xff]
        %v2879 = vld [vmem:[%s5 + $0x8] sm:$0xff]
        %v2880 = vld [vmem:[%s5 + $0x10] sm:$0xff]
        %v2881 = vld [vmem:[%s5 + $0x18] sm:$0xff]
        %2883 = vset.pattern.permute.xlu0 0
        %2884 = vperm.xlu0 %2883, %v2878
        %v2885 = vpop.permute.xlu0 %2884
        %2888 = vset.pattern.permute.xlu0 0
        %2889 = vperm.xlu0 %2888, %v2879
        %v2890 = vpop.permute.xlu0 %2889
        %2893 = vset.pattern.permute.xlu0 0
        %2894 = vperm.xlu0 %2893, %v2880
        %v2895 = vpop.permute.xlu0 %2894
        %2898 = vset.pattern.permute.xlu0 0
        %2899 = vperm.xlu0 %2898, %v2881
        %v2900 = vpop.permute.xlu0 %2899
        %v2903 = vsel %vm2635, %v2874, 0
        %v2906 = vsel %vm2635, %v2875, 0
        %v2909 = vsel %vm2635, %v2876, 0
        %v2912 = vsel %vm2635, %v2877, 0
        %2914 = vmatprep.subr.mxu0 0.0
        %2915 = vmatpush1.msra.mxu0 0.0
        %2916 = vmatprep.subr.mxu0 0.0
        %2917 = vmatpush1.msra.mxu0 0.0
        %2918 = vmatprep.subr.mxu0 0.0
        %2919 = vmatpush1.msra.mxu0 0.0
        %2920 = vmatprep.subr.mxu0 0.0
        %2921 = vmatpush1.msra.mxu0 0.0
        %2922 = vmatprep.subr.mxu0 0.0
        %2923 = vmatpush1.msra.mxu0 0.0
        %2924 = vmatprep.subr.mxu0 0.0
        %2925 = vmatpush1.msra.mxu0 0.0
        %2926 = vmatprep.subr.mxu0 0.0
        %2927 = vmatpush1.msra.mxu0 0.0
        %2928 = vmatprep.subr.mxu0 0.0
        %2929 = vmatpush1.msra.mxu0 0.0
        %2930 = vmatprep.subr.mxu0 0.0
        %2931 = vmatpush1.msra.mxu0 0.0
        %2932 = vmatprep.subr.mxu0 0.0
        %2933 = vmatpush1.msra.mxu0 0.0
        %2934 = vmatprep.subr.mxu0 0.0
        %2935 = vmatpush1.msra.mxu0 0.0
        %2936 = vmatprep.subr.mxu0 0.0
        %2937 = vmatpush1.msra.mxu0 0.0
        %2938 = vmatprep.subr.mxu0 %v2871
        %2939 = vmatpush1.msra.mxu0 %v2870
        %2940 = vmatprep.subr.mxu0 %v2867
        %2941 = vmatpush1.msra.mxu0 %v2866
        %2942 = vmatprep.subr.mxu0 %v2863
        %2943 = vmatpush1.msra.mxu0 %v2862
        %2944 = vmatprep.subr.mxu0 %v2859
        %2945 = vmatpush1.msra.mxu0 %v2858
        %2946 = vmatprep.subr.mxu0 0.0
        %2947 = vmatpush2.msra.mxu0 0.0
        %2948 = vmatprep.subr.mxu0 0.0
        %2949 = vmatpush2.msra.mxu0 0.0
        %2950 = vmatprep.subr.mxu0 0.0
        %2951 = vmatpush2.msra.mxu0 0.0
        %2952 = vmatprep.subr.mxu0 0.0
        %2953 = vmatpush2.msra.mxu0 0.0
        %2954 = vmatprep.subr.mxu0 0.0
        %2955 = vmatpush2.msra.mxu0 0.0
        %2956 = vmatprep.subr.mxu0 0.0
        %2957 = vmatpush2.msra.mxu0 0.0
        %2958 = vmatprep.subr.mxu0 0.0
        %2959 = vmatpush2.msra.mxu0 0.0
        %2960 = vmatprep.subr.mxu0 0.0
        %2961 = vmatpush2.msra.mxu0 0.0
        %2962 = vmatprep.subr.mxu0 0.0
        %2963 = vmatpush2.msra.mxu0 0.0
        %2964 = vmatprep.subr.mxu0 0.0
        %2965 = vmatpush2.msra.mxu0 0.0
        %2966 = vmatprep.subr.mxu0 0.0
        %2967 = vmatpush2.msra.mxu0 0.0
        %2968 = vmatprep.subr.mxu0 0.0
        %2969 = vmatpush2.msra.mxu0 0.0
        %2970 = vmatprep.subr.mxu0 0.0
        %2971 = vmatpush2.msra.mxu0 0.0
        %2972 = vmatprep.subr.mxu0 0.0
        %2973 = vmatpush2.msra.mxu0 0.0
        %2974 = vmatprep.subr.mxu0 0.0
        %2975 = vmatpush2.msra.mxu0 0.0
        %2976 = vmatprep.subr.mxu0 0.0
        %2977 = vmatpush2.msra.mxu0 0.0
        %2978 = vmatprep.mubr.f32.mxu0 0.0
        %2979 = vmatmul.mubr.f32.gmra.mxu0 %v2903
        %v2980 = vpop.f32.mrf.mxu0
        %v2981 = vadd.f32 %v2885, %v2980
        %v2982 = vpop.f32.mrf.mxu0
        %v2983 = vadd.f32 %v2885, %v2982
        %2984 = vmatprep.mubr.f32.mxu0 0.0
        %2985 = vmatmul.mubr.f32.gmra.mxu0 %v2906
        %v2986 = vpop.f32.mrf.mxu0
        %v2987 = vadd.f32 %v2890, %v2986
        %v2988 = vpop.f32.mrf.mxu0
        %v2989 = vadd.f32 %v2890, %v2988
        %2990 = vmatprep.mubr.f32.mxu0 0.0
        %2991 = vmatmul.mubr.f32.gmra.mxu0 %v2909
        %v2992 = vpop.f32.mrf.mxu0
        %v2993 = vadd.f32 %v2895, %v2992
        %v2994 = vpop.f32.mrf.mxu0
        %v2995 = vadd.f32 %v2895, %v2994
        %2996 = vmatprep.mubr.f32.mxu0 0.0
        %2997 = vmatmul.mubr.f32.gmra.mxu0 %v2912
        %v2998 = vpop.f32.mrf.mxu0
        %v2999 = vadd.f32 %v2900, %v2998
        %v3000 = vpop.f32.mrf.mxu0
        %v3001 = vadd.f32 %v2900, %v3000
        %3002 = vdwg.mxu0
        %3003 = vmatprep.subr.mxu0 0.0
        %3004 = vmatpush1.msra.mxu0 0.0
        %3005 = vmatprep.subr.mxu0 0.0
        %3006 = vmatpush1.msra.mxu0 0.0
        %3007 = vmatprep.subr.mxu0 0.0
        %3008 = vmatpush1.msra.mxu0 0.0
        %3009 = vmatprep.subr.mxu0 0.0
        %3010 = vmatpush1.msra.mxu0 0.0
        %3011 = vmatprep.subr.mxu0 0.0
        %3012 = vmatpush1.msra.mxu0 0.0
        %3013 = vmatprep.subr.mxu0 0.0
        %3014 = vmatpush1.msra.mxu0 0.0
        %3015 = vmatprep.subr.mxu0 0.0
        %3016 = vmatpush1.msra.mxu0 0.0
        %3017 = vmatprep.subr.mxu0 0.0
        %3018 = vmatpush1.msra.mxu0 0.0
        %3019 = vmatprep.subr.mxu0 0.0
        %3020 = vmatpush1.msra.mxu0 0.0
        %3021 = vmatprep.subr.mxu0 0.0
        %3022 = vmatpush1.msra.mxu0 0.0
        %3023 = vmatprep.subr.mxu0 0.0
        %3024 = vmatpush1.msra.mxu0 0.0
        %3025 = vmatprep.subr.mxu0 0.0
        %3026 = vmatpush1.msra.mxu0 0.0
        %3027 = vmatprep.subr.mxu0 %v2873
        %3028 = vmatpush1.msra.mxu0 %v2872
        %3029 = vmatprep.subr.mxu0 %v2869
        %3030 = vmatpush1.msra.mxu0 %v2868
        %3031 = vmatprep.subr.mxu0 %v2865
        %3032 = vmatpush1.msra.mxu0 %v2864
        %3033 = vmatprep.subr.mxu0 %v2861
        %3034 = vmatpush1.msra.mxu0 %v2860
        %3035 = vmatprep.subr.mxu0 0.0
        %3036 = vmatpush2.msra.mxu0 0.0
        %3037 = vmatprep.subr.mxu0 0.0
        %3038 = vmatpush2.msra.mxu0 0.0
        %3039 = vmatprep.subr.mxu0 0.0
        %3040 = vmatpush2.msra.mxu0 0.0
        %3041 = vmatprep.subr.mxu0 0.0
        %3042 = vmatpush2.msra.mxu0 0.0
        %3043 = vmatprep.subr.mxu0 0.0
        %3044 = vmatpush2.msra.mxu0 0.0
        %3045 = vmatprep.subr.mxu0 0.0
        %3046 = vmatpush2.msra.mxu0 0.0
        %3047 = vmatprep.subr.mxu0 0.0
        %3048 = vmatpush2.msra.mxu0 0.0
        %3049 = vmatprep.subr.mxu0 0.0
        %3050 = vmatpush2.msra.mxu0 0.0
        %3051 = vmatprep.subr.mxu0 0.0
        %3052 = vmatpush2.msra.mxu0 0.0
        %3053 = vmatprep.subr.mxu0 0.0
        %3054 = vmatpush2.msra.mxu0 0.0
        %3055 = vmatprep.subr.mxu0 0.0
        %3056 = vmatpush2.msra.mxu0 0.0
        %3057 = vmatprep.subr.mxu0 0.0
        %3058 = vmatpush2.msra.mxu0 0.0
        %3059 = vmatprep.subr.mxu0 0.0
        %3060 = vmatpush2.msra.mxu0 0.0
        %3061 = vmatprep.subr.mxu0 0.0
        %3062 = vmatpush2.msra.mxu0 0.0
        %3063 = vmatprep.subr.mxu0 0.0
        %3064 = vmatpush2.msra.mxu0 0.0
        %3065 = vmatprep.subr.mxu0 0.0
        %3066 = vmatpush2.msra.mxu0 0.0
        %3067 = vmatprep.mubr.f32.mxu0 0.0
        %3068 = vmatmul.mubr.f32.gmra.mxu0 %v2903
        %v3069 = vpop.f32.mrf.mxu0
        %v3070 = vadd.f32 %v2885, %v3069
        %v3071 = vpop.f32.mrf.mxu0
        %v3072 = vadd.f32 %v2885, %v3071
        %3073 = vmatprep.mubr.f32.mxu0 0.0
        %3074 = vmatmul.mubr.f32.gmra.mxu0 %v2906
        %v3075 = vpop.f32.mrf.mxu0
        %v3076 = vadd.f32 %v2890, %v3075
        %v3077 = vpop.f32.mrf.mxu0
        %v3078 = vadd.f32 %v2890, %v3077
        %3079 = vmatprep.mubr.f32.mxu0 0.0
        %3080 = vmatmul.mubr.f32.gmra.mxu0 %v2909
        %v3081 = vpop.f32.mrf.mxu0
        %v3082 = vadd.f32 %v2895, %v3081
        %v3083 = vpop.f32.mrf.mxu0
        %v3084 = vadd.f32 %v2895, %v3083
        %3085 = vmatprep.mubr.f32.mxu0 0.0
        %3086 = vmatmul.mubr.f32.gmra.mxu0 %v2912
        %v3087 = vpop.f32.mrf.mxu0
        %v3088 = vadd.f32 %v2900, %v3087
        %v3089 = vpop.f32.mrf.mxu0
        %v3090 = vadd.f32 %v2900, %v3089
        %3091 = vdwg.mxu0
        %vm3092 = vcmp.ge.f32.partialorder %v2981, 0.0
        %vm3093 = vcmp.ge.f32.partialorder %v2983, 0.0
        %vm3094 = vcmp.ge.f32.partialorder %v3070, 0.0
        %vm3095 = vcmp.ge.f32.partialorder %v3072, 0.0
        %vm3096 = vcmp.ge.f32.partialorder %v2987, 0.0
        %vm3097 = vcmp.ge.f32.partialorder %v2989, 0.0
        %vm3098 = vcmp.ge.f32.partialorder %v3076, 0.0
        %vm3099 = vcmp.ge.f32.partialorder %v3078, 0.0
        %vm3100 = vcmp.ge.f32.partialorder %v2993, 0.0
        %vm3101 = vcmp.ge.f32.partialorder %v2995, 0.0
        %vm3102 = vcmp.ge.f32.partialorder %v3082, 0.0
        %vm3103 = vcmp.ge.f32.partialorder %v3084, 0.0
        %vm3104 = vcmp.ge.f32.partialorder %v2999, 0.0
        %vm3105 = vcmp.ge.f32.partialorder %v3001, 0.0
        %vm3106 = vcmp.ge.f32.partialorder %v3088, 0.0
        %vm3107 = vcmp.ge.f32.partialorder %v3090, 0.0
        %v3108 = vmul.f32 %v2981, 0.01
        %v3109 = vmul.f32 %v2983, 0.01
        %v3110 = vmul.f32 %v3070, 0.01
        %v3111 = vmul.f32 %v3072, 0.01
        %v3112 = vmul.f32 %v2987, 0.01
        %v3113 = vmul.f32 %v2989, 0.01
        %v3114 = vmul.f32 %v3076, 0.01
        %v3115 = vmul.f32 %v3078, 0.01
        %v3116 = vmul.f32 %v2993, 0.01
        %v3117 = vmul.f32 %v2995, 0.01
        %v3118 = vmul.f32 %v3082, 0.01
        %v3119 = vmul.f32 %v3084, 0.01
        %v3120 = vmul.f32 %v2999, 0.01
        %v3121 = vmul.f32 %v3001, 0.01
        %v3122 = vmul.f32 %v3088, 0.01
        %v3123 = vmul.f32 %v3090, 0.01
        %v3124 = vsel %vm3092, %v2981, %v3108
        %v3125 = vsel %vm3093, %v2983, %v3109
        %v3126 = vsel %vm3094, %v3070, %v3110
        %v3127 = vsel %vm3095, %v3072, %v3111
        %v3128 = vsel %vm3096, %v2987, %v3112
        %v3129 = vsel %vm3097, %v2989, %v3113
        %v3130 = vsel %vm3098, %v3076, %v3114
        %v3131 = vsel %vm3099, %v3078, %v3115
        %v3132 = vsel %vm3100, %v2993, %v3116
        %v3133 = vsel %vm3101, %v2995, %v3117
        %v3134 = vsel %vm3102, %v3082, %v3118
        %v3135 = vsel %vm3103, %v3084, %v3119
        %v3136 = vsel %vm3104, %v2999, %v3120
        %v3137 = vsel %vm3105, %v3001, %v3121
        %v3138 = vsel %vm3106, %v3088, %v3122
        %v3139 = vsel %vm3107, %v3090, %v3123
        %v3140 = vld [vmem:[%s6] sm:$0xff]
        %v3141 = vld [vmem:[%s6 + $0x8] sm:$0xff]
        %v3142 = vld [vmem:[%s6 + $0x10] sm:$0xff]
        %v3143 = vld [vmem:[%s6 + $0x18] sm:$0xff]
        %v3144 = vld [vmem:[%s7] sm:$0xff]
        %v3145 = vld [vmem:[%s7 + $0x8] sm:$0xff]
        %v3146 = vld [vmem:[%s7 + $0x10] sm:$0xff]
        %v3147 = vld [vmem:[%s7 + $0x18] sm:$0xff]
        %3149 = vset.pattern.permute.xlu0 0
        %3150 = vperm.xlu0 %3149, %v3144
        %v3151 = vpop.permute.xlu0 %3150
        %3154 = vset.pattern.permute.xlu0 0
        %3155 = vperm.xlu0 %3154, %v3145
        %v3156 = vpop.permute.xlu0 %3155
        %3159 = vset.pattern.permute.xlu0 0
        %3160 = vperm.xlu0 %3159, %v3146
        %v3161 = vpop.permute.xlu0 %3160
        %3164 = vset.pattern.permute.xlu0 0
        %3165 = vperm.xlu0 %3164, %v3147
        %v3166 = vpop.permute.xlu0 %3165
        %v3169 = vsel %vm2635, %v3140, 0
        %v3172 = vsel %vm2635, %v3141, 0
        %v3175 = vsel %vm2635, %v3142, 0
        %v3178 = vsel %vm2635, %v3143, 0
        %3180 = vmatprep.subr.mxu0 0.0
        %3181 = vmatpush1.msra.mxu0 0.0
        %3182 = vmatprep.subr.mxu0 0.0
        %3183 = vmatpush1.msra.mxu0 0.0
        %3184 = vmatprep.subr.mxu0 0.0
        %3185 = vmatpush1.msra.mxu0 0.0
        %3186 = vmatprep.subr.mxu0 0.0
        %3187 = vmatpush1.msra.mxu0 0.0
        %3188 = vmatprep.subr.mxu0 0.0
        %3189 = vmatpush1.msra.mxu0 0.0
        %3190 = vmatprep.subr.mxu0 0.0
        %3191 = vmatpush1.msra.mxu0 0.0
        %3192 = vmatprep.subr.mxu0 0.0
        %3193 = vmatpush1.msra.mxu0 0.0
        %3194 = vmatprep.subr.mxu0 0.0
        %3195 = vmatpush1.msra.mxu0 0.0
        %3196 = vmatprep.subr.mxu0 0.0
        %3197 = vmatpush1.msra.mxu0 0.0
        %3198 = vmatprep.subr.mxu0 0.0
        %3199 = vmatpush1.msra.mxu0 0.0
        %3200 = vmatprep.subr.mxu0 0.0
        %3201 = vmatpush1.msra.mxu0 0.0
        %3202 = vmatprep.subr.mxu0 0.0
        %3203 = vmatpush1.msra.mxu0 0.0
        %3204 = vmatprep.subr.mxu0 %v3137
        %3205 = vmatpush1.msra.mxu0 %v3136
        %3206 = vmatprep.subr.mxu0 %v3133
        %3207 = vmatpush1.msra.mxu0 %v3132
        %3208 = vmatprep.subr.mxu0 %v3129
        %3209 = vmatpush1.msra.mxu0 %v3128
        %3210 = vmatprep.subr.mxu0 %v3125
        %3211 = vmatpush1.msra.mxu0 %v3124
        %3212 = vmatprep.subr.mxu0 0.0
        %3213 = vmatpush2.msra.mxu0 0.0
        %3214 = vmatprep.subr.mxu0 0.0
        %3215 = vmatpush2.msra.mxu0 0.0
        %3216 = vmatprep.subr.mxu0 0.0
        %3217 = vmatpush2.msra.mxu0 0.0
        %3218 = vmatprep.subr.mxu0 0.0
        %3219 = vmatpush2.msra.mxu0 0.0
        %3220 = vmatprep.subr.mxu0 0.0
        %3221 = vmatpush2.msra.mxu0 0.0
        %3222 = vmatprep.subr.mxu0 0.0
        %3223 = vmatpush2.msra.mxu0 0.0
        %3224 = vmatprep.subr.mxu0 0.0
        %3225 = vmatpush2.msra.mxu0 0.0
        %3226 = vmatprep.subr.mxu0 0.0
        %3227 = vmatpush2.msra.mxu0 0.0
        %3228 = vmatprep.subr.mxu0 0.0
        %3229 = vmatpush2.msra.mxu0 0.0
        %3230 = vmatprep.subr.mxu0 0.0
        %3231 = vmatpush2.msra.mxu0 0.0
        %3232 = vmatprep.subr.mxu0 0.0
        %3233 = vmatpush2.msra.mxu0 0.0
        %3234 = vmatprep.subr.mxu0 0.0
        %3235 = vmatpush2.msra.mxu0 0.0
        %3236 = vmatprep.subr.mxu0 0.0
        %3237 = vmatpush2.msra.mxu0 0.0
        %3238 = vmatprep.subr.mxu0 0.0
        %3239 = vmatpush2.msra.mxu0 0.0
        %3240 = vmatprep.subr.mxu0 0.0
        %3241 = vmatpush2.msra.mxu0 0.0
        %3242 = vmatprep.subr.mxu0 0.0
        %3243 = vmatpush2.msra.mxu0 0.0
        %3244 = vmatprep.mubr.f32.mxu0 0.0
        %3245 = vmatmul.mubr.f32.gmra.mxu0 %v3169
        %v3246 = vpop.f32.mrf.mxu0
        %v3247 = vadd.f32 %v3151, %v3246
        %v3248 = vpop.f32.mrf.mxu0
        %v3249 = vadd.f32 %v3151, %v3248
        %3250 = vmatprep.mubr.f32.mxu0 0.0
        %3251 = vmatmul.mubr.f32.gmra.mxu0 %v3172
        %v3252 = vpop.f32.mrf.mxu0
        %v3253 = vadd.f32 %v3156, %v3252
        %v3254 = vpop.f32.mrf.mxu0
        %v3255 = vadd.f32 %v3156, %v3254
        %3256 = vmatprep.mubr.f32.mxu0 0.0
        %3257 = vmatmul.mubr.f32.gmra.mxu0 %v3175
        %v3258 = vpop.f32.mrf.mxu0
        %v3259 = vadd.f32 %v3161, %v3258
        %v3260 = vpop.f32.mrf.mxu0
        %v3261 = vadd.f32 %v3161, %v3260
        %3262 = vmatprep.mubr.f32.mxu0 0.0
        %3263 = vmatmul.mubr.f32.gmra.mxu0 %v3178
        %v3264 = vpop.f32.mrf.mxu0
        %v3265 = vadd.f32 %v3166, %v3264
        %v3266 = vpop.f32.mrf.mxu0
        %v3267 = vadd.f32 %v3166, %v3266
        %3268 = vdwg.mxu0
        %3269 = vmatprep.subr.mxu0 0.0
        %3270 = vmatpush1.msra.mxu0 0.0
        %3271 = vmatprep.subr.mxu0 0.0
        %3272 = vmatpush1.msra.mxu0 0.0
        %3273 = vmatprep.subr.mxu0 0.0
        %3274 = vmatpush1.msra.mxu0 0.0
        %3275 = vmatprep.subr.mxu0 0.0
        %3276 = vmatpush1.msra.mxu0 0.0
        %3277 = vmatprep.subr.mxu0 0.0
        %3278 = vmatpush1.msra.mxu0 0.0
        %3279 = vmatprep.subr.mxu0 0.0
        %3280 = vmatpush1.msra.mxu0 0.0
        %3281 = vmatprep.subr.mxu0 0.0
        %3282 = vmatpush1.msra.mxu0 0.0
        %3283 = vmatprep.subr.mxu0 0.0
        %3284 = vmatpush1.msra.mxu0 0.0
        %3285 = vmatprep.subr.mxu0 0.0
        %3286 = vmatpush1.msra.mxu0 0.0
        %3287 = vmatprep.subr.mxu0 0.0
        %3288 = vmatpush1.msra.mxu0 0.0
        %3289 = vmatprep.subr.mxu0 0.0
        %3290 = vmatpush1.msra.mxu0 0.0
        %3291 = vmatprep.subr.mxu0 0.0
        %3292 = vmatpush1.msra.mxu0 0.0
        %3293 = vmatprep.subr.mxu0 %v3139
        %3294 = vmatpush1.msra.mxu0 %v3138
        %3295 = vmatprep.subr.mxu0 %v3135
        %3296 = vmatpush1.msra.mxu0 %v3134
        %3297 = vmatprep.subr.mxu0 %v3131
        %3298 = vmatpush1.msra.mxu0 %v3130
        %3299 = vmatprep.subr.mxu0 %v3127
        %3300 = vmatpush1.msra.mxu0 %v3126
        %3301 = vmatprep.subr.mxu0 0.0
        %3302 = vmatpush2.msra.mxu0 0.0
        %3303 = vmatprep.subr.mxu0 0.0
        %3304 = vmatpush2.msra.mxu0 0.0
        %3305 = vmatprep.subr.mxu0 0.0
        %3306 = vmatpush2.msra.mxu0 0.0
        %3307 = vmatprep.subr.mxu0 0.0
        %3308 = vmatpush2.msra.mxu0 0.0
        %3309 = vmatprep.subr.mxu0 0.0
        %3310 = vmatpush2.msra.mxu0 0.0
        %3311 = vmatprep.subr.mxu0 0.0
        %3312 = vmatpush2.msra.mxu0 0.0
        %3313 = vmatprep.subr.mxu0 0.0
        %3314 = vmatpush2.msra.mxu0 0.0
        %3315 = vmatprep.subr.mxu0 0.0
        %3316 = vmatpush2.msra.mxu0 0.0
        %3317 = vmatprep.subr.mxu0 0.0
        %3318 = vmatpush2.msra.mxu0 0.0
        %3319 = vmatprep.subr.mxu0 0.0
        %3320 = vmatpush2.msra.mxu0 0.0
        %3321 = vmatprep.subr.mxu0 0.0
        %3322 = vmatpush2.msra.mxu0 0.0
        %3323 = vmatprep.subr.mxu0 0.0
        %3324 = vmatpush2.msra.mxu0 0.0
        %3325 = vmatprep.subr.mxu0 0.0
        %3326 = vmatpush2.msra.mxu0 0.0
        %3327 = vmatprep.subr.mxu0 0.0
        %3328 = vmatpush2.msra.mxu0 0.0
        %3329 = vmatprep.subr.mxu0 0.0
        %3330 = vmatpush2.msra.mxu0 0.0
        %3331 = vmatprep.subr.mxu0 0.0
        %3332 = vmatpush2.msra.mxu0 0.0
        %3333 = vmatprep.mubr.f32.mxu0 0.0
        %3334 = vmatmul.mubr.f32.gmra.mxu0 %v3169
        %v3335 = vpop.f32.mrf.mxu0
        %v3336 = vadd.f32 %v3151, %v3335
        %v3337 = vpop.f32.mrf.mxu0
        %v3338 = vadd.f32 %v3151, %v3337
        %3339 = vmatprep.mubr.f32.mxu0 0.0
        %3340 = vmatmul.mubr.f32.gmra.mxu0 %v3172
        %v3341 = vpop.f32.mrf.mxu0
        %v3342 = vadd.f32 %v3156, %v3341
        %v3343 = vpop.f32.mrf.mxu0
        %v3344 = vadd.f32 %v3156, %v3343
        %3345 = vmatprep.mubr.f32.mxu0 0.0
        %3346 = vmatmul.mubr.f32.gmra.mxu0 %v3175
        %v3347 = vpop.f32.mrf.mxu0
        %v3348 = vadd.f32 %v3161, %v3347
        %v3349 = vpop.f32.mrf.mxu0
        %v3350 = vadd.f32 %v3161, %v3349
        %3351 = vmatprep.mubr.f32.mxu0 0.0
        %3352 = vmatmul.mubr.f32.gmra.mxu0 %v3178
        %v3353 = vpop.f32.mrf.mxu0
        %v3354 = vadd.f32 %v3166, %v3353
        %v3355 = vpop.f32.mrf.mxu0
        %v3356 = vadd.f32 %v3166, %v3355
        %3357 = vdwg.mxu0
        %vm3358 = vcmp.ge.f32.partialorder %v3247, 0.0
        %vm3359 = vcmp.ge.f32.partialorder %v3249, 0.0
        %vm3360 = vcmp.ge.f32.partialorder %v3336, 0.0
        %vm3361 = vcmp.ge.f32.partialorder %v3338, 0.0
        %vm3362 = vcmp.ge.f32.partialorder %v3253, 0.0
        %vm3363 = vcmp.ge.f32.partialorder %v3255, 0.0
        %vm3364 = vcmp.ge.f32.partialorder %v3342, 0.0
        %vm3365 = vcmp.ge.f32.partialorder %v3344, 0.0
        %vm3366 = vcmp.ge.f32.partialorder %v3259, 0.0
        %vm3367 = vcmp.ge.f32.partialorder %v3261, 0.0
        %vm3368 = vcmp.ge.f32.partialorder %v3348, 0.0
        %vm3369 = vcmp.ge.f32.partialorder %v3350, 0.0
        %vm3370 = vcmp.ge.f32.partialorder %v3265, 0.0
        %vm3371 = vcmp.ge.f32.partialorder %v3267, 0.0
        %vm3372 = vcmp.ge.f32.partialorder %v3354, 0.0
        %vm3373 = vcmp.ge.f32.partialorder %v3356, 0.0
        %v3374 = vmul.f32 %v3247, 0.01
        %v3375 = vmul.f32 %v3249, 0.01
        %v3376 = vmul.f32 %v3336, 0.01
        %v3377 = vmul.f32 %v3338, 0.01
        %v3378 = vmul.f32 %v3253, 0.01
        %v3379 = vmul.f32 %v3255, 0.01
        %v3380 = vmul.f32 %v3342, 0.01
        %v3381 = vmul.f32 %v3344, 0.01
        %v3382 = vmul.f32 %v3259, 0.01
        %v3383 = vmul.f32 %v3261, 0.01
        %v3384 = vmul.f32 %v3348, 0.01
        %v3385 = vmul.f32 %v3350, 0.01
        %v3386 = vmul.f32 %v3265, 0.01
        %v3387 = vmul.f32 %v3267, 0.01
        %v3388 = vmul.f32 %v3354, 0.01
        %v3389 = vmul.f32 %v3356, 0.01
        %v3390 = vsel %vm3358, %v3247, %v3374
        %v3391 = vsel %vm3359, %v3249, %v3375
        %v3392 = vsel %vm3360, %v3336, %v3376
        %v3393 = vsel %vm3361, %v3338, %v3377
        %v3394 = vsel %vm3362, %v3253, %v3378
        %v3395 = vsel %vm3363, %v3255, %v3379
        %v3396 = vsel %vm3364, %v3342, %v3380
        %v3397 = vsel %vm3365, %v3344, %v3381
        %v3398 = vsel %vm3366, %v3259, %v3382
        %v3399 = vsel %vm3367, %v3261, %v3383
        %v3400 = vsel %vm3368, %v3348, %v3384
        %v3401 = vsel %vm3369, %v3350, %v3385
        %v3402 = vsel %vm3370, %v3265, %v3386
        %v3403 = vsel %vm3371, %v3267, %v3387
        %v3404 = vsel %vm3372, %v3354, %v3388
        %v3405 = vsel %vm3373, %v3356, %v3389
        %v3406 = vld [vmem:[%s8] sm:$0xff]
        %v3407 = vld [vmem:[%s8 + $0x8] sm:$0xff]
        %v3408 = vld [vmem:[%s8 + $0x10] sm:$0xff]
        %v3409 = vld [vmem:[%s8 + $0x18] sm:$0xff]
        %v3410 = vld [vmem:[%s9] sm:$0xff]
        %v3411 = vld [vmem:[%s9 + $0x8] sm:$0xff]
        %v3412 = vld [vmem:[%s9 + $0x10] sm:$0xff]
        %v3413 = vld [vmem:[%s9 + $0x18] sm:$0xff]
        %3415 = vset.pattern.permute.xlu0 0
        %3416 = vperm.xlu0 %3415, %v3410
        %v3417 = vpop.permute.xlu0 %3416
        %3420 = vset.pattern.permute.xlu0 0
        %3421 = vperm.xlu0 %3420, %v3411
        %v3422 = vpop.permute.xlu0 %3421
        %3425 = vset.pattern.permute.xlu0 0
        %3426 = vperm.xlu0 %3425, %v3412
        %v3427 = vpop.permute.xlu0 %3426
        %3430 = vset.pattern.permute.xlu0 0
        %3431 = vperm.xlu0 %3430, %v3413
        %v3432 = vpop.permute.xlu0 %3431
        %v3435 = vsel %vm2635, %v3406, 0
        %v3438 = vsel %vm2635, %v3407, 0
        %v3441 = vsel %vm2635, %v3408, 0
        %v3444 = vsel %vm2635, %v3409, 0
        %3446 = vmatprep.subr.mxu0 0.0
        %3447 = vmatpush1.msra.mxu0 0.0
        %3448 = vmatprep.subr.mxu0 0.0
        %3449 = vmatpush1.msra.mxu0 0.0
        %3450 = vmatprep.subr.mxu0 0.0
        %3451 = vmatpush1.msra.mxu0 0.0
        %3452 = vmatprep.subr.mxu0 0.0
        %3453 = vmatpush1.msra.mxu0 0.0
        %3454 = vmatprep.subr.mxu0 0.0
        %3455 = vmatpush1.msra.mxu0 0.0
        %3456 = vmatprep.subr.mxu0 0.0
        %3457 = vmatpush1.msra.mxu0 0.0
        %3458 = vmatprep.subr.mxu0 0.0
        %3459 = vmatpush1.msra.mxu0 0.0
        %3460 = vmatprep.subr.mxu0 0.0
        %3461 = vmatpush1.msra.mxu0 0.0
        %3462 = vmatprep.subr.mxu0 0.0
        %3463 = vmatpush1.msra.mxu0 0.0
        %3464 = vmatprep.subr.mxu0 0.0
        %3465 = vmatpush1.msra.mxu0 0.0
        %3466 = vmatprep.subr.mxu0 0.0
        %3467 = vmatpush1.msra.mxu0 0.0
        %3468 = vmatprep.subr.mxu0 0.0
        %3469 = vmatpush1.msra.mxu0 0.0
        %3470 = vmatprep.subr.mxu0 %v3403
        %3471 = vmatpush1.msra.mxu0 %v3402
        %3472 = vmatprep.subr.mxu0 %v3399
        %3473 = vmatpush1.msra.mxu0 %v3398
        %3474 = vmatprep.subr.mxu0 %v3395
        %3475 = vmatpush1.msra.mxu0 %v3394
        %3476 = vmatprep.subr.mxu0 %v3391
        %3477 = vmatpush1.msra.mxu0 %v3390
        %3478 = vmatprep.subr.mxu0 0.0
        %3479 = vmatpush2.msra.mxu0 0.0
        %3480 = vmatprep.subr.mxu0 0.0
        %3481 = vmatpush2.msra.mxu0 0.0
        %3482 = vmatprep.subr.mxu0 0.0
        %3483 = vmatpush2.msra.mxu0 0.0
        %3484 = vmatprep.subr.mxu0 0.0
        %3485 = vmatpush2.msra.mxu0 0.0
        %3486 = vmatprep.subr.mxu0 0.0
        %3487 = vmatpush2.msra.mxu0 0.0
        %3488 = vmatprep.subr.mxu0 0.0
        %3489 = vmatpush2.msra.mxu0 0.0
        %3490 = vmatprep.subr.mxu0 0.0
        %3491 = vmatpush2.msra.mxu0 0.0
        %3492 = vmatprep.subr.mxu0 0.0
        %3493 = vmatpush2.msra.mxu0 0.0
        %3494 = vmatprep.subr.mxu0 0.0
        %3495 = vmatpush2.msra.mxu0 0.0
        %3496 = vmatprep.subr.mxu0 0.0
        %3497 = vmatpush2.msra.mxu0 0.0
        %3498 = vmatprep.subr.mxu0 0.0
        %3499 = vmatpush2.msra.mxu0 0.0
        %3500 = vmatprep.subr.mxu0 0.0
        %3501 = vmatpush2.msra.mxu0 0.0
        %3502 = vmatprep.subr.mxu0 0.0
        %3503 = vmatpush2.msra.mxu0 0.0
        %3504 = vmatprep.subr.mxu0 0.0
        %3505 = vmatpush2.msra.mxu0 0.0
        %3506 = vmatprep.subr.mxu0 0.0
        %3507 = vmatpush2.msra.mxu0 0.0
        %3508 = vmatprep.subr.mxu0 0.0
        %3509 = vmatpush2.msra.mxu0 0.0
        %3510 = vmatprep.mubr.f32.mxu0 0.0
        %3511 = vmatmul.mubr.f32.gmra.mxu0 %v3435
        %v3512 = vpop.f32.mrf.mxu0
        %v3513 = vadd.f32 %v3417, %v3512
        %v3514 = vpop.f32.mrf.mxu0
        %v3515 = vadd.f32 %v3417, %v3514
        %3516 = vmatprep.mubr.f32.mxu0 0.0
        %3517 = vmatmul.mubr.f32.gmra.mxu0 %v3438
        %v3518 = vpop.f32.mrf.mxu0
        %v3519 = vadd.f32 %v3422, %v3518
        %v3520 = vpop.f32.mrf.mxu0
        %v3521 = vadd.f32 %v3422, %v3520
        %3522 = vmatprep.mubr.f32.mxu0 0.0
        %3523 = vmatmul.mubr.f32.gmra.mxu0 %v3441
        %v3524 = vpop.f32.mrf.mxu0
        %v3525 = vadd.f32 %v3427, %v3524
        %v3526 = vpop.f32.mrf.mxu0
        %v3527 = vadd.f32 %v3427, %v3526
        %3528 = vmatprep.mubr.f32.mxu0 0.0
        %3529 = vmatmul.mubr.f32.gmra.mxu0 %v3444
        %v3530 = vpop.f32.mrf.mxu0
        %v3531 = vadd.f32 %v3432, %v3530
        %v3532 = vpop.f32.mrf.mxu0
        %v3533 = vadd.f32 %v3432, %v3532
        %3534 = vdwg.mxu0
        %3535 = vmatprep.subr.mxu0 0.0
        %3536 = vmatpush1.msra.mxu0 0.0
        %3537 = vmatprep.subr.mxu0 0.0
        %3538 = vmatpush1.msra.mxu0 0.0
        %3539 = vmatprep.subr.mxu0 0.0
        %3540 = vmatpush1.msra.mxu0 0.0
        %3541 = vmatprep.subr.mxu0 0.0
        %3542 = vmatpush1.msra.mxu0 0.0
        %3543 = vmatprep.subr.mxu0 0.0
        %3544 = vmatpush1.msra.mxu0 0.0
        %3545 = vmatprep.subr.mxu0 0.0
        %3546 = vmatpush1.msra.mxu0 0.0
        %3547 = vmatprep.subr.mxu0 0.0
        %3548 = vmatpush1.msra.mxu0 0.0
        %3549 = vmatprep.subr.mxu0 0.0
        %3550 = vmatpush1.msra.mxu0 0.0
        %3551 = vmatprep.subr.mxu0 0.0
        %3552 = vmatpush1.msra.mxu0 0.0
        %3553 = vmatprep.subr.mxu0 0.0
        %3554 = vmatpush1.msra.mxu0 0.0
        %3555 = vmatprep.subr.mxu0 0.0
        %3556 = vmatpush1.msra.mxu0 0.0
        %3557 = vmatprep.subr.mxu0 0.0
        %3558 = vmatpush1.msra.mxu0 0.0
        %3559 = vmatprep.subr.mxu0 %v3405
        %3560 = vmatpush1.msra.mxu0 %v3404
        %3561 = vmatprep.subr.mxu0 %v3401
        %3562 = vmatpush1.msra.mxu0 %v3400
        %3563 = vmatprep.subr.mxu0 %v3397
        %3564 = vmatpush1.msra.mxu0 %v3396
        %3565 = vmatprep.subr.mxu0 %v3393
        %3566 = vmatpush1.msra.mxu0 %v3392
        %3567 = vmatprep.subr.mxu0 0.0
        %3568 = vmatpush2.msra.mxu0 0.0
        %3569 = vmatprep.subr.mxu0 0.0
        %3570 = vmatpush2.msra.mxu0 0.0
        %3571 = vmatprep.subr.mxu0 0.0
        %3572 = vmatpush2.msra.mxu0 0.0
        %3573 = vmatprep.subr.mxu0 0.0
        %3574 = vmatpush2.msra.mxu0 0.0
        %3575 = vmatprep.subr.mxu0 0.0
        %3576 = vmatpush2.msra.mxu0 0.0
        %3577 = vmatprep.subr.mxu0 0.0
        %3578 = vmatpush2.msra.mxu0 0.0
        %3579 = vmatprep.subr.mxu0 0.0
        %3580 = vmatpush2.msra.mxu0 0.0
        %3581 = vmatprep.subr.mxu0 0.0
        %3582 = vmatpush2.msra.mxu0 0.0
        %3583 = vmatprep.subr.mxu0 0.0
        %3584 = vmatpush2.msra.mxu0 0.0
        %3585 = vmatprep.subr.mxu0 0.0
        %3586 = vmatpush2.msra.mxu0 0.0
        %3587 = vmatprep.subr.mxu0 0.0
        %3588 = vmatpush2.msra.mxu0 0.0
        %3589 = vmatprep.subr.mxu0 0.0
        %3590 = vmatpush2.msra.mxu0 0.0
        %3591 = vmatprep.subr.mxu0 0.0
        %3592 = vmatpush2.msra.mxu0 0.0
        %3593 = vmatprep.subr.mxu0 0.0
        %3594 = vmatpush2.msra.mxu0 0.0
        %3595 = vmatprep.subr.mxu0 0.0
        %3596 = vmatpush2.msra.mxu0 0.0
        %3597 = vmatprep.subr.mxu0 0.0
        %3598 = vmatpush2.msra.mxu0 0.0
        %3599 = vmatprep.mubr.f32.mxu0 0.0
        %3600 = vmatmul.mubr.f32.gmra.mxu0 %v3435
        %v3601 = vpop.f32.mrf.mxu0
        %v3602 = vadd.f32 %v3417, %v3601
        %v3603 = vpop.f32.mrf.mxu0
        %v3604 = vadd.f32 %v3417, %v3603
        %3605 = vmatprep.mubr.f32.mxu0 0.0
        %3606 = vmatmul.mubr.f32.gmra.mxu0 %v3438
        %v3607 = vpop.f32.mrf.mxu0
        %v3608 = vadd.f32 %v3422, %v3607
        %v3609 = vpop.f32.mrf.mxu0
        %v3610 = vadd.f32 %v3422, %v3609
        %3611 = vmatprep.mubr.f32.mxu0 0.0
        %3612 = vmatmul.mubr.f32.gmra.mxu0 %v3441
        %v3613 = vpop.f32.mrf.mxu0
        %v3614 = vadd.f32 %v3427, %v3613
        %v3615 = vpop.f32.mrf.mxu0
        %v3616 = vadd.f32 %v3427, %v3615
        %3617 = vmatprep.mubr.f32.mxu0 0.0
        %3618 = vmatmul.mubr.f32.gmra.mxu0 %v3444
        %v3619 = vpop.f32.mrf.mxu0
        %v3620 = vadd.f32 %v3432, %v3619
        %v3621 = vpop.f32.mrf.mxu0
        %v3622 = vadd.f32 %v3432, %v3621
        %3623 = vdwg.mxu0
        %vm3624 = vcmp.ge.f32.partialorder %v3513, 0.0
        %vm3625 = vcmp.ge.f32.partialorder %v3515, 0.0
        %vm3626 = vcmp.ge.f32.partialorder %v3602, 0.0
        %vm3627 = vcmp.ge.f32.partialorder %v3604, 0.0
        %vm3628 = vcmp.ge.f32.partialorder %v3519, 0.0
        %vm3629 = vcmp.ge.f32.partialorder %v3521, 0.0
        %vm3630 = vcmp.ge.f32.partialorder %v3608, 0.0
        %vm3631 = vcmp.ge.f32.partialorder %v3610, 0.0
        %vm3632 = vcmp.ge.f32.partialorder %v3525, 0.0
        %vm3633 = vcmp.ge.f32.partialorder %v3527, 0.0
        %vm3634 = vcmp.ge.f32.partialorder %v3614, 0.0
        %vm3635 = vcmp.ge.f32.partialorder %v3616, 0.0
        %vm3636 = vcmp.ge.f32.partialorder %v3531, 0.0
        %vm3637 = vcmp.ge.f32.partialorder %v3533, 0.0
        %vm3638 = vcmp.ge.f32.partialorder %v3620, 0.0
        %vm3639 = vcmp.ge.f32.partialorder %v3622, 0.0
        %v3640 = vmul.f32 %v3513, 0.01
        %v3641 = vmul.f32 %v3515, 0.01
        %v3642 = vmul.f32 %v3602, 0.01
        %v3643 = vmul.f32 %v3604, 0.01
        %v3644 = vmul.f32 %v3519, 0.01
        %v3645 = vmul.f32 %v3521, 0.01
        %v3646 = vmul.f32 %v3608, 0.01
        %v3647 = vmul.f32 %v3610, 0.01
        %v3648 = vmul.f32 %v3525, 0.01
        %v3649 = vmul.f32 %v3527, 0.01
        %v3650 = vmul.f32 %v3614, 0.01
        %v3651 = vmul.f32 %v3616, 0.01
        %v3652 = vmul.f32 %v3531, 0.01
        %v3653 = vmul.f32 %v3533, 0.01
        %v3654 = vmul.f32 %v3620, 0.01
        %v3655 = vmul.f32 %v3622, 0.01
        %v3656 = vsel %vm3624, %v3513, %v3640
        %v3657 = vsel %vm3625, %v3515, %v3641
        %v3658 = vsel %vm3626, %v3602, %v3642
        %v3659 = vsel %vm3627, %v3604, %v3643
        %v3660 = vsel %vm3628, %v3519, %v3644
        %v3661 = vsel %vm3629, %v3521, %v3645
        %v3662 = vsel %vm3630, %v3608, %v3646
        %v3663 = vsel %vm3631, %v3610, %v3647
        %v3664 = vsel %vm3632, %v3525, %v3648
        %v3665 = vsel %vm3633, %v3527, %v3649
        %v3666 = vsel %vm3634, %v3614, %v3650
        %v3667 = vsel %vm3635, %v3616, %v3651
        %v3668 = vsel %vm3636, %v3531, %v3652
        %v3669 = vsel %vm3637, %v3533, %v3653
        %v3670 = vsel %vm3638, %v3620, %v3654
        %v3671 = vsel %vm3639, %v3622, %v3655
        %v3672 = vld [vmem:[#allocation3] sm:$0xff]
        %v3673 = vld [vmem:[#allocation3 + $0x8] sm:$0xff]
        %v3674 = vld [vmem:[#allocation3 + $0x10] sm:$0xff]
        %v3675 = vld [vmem:[#allocation3 + $0x18] sm:$0xff]
        %v3676 = vld [vmem:[%s11] sm:$0xff]
        %v3677 = vld [vmem:[%s11 + $0x8] sm:$0xff]
        %v3678 = vld [vmem:[%s11 + $0x10] sm:$0xff]
        %v3679 = vld [vmem:[%s11 + $0x18] sm:$0xff]
        %v3680 = vld [vmem:[%s12] sm:$0xff]
        %v3681 = vld [vmem:[%s12 + $0x8] sm:$0xff]
        %v3682 = vld [vmem:[%s12 + $0x10] sm:$0xff]
        %v3683 = vld [vmem:[%s12 + $0x18] sm:$0xff]
        %v3685 = vsel %vm2635, %v3672, 0
        %v3688 = vsel %vm2635, %v3673, 0
        %v3691 = vsel %vm2635, %v3674, 0
        %v3694 = vsel %vm2635, %v3675, 0
        %3696 = vmatprep.subr.mxu0 0.0
        %3697 = vmatpush1.msra.mxu0 0.0
        %3698 = vmatprep.subr.mxu0 0.0
        %3699 = vmatpush1.msra.mxu0 0.0
        %3700 = vmatprep.subr.mxu0 0.0
        %3701 = vmatpush1.msra.mxu0 0.0
        %3702 = vmatprep.subr.mxu0 0.0
        %3703 = vmatpush1.msra.mxu0 0.0
        %3704 = vmatprep.subr.mxu0 0.0
        %3705 = vmatpush1.msra.mxu0 0.0
        %3706 = vmatprep.subr.mxu0 0.0
        %3707 = vmatpush1.msra.mxu0 0.0
        %3708 = vmatprep.subr.mxu0 0.0
        %3709 = vmatpush1.msra.mxu0 0.0
        %3710 = vmatprep.subr.mxu0 0.0
        %3711 = vmatpush1.msra.mxu0 0.0
        %3712 = vmatprep.subr.mxu0 0.0
        %3713 = vmatpush1.msra.mxu0 0.0
        %3714 = vmatprep.subr.mxu0 0.0
        %3715 = vmatpush1.msra.mxu0 0.0
        %3716 = vmatprep.subr.mxu0 0.0
        %3717 = vmatpush1.msra.mxu0 0.0
        %3718 = vmatprep.subr.mxu0 0.0
        %3719 = vmatpush1.msra.mxu0 0.0
        %3720 = vmatprep.subr.mxu0 %v2604
        %3721 = vmatpush1.msra.mxu0 %v2603
        %3722 = vmatprep.subr.mxu0 %v2600
        %3723 = vmatpush1.msra.mxu0 %v2599
        %3724 = vmatprep.subr.mxu0 %v2596
        %3725 = vmatpush1.msra.mxu0 %v2595
        %3726 = vmatprep.subr.mxu0 %v2592
        %3727 = vmatpush1.msra.mxu0 %v2591
        %3728 = vmatprep.subr.mxu0 0.0
        %3729 = vmatpush2.msra.mxu0 0.0
        %3730 = vmatprep.subr.mxu0 0.0
        %3731 = vmatpush2.msra.mxu0 0.0
        %3732 = vmatprep.subr.mxu0 0.0
        %3733 = vmatpush2.msra.mxu0 0.0
        %3734 = vmatprep.subr.mxu0 0.0
        %3735 = vmatpush2.msra.mxu0 0.0
        %3736 = vmatprep.subr.mxu0 0.0
        %3737 = vmatpush2.msra.mxu0 0.0
        %3738 = vmatprep.subr.mxu0 0.0
        %3739 = vmatpush2.msra.mxu0 0.0
        %3740 = vmatprep.subr.mxu0 0.0
        %3741 = vmatpush2.msra.mxu0 0.0
        %3742 = vmatprep.subr.mxu0 0.0
        %3743 = vmatpush2.msra.mxu0 0.0
        %3744 = vmatprep.subr.mxu0 0.0
        %3745 = vmatpush2.msra.mxu0 0.0
        %3746 = vmatprep.subr.mxu0 0.0
        %3747 = vmatpush2.msra.mxu0 0.0
        %3748 = vmatprep.subr.mxu0 0.0
        %3749 = vmatpush2.msra.mxu0 0.0
        %3750 = vmatprep.subr.mxu0 0.0
        %3751 = vmatpush2.msra.mxu0 0.0
        %3752 = vmatprep.subr.mxu0 0.0
        %3753 = vmatpush2.msra.mxu0 0.0
        %3754 = vmatprep.subr.mxu0 0.0
        %3755 = vmatpush2.msra.mxu0 0.0
        %3756 = vmatprep.subr.mxu0 0.0
        %3757 = vmatpush2.msra.mxu0 0.0
        %3758 = vmatprep.subr.mxu0 0.0
        %3759 = vmatpush2.msra.mxu0 0.0
        %3760 = vmatprep.mubr.f32.mxu0 0.0
        %3761 = vmatmul.mubr.f32.gmra.mxu0 %v3685
        %v3762 = vpop.f32.mrf.mxu0
        %v3763 = vadd.f32 0.0, %v3762
        %v3764 = vpop.f32.mrf.mxu0
        %v3765 = vadd.f32 0.0, %v3764
        %3766 = vmatprep.mubr.f32.mxu0 0.0
        %3767 = vmatmul.mubr.f32.gmra.mxu0 %v3688
        %v3768 = vpop.f32.mrf.mxu0
        %v3769 = vadd.f32 0.0, %v3768
        %v3770 = vpop.f32.mrf.mxu0
        %v3771 = vadd.f32 0.0, %v3770
        %3772 = vmatprep.mubr.f32.mxu0 0.0
        %3773 = vmatmul.mubr.f32.gmra.mxu0 %v3691
        %v3774 = vpop.f32.mrf.mxu0
        %v3775 = vadd.f32 0.0, %v3774
        %v3776 = vpop.f32.mrf.mxu0
        %v3777 = vadd.f32 0.0, %v3776
        %3778 = vmatprep.mubr.f32.mxu0 0.0
        %3779 = vmatmul.mubr.f32.gmra.mxu0 %v3694
        %v3780 = vpop.f32.mrf.mxu0
        %v3781 = vadd.f32 0.0, %v3780
        %v3782 = vpop.f32.mrf.mxu0
        %v3783 = vadd.f32 0.0, %v3782
        %3784 = vdwg.mxu0
        %3785 = vmatprep.subr.mxu0 0.0
        %3786 = vmatpush1.msra.mxu0 0.0
        %3787 = vmatprep.subr.mxu0 0.0
        %3788 = vmatpush1.msra.mxu0 0.0
        %3789 = vmatprep.subr.mxu0 0.0
        %3790 = vmatpush1.msra.mxu0 0.0
        %3791 = vmatprep.subr.mxu0 0.0
        %3792 = vmatpush1.msra.mxu0 0.0
        %3793 = vmatprep.subr.mxu0 0.0
        %3794 = vmatpush1.msra.mxu0 0.0
        %3795 = vmatprep.subr.mxu0 0.0
        %3796 = vmatpush1.msra.mxu0 0.0
        %3797 = vmatprep.subr.mxu0 0.0
        %3798 = vmatpush1.msra.mxu0 0.0
        %3799 = vmatprep.subr.mxu0 0.0
        %3800 = vmatpush1.msra.mxu0 0.0
        %3801 = vmatprep.subr.mxu0 0.0
        %3802 = vmatpush1.msra.mxu0 0.0
        %3803 = vmatprep.subr.mxu0 0.0
        %3804 = vmatpush1.msra.mxu0 0.0
        %3805 = vmatprep.subr.mxu0 0.0
        %3806 = vmatpush1.msra.mxu0 0.0
        %3807 = vmatprep.subr.mxu0 0.0
        %3808 = vmatpush1.msra.mxu0 0.0
        %3809 = vmatprep.subr.mxu0 %v2606
        %3810 = vmatpush1.msra.mxu0 %v2605
        %3811 = vmatprep.subr.mxu0 %v2602
        %3812 = vmatpush1.msra.mxu0 %v2601
        %3813 = vmatprep.subr.mxu0 %v2598
        %3814 = vmatpush1.msra.mxu0 %v2597
        %3815 = vmatprep.subr.mxu0 %v2594
        %3816 = vmatpush1.msra.mxu0 %v2593
        %3817 = vmatprep.subr.mxu0 0.0
        %3818 = vmatpush2.msra.mxu0 0.0
        %3819 = vmatprep.subr.mxu0 0.0
        %3820 = vmatpush2.msra.mxu0 0.0
        %3821 = vmatprep.subr.mxu0 0.0
        %3822 = vmatpush2.msra.mxu0 0.0
        %3823 = vmatprep.subr.mxu0 0.0
        %3824 = vmatpush2.msra.mxu0 0.0
        %3825 = vmatprep.subr.mxu0 0.0
        %3826 = vmatpush2.msra.mxu0 0.0
        %3827 = vmatprep.subr.mxu0 0.0
        %3828 = vmatpush2.msra.mxu0 0.0
        %3829 = vmatprep.subr.mxu0 0.0
        %3830 = vmatpush2.msra.mxu0 0.0
        %3831 = vmatprep.subr.mxu0 0.0
        %3832 = vmatpush2.msra.mxu0 0.0
        %3833 = vmatprep.subr.mxu0 0.0
        %3834 = vmatpush2.msra.mxu0 0.0
        %3835 = vmatprep.subr.mxu0 0.0
        %3836 = vmatpush2.msra.mxu0 0.0
        %3837 = vmatprep.subr.mxu0 0.0
        %3838 = vmatpush2.msra.mxu0 0.0
        %3839 = vmatprep.subr.mxu0 0.0
        %3840 = vmatpush2.msra.mxu0 0.0
        %3841 = vmatprep.subr.mxu0 0.0
        %3842 = vmatpush2.msra.mxu0 0.0
        %3843 = vmatprep.subr.mxu0 0.0
        %3844 = vmatpush2.msra.mxu0 0.0
        %3845 = vmatprep.subr.mxu0 0.0
        %3846 = vmatpush2.msra.mxu0 0.0
        %3847 = vmatprep.subr.mxu0 0.0
        %3848 = vmatpush2.msra.mxu0 0.0
        %3849 = vmatprep.mubr.f32.mxu0 0.0
        %3850 = vmatmul.mubr.f32.gmra.mxu0 %v3685
        %v3851 = vpop.f32.mrf.mxu0
        %v3852 = vadd.f32 0.0, %v3851
        %v3853 = vpop.f32.mrf.mxu0
        %v3854 = vadd.f32 0.0, %v3853
        %3855 = vmatprep.mubr.f32.mxu0 0.0
        %3856 = vmatmul.mubr.f32.gmra.mxu0 %v3688
        %v3857 = vpop.f32.mrf.mxu0
        %v3858 = vadd.f32 0.0, %v3857
        %v3859 = vpop.f32.mrf.mxu0
        %v3860 = vadd.f32 0.0, %v3859
        %3861 = vmatprep.mubr.f32.mxu0 0.0
        %3862 = vmatmul.mubr.f32.gmra.mxu0 %v3691
        %v3863 = vpop.f32.mrf.mxu0
        %v3864 = vadd.f32 0.0, %v3863
        %v3865 = vpop.f32.mrf.mxu0
        %v3866 = vadd.f32 0.0, %v3865
        %3867 = vmatprep.mubr.f32.mxu0 0.0
        %3868 = vmatmul.mubr.f32.gmra.mxu0 %v3694
        %v3869 = vpop.f32.mrf.mxu0
        %v3870 = vadd.f32 0.0, %v3869
        %v3871 = vpop.f32.mrf.mxu0
        %v3872 = vadd.f32 0.0, %v3871
        %3873 = vdwg.mxu0
        %v3875 = vsel %vm2635, %v3676, 0
        %v3878 = vsel %vm2635, %v3677, 0
        %v3881 = vsel %vm2635, %v3678, 0
        %v3884 = vsel %vm2635, %v3679, 0
        %3886 = vmatprep.subr.mxu0 0.0
        %3887 = vmatpush1.msra.mxu0 0.0
        %3888 = vmatprep.subr.mxu0 0.0
        %3889 = vmatpush1.msra.mxu0 0.0
        %3890 = vmatprep.subr.mxu0 0.0
        %3891 = vmatpush1.msra.mxu0 0.0
        %3892 = vmatprep.subr.mxu0 0.0
        %3893 = vmatpush1.msra.mxu0 0.0
        %3894 = vmatprep.subr.mxu0 0.0
        %3895 = vmatpush1.msra.mxu0 0.0
        %3896 = vmatprep.subr.mxu0 0.0
        %3897 = vmatpush1.msra.mxu0 0.0
        %3898 = vmatprep.subr.mxu0 0.0
        %3899 = vmatpush1.msra.mxu0 0.0
        %3900 = vmatprep.subr.mxu0 0.0
        %3901 = vmatpush1.msra.mxu0 0.0
        %3902 = vmatprep.subr.mxu0 0.0
        %3903 = vmatpush1.msra.mxu0 0.0
        %3904 = vmatprep.subr.mxu0 0.0
        %3905 = vmatpush1.msra.mxu0 0.0
        %3906 = vmatprep.subr.mxu0 0.0
        %3907 = vmatpush1.msra.mxu0 0.0
        %3908 = vmatprep.subr.mxu0 0.0
        %3909 = vmatpush1.msra.mxu0 0.0
        %3910 = vmatprep.subr.mxu0 %v3669
        %3911 = vmatpush1.msra.mxu0 %v3668
        %3912 = vmatprep.subr.mxu0 %v3665
        %3913 = vmatpush1.msra.mxu0 %v3664
        %3914 = vmatprep.subr.mxu0 %v3661
        %3915 = vmatpush1.msra.mxu0 %v3660
        %3916 = vmatprep.subr.mxu0 %v3657
        %3917 = vmatpush1.msra.mxu0 %v3656
        %3918 = vmatprep.subr.mxu0 0.0
        %3919 = vmatpush2.msra.mxu0 0.0
        %3920 = vmatprep.subr.mxu0 0.0
        %3921 = vmatpush2.msra.mxu0 0.0
        %3922 = vmatprep.subr.mxu0 0.0
        %3923 = vmatpush2.msra.mxu0 0.0
        %3924 = vmatprep.subr.mxu0 0.0
        %3925 = vmatpush2.msra.mxu0 0.0
        %3926 = vmatprep.subr.mxu0 0.0
        %3927 = vmatpush2.msra.mxu0 0.0
        %3928 = vmatprep.subr.mxu0 0.0
        %3929 = vmatpush2.msra.mxu0 0.0
        %3930 = vmatprep.subr.mxu0 0.0
        %3931 = vmatpush2.msra.mxu0 0.0
        %3932 = vmatprep.subr.mxu0 0.0
        %3933 = vmatpush2.msra.mxu0 0.0
        %3934 = vmatprep.subr.mxu0 0.0
        %3935 = vmatpush2.msra.mxu0 0.0
        %3936 = vmatprep.subr.mxu0 0.0
        %3937 = vmatpush2.msra.mxu0 0.0
        %3938 = vmatprep.subr.mxu0 0.0
        %3939 = vmatpush2.msra.mxu0 0.0
        %3940 = vmatprep.subr.mxu0 0.0
        %3941 = vmatpush2.msra.mxu0 0.0
        %3942 = vmatprep.subr.mxu0 0.0
        %3943 = vmatpush2.msra.mxu0 0.0
        %3944 = vmatprep.subr.mxu0 0.0
        %3945 = vmatpush2.msra.mxu0 0.0
        %3946 = vmatprep.subr.mxu0 0.0
        %3947 = vmatpush2.msra.mxu0 0.0
        %3948 = vmatprep.subr.mxu0 0.0
        %3949 = vmatpush2.msra.mxu0 0.0
        %3950 = vmatprep.mubr.f32.mxu0 0.0
        %3951 = vmatmul.mubr.f32.gmra.mxu0 %v3875
        %v3952 = vpop.f32.mrf.mxu0
        %v3953 = vadd.f32 %v3763, %v3952
        %v3954 = vpop.f32.mrf.mxu0
        %v3955 = vadd.f32 %v3765, %v3954
        %3956 = vmatprep.mubr.f32.mxu0 0.0
        %3957 = vmatmul.mubr.f32.gmra.mxu0 %v3878
        %v3958 = vpop.f32.mrf.mxu0
        %v3959 = vadd.f32 %v3769, %v3958
        %v3960 = vpop.f32.mrf.mxu0
        %v3961 = vadd.f32 %v3771, %v3960
        %3962 = vmatprep.mubr.f32.mxu0 0.0
        %3963 = vmatmul.mubr.f32.gmra.mxu0 %v3881
        %v3964 = vpop.f32.mrf.mxu0
        %v3965 = vadd.f32 %v3775, %v3964
        %v3966 = vpop.f32.mrf.mxu0
        %v3967 = vadd.f32 %v3777, %v3966
        %3968 = vmatprep.mubr.f32.mxu0 0.0
        %3969 = vmatmul.mubr.f32.gmra.mxu0 %v3884
        %v3970 = vpop.f32.mrf.mxu0
        %v3971 = vadd.f32 %v3781, %v3970
        %v3972 = vpop.f32.mrf.mxu0
        %v3973 = vadd.f32 %v3783, %v3972
        %3974 = vdwg.mxu0
        %3975 = vmatprep.subr.mxu0 0.0
        %3976 = vmatpush1.msra.mxu0 0.0
        %3977 = vmatprep.subr.mxu0 0.0
        %3978 = vmatpush1.msra.mxu0 0.0
        %3979 = vmatprep.subr.mxu0 0.0
        %3980 = vmatpush1.msra.mxu0 0.0
        %3981 = vmatprep.subr.mxu0 0.0
        %3982 = vmatpush1.msra.mxu0 0.0
        %3983 = vmatprep.subr.mxu0 0.0
        %3984 = vmatpush1.msra.mxu0 0.0
        %3985 = vmatprep.subr.mxu0 0.0
        %3986 = vmatpush1.msra.mxu0 0.0
        %3987 = vmatprep.subr.mxu0 0.0
        %3988 = vmatpush1.msra.mxu0 0.0
        %3989 = vmatprep.subr.mxu0 0.0
        %3990 = vmatpush1.msra.mxu0 0.0
        %3991 = vmatprep.subr.mxu0 0.0
        %3992 = vmatpush1.msra.mxu0 0.0
        %3993 = vmatprep.subr.mxu0 0.0
        %3994 = vmatpush1.msra.mxu0 0.0
        %3995 = vmatprep.subr.mxu0 0.0
        %3996 = vmatpush1.msra.mxu0 0.0
        %3997 = vmatprep.subr.mxu0 0.0
        %3998 = vmatpush1.msra.mxu0 0.0
        %3999 = vmatprep.subr.mxu0 %v3671
        %4000 = vmatpush1.msra.mxu0 %v3670
        %4001 = vmatprep.subr.mxu0 %v3667
        %4002 = vmatpush1.msra.mxu0 %v3666
        %4003 = vmatprep.subr.mxu0 %v3663
        %4004 = vmatpush1.msra.mxu0 %v3662
        %4005 = vmatprep.subr.mxu0 %v3659
        %4006 = vmatpush1.msra.mxu0 %v3658
        %4007 = vmatprep.subr.mxu0 0.0
        %4008 = vmatpush2.msra.mxu0 0.0
        %4009 = vmatprep.subr.mxu0 0.0
        %4010 = vmatpush2.msra.mxu0 0.0
        %4011 = vmatprep.subr.mxu0 0.0
        %4012 = vmatpush2.msra.mxu0 0.0
        %4013 = vmatprep.subr.mxu0 0.0
        %4014 = vmatpush2.msra.mxu0 0.0
        %4015 = vmatprep.subr.mxu0 0.0
        %4016 = vmatpush2.msra.mxu0 0.0
        %4017 = vmatprep.subr.mxu0 0.0
        %4018 = vmatpush2.msra.mxu0 0.0
        %4019 = vmatprep.subr.mxu0 0.0
        %4020 = vmatpush2.msra.mxu0 0.0
        %4021 = vmatprep.subr.mxu0 0.0
        %4022 = vmatpush2.msra.mxu0 0.0
        %4023 = vmatprep.subr.mxu0 0.0
        %4024 = vmatpush2.msra.mxu0 0.0
        %4025 = vmatprep.subr.mxu0 0.0
        %4026 = vmatpush2.msra.mxu0 0.0
        %4027 = vmatprep.subr.mxu0 0.0
        %4028 = vmatpush2.msra.mxu0 0.0
        %4029 = vmatprep.subr.mxu0 0.0
        %4030 = vmatpush2.msra.mxu0 0.0
        %4031 = vmatprep.subr.mxu0 0.0
        %4032 = vmatpush2.msra.mxu0 0.0
        %4033 = vmatprep.subr.mxu0 0.0
        %4034 = vmatpush2.msra.mxu0 0.0
        %4035 = vmatprep.subr.mxu0 0.0
        %4036 = vmatpush2.msra.mxu0 0.0
        %4037 = vmatprep.subr.mxu0 0.0
        %4038 = vmatpush2.msra.mxu0 0.0
        %4039 = vmatprep.mubr.f32.mxu0 0.0
        %4040 = vmatmul.mubr.f32.gmra.mxu0 %v3875
        %v4041 = vpop.f32.mrf.mxu0
        %v4042 = vadd.f32 %v3852, %v4041
        %v4043 = vpop.f32.mrf.mxu0
        %v4044 = vadd.f32 %v3854, %v4043
        %4045 = vmatprep.mubr.f32.mxu0 0.0
        %4046 = vmatmul.mubr.f32.gmra.mxu0 %v3878
        %v4047 = vpop.f32.mrf.mxu0
        %v4048 = vadd.f32 %v3858, %v4047
        %v4049 = vpop.f32.mrf.mxu0
        %v4050 = vadd.f32 %v3860, %v4049
        %4051 = vmatprep.mubr.f32.mxu0 0.0
        %4052 = vmatmul.mubr.f32.gmra.mxu0 %v3881
        %v4053 = vpop.f32.mrf.mxu0
        %v4054 = vadd.f32 %v3864, %v4053
        %v4055 = vpop.f32.mrf.mxu0
        %v4056 = vadd.f32 %v3866, %v4055
        %4057 = vmatprep.mubr.f32.mxu0 0.0
        %4058 = vmatmul.mubr.f32.gmra.mxu0 %v3884
        %v4059 = vpop.f32.mrf.mxu0
        %v4060 = vadd.f32 %v3870, %v4059
        %v4061 = vpop.f32.mrf.mxu0
        %v4062 = vadd.f32 %v3872, %v4061
        %4063 = vdwg.mxu0
        %4065 = vset.pattern.permute.xlu0 0
        %4066 = vperm.xlu0 %4065, %v3680
        %v4067 = vpop.permute.xlu0 %4066
        %4070 = vset.pattern.permute.xlu0 0
        %4071 = vperm.xlu0 %4070, %v3681
        %v4072 = vpop.permute.xlu0 %4071
        %4075 = vset.pattern.permute.xlu0 0
        %4076 = vperm.xlu0 %4075, %v3682
        %v4077 = vpop.permute.xlu0 %4076
        %4080 = vset.pattern.permute.xlu0 0
        %4081 = vperm.xlu0 %4080, %v3683
        %v4082 = vpop.permute.xlu0 %4081
        %v4084 = vadd.f32 %v3953, %v4067
        %v4085 = vadd.f32 %v3955, %v4067
        %v4086 = vadd.f32 %v4042, %v4067
        %v4087 = vadd.f32 %v4044, %v4067
        %v4088 = vadd.f32 %v3959, %v4072
        %v4089 = vadd.f32 %v3961, %v4072
        %v4090 = vadd.f32 %v4048, %v4072
        %v4091 = vadd.f32 %v4050, %v4072
        %v4092 = vadd.f32 %v3965, %v4077
        %v4093 = vadd.f32 %v3967, %v4077
        %v4094 = vadd.f32 %v4054, %v4077
        %v4095 = vadd.f32 %v4056, %v4077
        %v4096 = vadd.f32 %v3971, %v4082
        %v4097 = vadd.f32 %v3973, %v4082
        %v4098 = vadd.f32 %v4060, %v4082
        %v4099 = vadd.f32 %v4062, %v4082
        %vm4100 = vcmp.ge.f32.partialorder %v4084, 0.0
        %vm4101 = vcmp.ge.f32.partialorder %v4085, 0.0
        %vm4102 = vcmp.ge.f32.partialorder %v4086, 0.0
        %vm4103 = vcmp.ge.f32.partialorder %v4087, 0.0
        %vm4104 = vcmp.ge.f32.partialorder %v4088, 0.0
        %vm4105 = vcmp.ge.f32.partialorder %v4089, 0.0
        %vm4106 = vcmp.ge.f32.partialorder %v4090, 0.0
        %vm4107 = vcmp.ge.f32.partialorder %v4091, 0.0
        %vm4108 = vcmp.ge.f32.partialorder %v4092, 0.0
        %vm4109 = vcmp.ge.f32.partialorder %v4093, 0.0
        %vm4110 = vcmp.ge.f32.partialorder %v4094, 0.0
        %vm4111 = vcmp.ge.f32.partialorder %v4095, 0.0
        %vm4112 = vcmp.ge.f32.partialorder %v4096, 0.0
        %vm4113 = vcmp.ge.f32.partialorder %v4097, 0.0
        %vm4114 = vcmp.ge.f32.partialorder %v4098, 0.0
        %vm4115 = vcmp.ge.f32.partialorder %v4099, 0.0
        %v4116 = vmul.f32 %v4084, 0.01
        %v4117 = vmul.f32 %v4085, 0.01
        %v4118 = vmul.f32 %v4086, 0.01
        %v4119 = vmul.f32 %v4087, 0.01
        %v4120 = vmul.f32 %v4088, 0.01
        %v4121 = vmul.f32 %v4089, 0.01
        %v4122 = vmul.f32 %v4090, 0.01
        %v4123 = vmul.f32 %v4091, 0.01
        %v4124 = vmul.f32 %v4092, 0.01
        %v4125 = vmul.f32 %v4093, 0.01
        %v4126 = vmul.f32 %v4094, 0.01
        %v4127 = vmul.f32 %v4095, 0.01
        %v4128 = vmul.f32 %v4096, 0.01
        %v4129 = vmul.f32 %v4097, 0.01
        %v4130 = vmul.f32 %v4098, 0.01
        %v4131 = vmul.f32 %v4099, 0.01
        %v4132 = vsel %vm4100, %v4084, %v4116
        %v4133 = vsel %vm4101, %v4085, %v4117
        %v4134 = vsel %vm4102, %v4086, %v4118
        %v4135 = vsel %vm4103, %v4087, %v4119
        %v4136 = vsel %vm4104, %v4088, %v4120
        %v4137 = vsel %vm4105, %v4089, %v4121
        %v4138 = vsel %vm4106, %v4090, %v4122
        %v4139 = vsel %vm4107, %v4091, %v4123
        %v4140 = vsel %vm4108, %v4092, %v4124
        %v4141 = vsel %vm4109, %v4093, %v4125
        %v4142 = vsel %vm4110, %v4094, %v4126
        %v4143 = vsel %vm4111, %v4095, %v4127
        %v4144 = vsel %vm4112, %v4096, %v4128
        %v4145 = vsel %vm4113, %v4097, %v4129
        %v4146 = vsel %vm4114, %v4098, %v4130
        %v4147 = vsel %vm4115, %v4099, %v4131
        %v4148 = vld [vmem:[#allocation6] sm:$0xff]
        %v4149 = vld [vmem:[#allocation6 + $0x8] sm:$0xff]
        %v4150 = vld [vmem:[#allocation6 + $0x10] sm:$0xff]
        %v4151 = vld [vmem:[#allocation6 + $0x18] sm:$0xff]
        %v4152 = vld [vmem:[%s14] sm:$0xff]
        %v4153 = vld [vmem:[%s14 + $0x8] sm:$0xff]
        %v4154 = vld [vmem:[%s14 + $0x10] sm:$0xff]
        %v4155 = vld [vmem:[%s14 + $0x18] sm:$0xff]
        %4157 = vset.pattern.permute.xlu0 0
        %4158 = vperm.xlu0 %4157, %v4152
        %v4159 = vpop.permute.xlu0 %4158
        %4162 = vset.pattern.permute.xlu0 0
        %4163 = vperm.xlu0 %4162, %v4153
        %v4164 = vpop.permute.xlu0 %4163
        %4167 = vset.pattern.permute.xlu0 0
        %4168 = vperm.xlu0 %4167, %v4154
        %v4169 = vpop.permute.xlu0 %4168
        %4172 = vset.pattern.permute.xlu0 0
        %4173 = vperm.xlu0 %4172, %v4155
        %v4174 = vpop.permute.xlu0 %4173
        %v4177 = vsel %vm2635, %v4148, 0
        %v4180 = vsel %vm2635, %v4149, 0
        %v4183 = vsel %vm2635, %v4150, 0
        %v4186 = vsel %vm2635, %v4151, 0
        %4188 = vmatprep.subr.mxu0 0.0
        %4189 = vmatpush1.msra.mxu0 0.0
        %4190 = vmatprep.subr.mxu0 0.0
        %4191 = vmatpush1.msra.mxu0 0.0
        %4192 = vmatprep.subr.mxu0 0.0
        %4193 = vmatpush1.msra.mxu0 0.0
        %4194 = vmatprep.subr.mxu0 0.0
        %4195 = vmatpush1.msra.mxu0 0.0
        %4196 = vmatprep.subr.mxu0 0.0
        %4197 = vmatpush1.msra.mxu0 0.0
        %4198 = vmatprep.subr.mxu0 0.0
        %4199 = vmatpush1.msra.mxu0 0.0
        %4200 = vmatprep.subr.mxu0 0.0
        %4201 = vmatpush1.msra.mxu0 0.0
        %4202 = vmatprep.subr.mxu0 0.0
        %4203 = vmatpush1.msra.mxu0 0.0
        %4204 = vmatprep.subr.mxu0 0.0
        %4205 = vmatpush1.msra.mxu0 0.0
        %4206 = vmatprep.subr.mxu0 0.0
        %4207 = vmatpush1.msra.mxu0 0.0
        %4208 = vmatprep.subr.mxu0 0.0
        %4209 = vmatpush1.msra.mxu0 0.0
        %4210 = vmatprep.subr.mxu0 0.0
        %4211 = vmatpush1.msra.mxu0 0.0
        %4212 = vmatprep.subr.mxu0 %v4145
        %4213 = vmatpush1.msra.mxu0 %v4144
        %4214 = vmatprep.subr.mxu0 %v4141
        %4215 = vmatpush1.msra.mxu0 %v4140
        %4216 = vmatprep.subr.mxu0 %v4137
        %4217 = vmatpush1.msra.mxu0 %v4136
        %4218 = vmatprep.subr.mxu0 %v4133
        %4219 = vmatpush1.msra.mxu0 %v4132
        %4220 = vmatprep.subr.mxu0 0.0
        %4221 = vmatpush2.msra.mxu0 0.0
        %4222 = vmatprep.subr.mxu0 0.0
        %4223 = vmatpush2.msra.mxu0 0.0
        %4224 = vmatprep.subr.mxu0 0.0
        %4225 = vmatpush2.msra.mxu0 0.0
        %4226 = vmatprep.subr.mxu0 0.0
        %4227 = vmatpush2.msra.mxu0 0.0
        %4228 = vmatprep.subr.mxu0 0.0
        %4229 = vmatpush2.msra.mxu0 0.0
        %4230 = vmatprep.subr.mxu0 0.0
        %4231 = vmatpush2.msra.mxu0 0.0
        %4232 = vmatprep.subr.mxu0 0.0
        %4233 = vmatpush2.msra.mxu0 0.0
        %4234 = vmatprep.subr.mxu0 0.0
        %4235 = vmatpush2.msra.mxu0 0.0
        %4236 = vmatprep.subr.mxu0 0.0
        %4237 = vmatpush2.msra.mxu0 0.0
        %4238 = vmatprep.subr.mxu0 0.0
        %4239 = vmatpush2.msra.mxu0 0.0
        %4240 = vmatprep.subr.mxu0 0.0
        %4241 = vmatpush2.msra.mxu0 0.0
        %4242 = vmatprep.subr.mxu0 0.0
        %4243 = vmatpush2.msra.mxu0 0.0
        %4244 = vmatprep.subr.mxu0 0.0
        %4245 = vmatpush2.msra.mxu0 0.0
        %4246 = vmatprep.subr.mxu0 0.0
        %4247 = vmatpush2.msra.mxu0 0.0
        %4248 = vmatprep.subr.mxu0 0.0
        %4249 = vmatpush2.msra.mxu0 0.0
        %4250 = vmatprep.subr.mxu0 0.0
        %4251 = vmatpush2.msra.mxu0 0.0
        %4252 = vmatprep.mubr.f32.mxu0 0.0
        %4253 = vmatmul.mubr.f32.gmra.mxu0 %v4177
        %v4254 = vpop.f32.mrf.mxu0
        %v4255 = vadd.f32 %v4159, %v4254
        %v4256 = vpop.f32.mrf.mxu0
        %v4257 = vadd.f32 %v4159, %v4256
        %4258 = vmatprep.mubr.f32.mxu0 0.0
        %4259 = vmatmul.mubr.f32.gmra.mxu0 %v4180
        %v4260 = vpop.f32.mrf.mxu0
        %v4261 = vadd.f32 %v4164, %v4260
        %v4262 = vpop.f32.mrf.mxu0
        %v4263 = vadd.f32 %v4164, %v4262
        %4264 = vmatprep.mubr.f32.mxu0 0.0
        %4265 = vmatmul.mubr.f32.gmra.mxu0 %v4183
        %v4266 = vpop.f32.mrf.mxu0
        %v4267 = vadd.f32 %v4169, %v4266
        %v4268 = vpop.f32.mrf.mxu0
        %v4269 = vadd.f32 %v4169, %v4268
        %4270 = vmatprep.mubr.f32.mxu0 0.0
        %4271 = vmatmul.mubr.f32.gmra.mxu0 %v4186
        %v4272 = vpop.f32.mrf.mxu0
        %v4273 = vadd.f32 %v4174, %v4272
        %v4274 = vpop.f32.mrf.mxu0
        %v4275 = vadd.f32 %v4174, %v4274
        %4276 = vdwg.mxu0
        %4277 = vmatprep.subr.mxu0 0.0
        %4278 = vmatpush1.msra.mxu0 0.0
        %4279 = vmatprep.subr.mxu0 0.0
        %4280 = vmatpush1.msra.mxu0 0.0
        %4281 = vmatprep.subr.mxu0 0.0
        %4282 = vmatpush1.msra.mxu0 0.0
        %4283 = vmatprep.subr.mxu0 0.0
        %4284 = vmatpush1.msra.mxu0 0.0
        %4285 = vmatprep.subr.mxu0 0.0
        %4286 = vmatpush1.msra.mxu0 0.0
        %4287 = vmatprep.subr.mxu0 0.0
        %4288 = vmatpush1.msra.mxu0 0.0
        %4289 = vmatprep.subr.mxu0 0.0
        %4290 = vmatpush1.msra.mxu0 0.0
        %4291 = vmatprep.subr.mxu0 0.0
        %4292 = vmatpush1.msra.mxu0 0.0
        %4293 = vmatprep.subr.mxu0 0.0
        %4294 = vmatpush1.msra.mxu0 0.0
        %4295 = vmatprep.subr.mxu0 0.0
        %4296 = vmatpush1.msra.mxu0 0.0
        %4297 = vmatprep.subr.mxu0 0.0
        %4298 = vmatpush1.msra.mxu0 0.0
        %4299 = vmatprep.subr.mxu0 0.0
        %4300 = vmatpush1.msra.mxu0 0.0
        %4301 = vmatprep.subr.mxu0 %v4147
        %4302 = vmatpush1.msra.mxu0 %v4146
        %4303 = vmatprep.subr.mxu0 %v4143
        %4304 = vmatpush1.msra.mxu0 %v4142
        %4305 = vmatprep.subr.mxu0 %v4139
        %4306 = vmatpush1.msra.mxu0 %v4138
        %4307 = vmatprep.subr.mxu0 %v4135
        %4308 = vmatpush1.msra.mxu0 %v4134
        %4309 = vmatprep.subr.mxu0 0.0
        %4310 = vmatpush2.msra.mxu0 0.0
        %4311 = vmatprep.subr.mxu0 0.0
        %4312 = vmatpush2.msra.mxu0 0.0
        %4313 = vmatprep.subr.mxu0 0.0
        %4314 = vmatpush2.msra.mxu0 0.0
        %4315 = vmatprep.subr.mxu0 0.0
        %4316 = vmatpush2.msra.mxu0 0.0
        %4317 = vmatprep.subr.mxu0 0.0
        %4318 = vmatpush2.msra.mxu0 0.0
        %4319 = vmatprep.subr.mxu0 0.0
        %4320 = vmatpush2.msra.mxu0 0.0
        %4321 = vmatprep.subr.mxu0 0.0
        %4322 = vmatpush2.msra.mxu0 0.0
        %4323 = vmatprep.subr.mxu0 0.0
        %4324 = vmatpush2.msra.mxu0 0.0
        %4325 = vmatprep.subr.mxu0 0.0
        %4326 = vmatpush2.msra.mxu0 0.0
        %4327 = vmatprep.subr.mxu0 0.0
        %4328 = vmatpush2.msra.mxu0 0.0
        %4329 = vmatprep.subr.mxu0 0.0
        %4330 = vmatpush2.msra.mxu0 0.0
        %4331 = vmatprep.subr.mxu0 0.0
        %4332 = vmatpush2.msra.mxu0 0.0
        %4333 = vmatprep.subr.mxu0 0.0
        %4334 = vmatpush2.msra.mxu0 0.0
        %4335 = vmatprep.subr.mxu0 0.0
        %4336 = vmatpush2.msra.mxu0 0.0
        %4337 = vmatprep.subr.mxu0 0.0
        %4338 = vmatpush2.msra.mxu0 0.0
        %4339 = vmatprep.subr.mxu0 0.0
        %4340 = vmatpush2.msra.mxu0 0.0
        %4341 = vmatprep.mubr.f32.mxu0 0.0
        %4342 = vmatmul.mubr.f32.gmra.mxu0 %v4177
        %v4343 = vpop.f32.mrf.mxu0
        %v4344 = vadd.f32 %v4159, %v4343
        %v4345 = vpop.f32.mrf.mxu0
        %v4346 = vadd.f32 %v4159, %v4345
        %4347 = vmatprep.mubr.f32.mxu0 0.0
        %4348 = vmatmul.mubr.f32.gmra.mxu0 %v4180
        %v4349 = vpop.f32.mrf.mxu0
        %v4350 = vadd.f32 %v4164, %v4349
        %v4351 = vpop.f32.mrf.mxu0
        %v4352 = vadd.f32 %v4164, %v4351
        %4353 = vmatprep.mubr.f32.mxu0 0.0
        %4354 = vmatmul.mubr.f32.gmra.mxu0 %v4183
        %v4355 = vpop.f32.mrf.mxu0
        %v4356 = vadd.f32 %v4169, %v4355
        %v4357 = vpop.f32.mrf.mxu0
        %v4358 = vadd.f32 %v4169, %v4357
        %4359 = vmatprep.mubr.f32.mxu0 0.0
        %4360 = vmatmul.mubr.f32.gmra.mxu0 %v4186
        %v4361 = vpop.f32.mrf.mxu0
        %v4362 = vadd.f32 %v4174, %v4361
        %v4363 = vpop.f32.mrf.mxu0
        %v4364 = vadd.f32 %v4174, %v4363
        %4365 = vdwg.mxu0
        %vm4366 = vcmp.ge.f32.partialorder %v4255, 0.0
        %vm4367 = vcmp.ge.f32.partialorder %v4257, 0.0
        %vm4368 = vcmp.ge.f32.partialorder %v4344, 0.0
        %vm4369 = vcmp.ge.f32.partialorder %v4346, 0.0
        %vm4370 = vcmp.ge.f32.partialorder %v4261, 0.0
        %vm4371 = vcmp.ge.f32.partialorder %v4263, 0.0
        %vm4372 = vcmp.ge.f32.partialorder %v4350, 0.0
        %vm4373 = vcmp.ge.f32.partialorder %v4352, 0.0
        %vm4374 = vcmp.ge.f32.partialorder %v4267, 0.0
        %vm4375 = vcmp.ge.f32.partialorder %v4269, 0.0
        %vm4376 = vcmp.ge.f32.partialorder %v4356, 0.0
        %vm4377 = vcmp.ge.f32.partialorder %v4358, 0.0
        %vm4378 = vcmp.ge.f32.partialorder %v4273, 0.0
        %vm4379 = vcmp.ge.f32.partialorder %v4275, 0.0
        %vm4380 = vcmp.ge.f32.partialorder %v4362, 0.0
        %vm4381 = vcmp.ge.f32.partialorder %v4364, 0.0
        %v4382 = vmul.f32 %v4255, 0.01
        %v4383 = vmul.f32 %v4257, 0.01
        %v4384 = vmul.f32 %v4344, 0.01
        %v4385 = vmul.f32 %v4346, 0.01
        %v4386 = vmul.f32 %v4261, 0.01
        %v4387 = vmul.f32 %v4263, 0.01
        %v4388 = vmul.f32 %v4350, 0.01
        %v4389 = vmul.f32 %v4352, 0.01
        %v4390 = vmul.f32 %v4267, 0.01
        %v4391 = vmul.f32 %v4269, 0.01
        %v4392 = vmul.f32 %v4356, 0.01
        %v4393 = vmul.f32 %v4358, 0.01
        %v4394 = vmul.f32 %v4273, 0.01
        %v4395 = vmul.f32 %v4275, 0.01
        %v4396 = vmul.f32 %v4362, 0.01
        %v4397 = vmul.f32 %v4364, 0.01
        %v4398 = vsel %vm4366, %v4255, %v4382
        %v4399 = vsel %vm4367, %v4257, %v4383
        %v4400 = vsel %vm4368, %v4344, %v4384
        %v4401 = vsel %vm4369, %v4346, %v4385
        %v4402 = vsel %vm4370, %v4261, %v4386
        %v4403 = vsel %vm4371, %v4263, %v4387
        %v4404 = vsel %vm4372, %v4350, %v4388
        %v4405 = vsel %vm4373, %v4352, %v4389
        %v4406 = vsel %vm4374, %v4267, %v4390
        %v4407 = vsel %vm4375, %v4269, %v4391
        %v4408 = vsel %vm4376, %v4356, %v4392
        %v4409 = vsel %vm4377, %v4358, %v4393
        %v4410 = vsel %vm4378, %v4273, %v4394
        %v4411 = vsel %vm4379, %v4275, %v4395
        %v4412 = vsel %vm4380, %v4362, %v4396
        %v4413 = vsel %vm4381, %v4364, %v4397
        %v4414 = vld [vmem:[#allocation8] sm:$0xff]
        %v4415 = vld [vmem:[#allocation8 + $0x8] sm:$0xff]
        %v4416 = vld [vmem:[#allocation8 + $0x10] sm:$0xff]
        %v4417 = vld [vmem:[#allocation8 + $0x18] sm:$0xff]
        %v4418 = vld [vmem:[%s16] sm:$0xff]
        %v4419 = vld [vmem:[%s16 + $0x8] sm:$0xff]
        %v4420 = vld [vmem:[%s16 + $0x10] sm:$0xff]
        %v4421 = vld [vmem:[%s16 + $0x18] sm:$0xff]
        %4423 = vset.pattern.permute.xlu0 0
        %4424 = vperm.xlu0 %4423, %v4418
        %v4425 = vpop.permute.xlu0 %4424
        %4428 = vset.pattern.permute.xlu0 0
        %4429 = vperm.xlu0 %4428, %v4419
        %v4430 = vpop.permute.xlu0 %4429
        %4433 = vset.pattern.permute.xlu0 0
        %4434 = vperm.xlu0 %4433, %v4420
        %v4435 = vpop.permute.xlu0 %4434
        %4438 = vset.pattern.permute.xlu0 0
        %4439 = vperm.xlu0 %4438, %v4421
        %v4440 = vpop.permute.xlu0 %4439
        %v4443 = vsel %vm2635, %v4414, 0
        %v4446 = vsel %vm2635, %v4415, 0
        %v4449 = vsel %vm2635, %v4416, 0
        %v4452 = vsel %vm2635, %v4417, 0
        %4454 = vmatprep.subr.mxu0 0.0
        %4455 = vmatpush1.msra.mxu0 0.0
        %4456 = vmatprep.subr.mxu0 0.0
        %4457 = vmatpush1.msra.mxu0 0.0
        %4458 = vmatprep.subr.mxu0 0.0
        %4459 = vmatpush1.msra.mxu0 0.0
        %4460 = vmatprep.subr.mxu0 0.0
        %4461 = vmatpush1.msra.mxu0 0.0
        %4462 = vmatprep.subr.mxu0 0.0
        %4463 = vmatpush1.msra.mxu0 0.0
        %4464 = vmatprep.subr.mxu0 0.0
        %4465 = vmatpush1.msra.mxu0 0.0
        %4466 = vmatprep.subr.mxu0 0.0
        %4467 = vmatpush1.msra.mxu0 0.0
        %4468 = vmatprep.subr.mxu0 0.0
        %4469 = vmatpush1.msra.mxu0 0.0
        %4470 = vmatprep.subr.mxu0 0.0
        %4471 = vmatpush1.msra.mxu0 0.0
        %4472 = vmatprep.subr.mxu0 0.0
        %4473 = vmatpush1.msra.mxu0 0.0
        %4474 = vmatprep.subr.mxu0 0.0
        %4475 = vmatpush1.msra.mxu0 0.0
        %4476 = vmatprep.subr.mxu0 0.0
        %4477 = vmatpush1.msra.mxu0 0.0
        %4478 = vmatprep.subr.mxu0 %v4411
        %4479 = vmatpush1.msra.mxu0 %v4410
        %4480 = vmatprep.subr.mxu0 %v4407
        %4481 = vmatpush1.msra.mxu0 %v4406
        %4482 = vmatprep.subr.mxu0 %v4403
        %4483 = vmatpush1.msra.mxu0 %v4402
        %4484 = vmatprep.subr.mxu0 %v4399
        %4485 = vmatpush1.msra.mxu0 %v4398
        %4486 = vmatprep.subr.mxu0 0.0
        %4487 = vmatpush2.msra.mxu0 0.0
        %4488 = vmatprep.subr.mxu0 0.0
        %4489 = vmatpush2.msra.mxu0 0.0
        %4490 = vmatprep.subr.mxu0 0.0
        %4491 = vmatpush2.msra.mxu0 0.0
        %4492 = vmatprep.subr.mxu0 0.0
        %4493 = vmatpush2.msra.mxu0 0.0
        %4494 = vmatprep.subr.mxu0 0.0
        %4495 = vmatpush2.msra.mxu0 0.0
        %4496 = vmatprep.subr.mxu0 0.0
        %4497 = vmatpush2.msra.mxu0 0.0
        %4498 = vmatprep.subr.mxu0 0.0
        %4499 = vmatpush2.msra.mxu0 0.0
        %4500 = vmatprep.subr.mxu0 0.0
        %4501 = vmatpush2.msra.mxu0 0.0
        %4502 = vmatprep.subr.mxu0 0.0
        %4503 = vmatpush2.msra.mxu0 0.0
        %4504 = vmatprep.subr.mxu0 0.0
        %4505 = vmatpush2.msra.mxu0 0.0
        %4506 = vmatprep.subr.mxu0 0.0
        %4507 = vmatpush2.msra.mxu0 0.0
        %4508 = vmatprep.subr.mxu0 0.0
        %4509 = vmatpush2.msra.mxu0 0.0
        %4510 = vmatprep.subr.mxu0 0.0
        %4511 = vmatpush2.msra.mxu0 0.0
        %4512 = vmatprep.subr.mxu0 0.0
        %4513 = vmatpush2.msra.mxu0 0.0
        %4514 = vmatprep.subr.mxu0 0.0
        %4515 = vmatpush2.msra.mxu0 0.0
        %4516 = vmatprep.subr.mxu0 0.0
        %4517 = vmatpush2.msra.mxu0 0.0
        %4518 = vmatprep.mubr.f32.mxu0 0.0
        %4519 = vmatmul.mubr.f32.gmra.mxu0 %v4443
        %v4520 = vpop.f32.mrf.mxu0
        %v4521 = vadd.f32 %v4425, %v4520
        %v4522 = vpop.f32.mrf.mxu0
        %v4523 = vadd.f32 %v4425, %v4522
        %4524 = vmatprep.mubr.f32.mxu0 0.0
        %4525 = vmatmul.mubr.f32.gmra.mxu0 %v4446
        %v4526 = vpop.f32.mrf.mxu0
        %v4527 = vadd.f32 %v4430, %v4526
        %v4528 = vpop.f32.mrf.mxu0
        %v4529 = vadd.f32 %v4430, %v4528
        %4530 = vmatprep.mubr.f32.mxu0 0.0
        %4531 = vmatmul.mubr.f32.gmra.mxu0 %v4449
        %v4532 = vpop.f32.mrf.mxu0
        %v4533 = vadd.f32 %v4435, %v4532
        %v4534 = vpop.f32.mrf.mxu0
        %v4535 = vadd.f32 %v4435, %v4534
        %4536 = vmatprep.mubr.f32.mxu0 0.0
        %4537 = vmatmul.mubr.f32.gmra.mxu0 %v4452
        %v4538 = vpop.f32.mrf.mxu0
        %v4539 = vadd.f32 %v4440, %v4538
        %v4540 = vpop.f32.mrf.mxu0
        %v4541 = vadd.f32 %v4440, %v4540
        %4542 = vdwg.mxu0
        %4543 = vmatprep.subr.mxu0 0.0
        %4544 = vmatpush1.msra.mxu0 0.0
        %4545 = vmatprep.subr.mxu0 0.0
        %4546 = vmatpush1.msra.mxu0 0.0
        %4547 = vmatprep.subr.mxu0 0.0
        %4548 = vmatpush1.msra.mxu0 0.0
        %4549 = vmatprep.subr.mxu0 0.0
        %4550 = vmatpush1.msra.mxu0 0.0
        %4551 = vmatprep.subr.mxu0 0.0
        %4552 = vmatpush1.msra.mxu0 0.0
        %4553 = vmatprep.subr.mxu0 0.0
        %4554 = vmatpush1.msra.mxu0 0.0
        %4555 = vmatprep.subr.mxu0 0.0
        %4556 = vmatpush1.msra.mxu0 0.0
        %4557 = vmatprep.subr.mxu0 0.0
        %4558 = vmatpush1.msra.mxu0 0.0
        %4559 = vmatprep.subr.mxu0 0.0
        %4560 = vmatpush1.msra.mxu0 0.0
        %4561 = vmatprep.subr.mxu0 0.0
        %4562 = vmatpush1.msra.mxu0 0.0
        %4563 = vmatprep.subr.mxu0 0.0
        %4564 = vmatpush1.msra.mxu0 0.0
        %4565 = vmatprep.subr.mxu0 0.0
        %4566 = vmatpush1.msra.mxu0 0.0
        %4567 = vmatprep.subr.mxu0 %v4413
        %4568 = vmatpush1.msra.mxu0 %v4412
        %4569 = vmatprep.subr.mxu0 %v4409
        %4570 = vmatpush1.msra.mxu0 %v4408
        %4571 = vmatprep.subr.mxu0 %v4405
        %4572 = vmatpush1.msra.mxu0 %v4404
        %4573 = vmatprep.subr.mxu0 %v4401
        %4574 = vmatpush1.msra.mxu0 %v4400
        %4575 = vmatprep.subr.mxu0 0.0
        %4576 = vmatpush2.msra.mxu0 0.0
        %4577 = vmatprep.subr.mxu0 0.0
        %4578 = vmatpush2.msra.mxu0 0.0
        %4579 = vmatprep.subr.mxu0 0.0
        %4580 = vmatpush2.msra.mxu0 0.0
        %4581 = vmatprep.subr.mxu0 0.0
        %4582 = vmatpush2.msra.mxu0 0.0
        %4583 = vmatprep.subr.mxu0 0.0
        %4584 = vmatpush2.msra.mxu0 0.0
        %4585 = vmatprep.subr.mxu0 0.0
        %4586 = vmatpush2.msra.mxu0 0.0
        %4587 = vmatprep.subr.mxu0 0.0
        %4588 = vmatpush2.msra.mxu0 0.0
        %4589 = vmatprep.subr.mxu0 0.0
        %4590 = vmatpush2.msra.mxu0 0.0
        %4591 = vmatprep.subr.mxu0 0.0
        %4592 = vmatpush2.msra.mxu0 0.0
        %4593 = vmatprep.subr.mxu0 0.0
        %4594 = vmatpush2.msra.mxu0 0.0
        %4595 = vmatprep.subr.mxu0 0.0
        %4596 = vmatpush2.msra.mxu0 0.0
        %4597 = vmatprep.subr.mxu0 0.0
        %4598 = vmatpush2.msra.mxu0 0.0
        %4599 = vmatprep.subr.mxu0 0.0
        %4600 = vmatpush2.msra.mxu0 0.0
        %4601 = vmatprep.subr.mxu0 0.0
        %4602 = vmatpush2.msra.mxu0 0.0
        %4603 = vmatprep.subr.mxu0 0.0
        %4604 = vmatpush2.msra.mxu0 0.0
        %4605 = vmatprep.subr.mxu0 0.0
        %4606 = vmatpush2.msra.mxu0 0.0
        %4607 = vmatprep.mubr.f32.mxu0 0.0
        %4608 = vmatmul.mubr.f32.gmra.mxu0 %v4443
        %v4609 = vpop.f32.mrf.mxu0
        %v4610 = vadd.f32 %v4425, %v4609
        %v4611 = vpop.f32.mrf.mxu0
        %v4612 = vadd.f32 %v4425, %v4611
        %4613 = vmatprep.mubr.f32.mxu0 0.0
        %4614 = vmatmul.mubr.f32.gmra.mxu0 %v4446
        %v4615 = vpop.f32.mrf.mxu0
        %v4616 = vadd.f32 %v4430, %v4615
        %v4617 = vpop.f32.mrf.mxu0
        %v4618 = vadd.f32 %v4430, %v4617
        %4619 = vmatprep.mubr.f32.mxu0 0.0
        %4620 = vmatmul.mubr.f32.gmra.mxu0 %v4449
        %v4621 = vpop.f32.mrf.mxu0
        %v4622 = vadd.f32 %v4435, %v4621
        %v4623 = vpop.f32.mrf.mxu0
        %v4624 = vadd.f32 %v4435, %v4623
        %4625 = vmatprep.mubr.f32.mxu0 0.0
        %4626 = vmatmul.mubr.f32.gmra.mxu0 %v4452
        %v4627 = vpop.f32.mrf.mxu0
        %v4628 = vadd.f32 %v4440, %v4627
        %v4629 = vpop.f32.mrf.mxu0
        %v4630 = vadd.f32 %v4440, %v4629
        %4631 = vdwg.mxu0
        %vm4632 = vcmp.ge.f32.partialorder %v4521, 0.0
        %vm4633 = vcmp.ge.f32.partialorder %v4523, 0.0
        %vm4634 = vcmp.ge.f32.partialorder %v4610, 0.0
        %vm4635 = vcmp.ge.f32.partialorder %v4612, 0.0
        %vm4636 = vcmp.ge.f32.partialorder %v4527, 0.0
        %vm4637 = vcmp.ge.f32.partialorder %v4529, 0.0
        %vm4638 = vcmp.ge.f32.partialorder %v4616, 0.0
        %vm4639 = vcmp.ge.f32.partialorder %v4618, 0.0
        %vm4640 = vcmp.ge.f32.partialorder %v4533, 0.0
        %vm4641 = vcmp.ge.f32.partialorder %v4535, 0.0
        %vm4642 = vcmp.ge.f32.partialorder %v4622, 0.0
        %vm4643 = vcmp.ge.f32.partialorder %v4624, 0.0
        %vm4644 = vcmp.ge.f32.partialorder %v4539, 0.0
        %vm4645 = vcmp.ge.f32.partialorder %v4541, 0.0
        %vm4646 = vcmp.ge.f32.partialorder %v4628, 0.0
        %vm4647 = vcmp.ge.f32.partialorder %v4630, 0.0
        %v4648 = vmul.f32 %v4521, 0.01
        %v4649 = vmul.f32 %v4523, 0.01
        %v4650 = vmul.f32 %v4610, 0.01
        %v4651 = vmul.f32 %v4612, 0.01
        %v4652 = vmul.f32 %v4527, 0.01
        %v4653 = vmul.f32 %v4529, 0.01
        %v4654 = vmul.f32 %v4616, 0.01
        %v4655 = vmul.f32 %v4618, 0.01
        %v4656 = vmul.f32 %v4533, 0.01
        %v4657 = vmul.f32 %v4535, 0.01
        %v4658 = vmul.f32 %v4622, 0.01
        %v4659 = vmul.f32 %v4624, 0.01
        %v4660 = vmul.f32 %v4539, 0.01
        %v4661 = vmul.f32 %v4541, 0.01
        %v4662 = vmul.f32 %v4628, 0.01
        %v4663 = vmul.f32 %v4630, 0.01
        %v4664 = vsel %vm4632, %v4521, %v4648
        %v4665 = vsel %vm4633, %v4523, %v4649
        %v4666 = vsel %vm4634, %v4610, %v4650
        %v4667 = vsel %vm4635, %v4612, %v4651
        %v4668 = vsel %vm4636, %v4527, %v4652
        %v4669 = vsel %vm4637, %v4529, %v4653
        %v4670 = vsel %vm4638, %v4616, %v4654
        %v4671 = vsel %vm4639, %v4618, %v4655
        %v4672 = vsel %vm4640, %v4533, %v4656
        %v4673 = vsel %vm4641, %v4535, %v4657
        %v4674 = vsel %vm4642, %v4622, %v4658
        %v4675 = vsel %vm4643, %v4624, %v4659
        %v4676 = vsel %vm4644, %v4539, %v4660
        %v4677 = vsel %vm4645, %v4541, %v4661
        %v4678 = vsel %vm4646, %v4628, %v4662
        %v4679 = vsel %vm4647, %v4630, %v4663
        %v4680 = vld [vmem:[%s17] sm:$0x1]
        %v4681 = vld [vmem:[#allocation2] sm:$0x1]
        %4683 = vset.pattern.permute.xlu0 0
        %4684 = vperm.xlu0 %4683, %v4681
        %v4685 = vpop.permute.xlu0 %4684
        %v4687 = vlaneseq
        %v4688 = vshrl.u32 %v4687, 7
        %v4689 = vsub.s32 0, %v4688
        %v4690 = vrot.slane %v4685, %v4689
        %v4692 = vsel %vm2635, %v4680, 0
        %4694 = vmatprep.subr.mxu0 0.0
        %4695 = vmatpush1.msra.mxu0 0.0
        %4696 = vmatprep.subr.mxu0 0.0
        %4697 = vmatpush1.msra.mxu0 0.0
        %4698 = vmatprep.subr.mxu0 0.0
        %4699 = vmatpush1.msra.mxu0 0.0
        %4700 = vmatprep.subr.mxu0 0.0
        %4701 = vmatpush1.msra.mxu0 0.0
        %4702 = vmatprep.subr.mxu0 0.0
        %4703 = vmatpush1.msra.mxu0 0.0
        %4704 = vmatprep.subr.mxu0 0.0
        %4705 = vmatpush1.msra.mxu0 0.0
        %4706 = vmatprep.subr.mxu0 0.0
        %4707 = vmatpush1.msra.mxu0 0.0
        %4708 = vmatprep.subr.mxu0 0.0
        %4709 = vmatpush1.msra.mxu0 0.0
        %4710 = vmatprep.subr.mxu0 0.0
        %4711 = vmatpush1.msra.mxu0 0.0
        %4712 = vmatprep.subr.mxu0 0.0
        %4713 = vmatpush1.msra.mxu0 0.0
        %4714 = vmatprep.subr.mxu0 0.0
        %4715 = vmatpush1.msra.mxu0 0.0
        %4716 = vmatprep.subr.mxu0 0.0
        %4717 = vmatpush1.msra.mxu0 0.0
        %4718 = vmatprep.subr.mxu0 %v4677
        %4719 = vmatpush1.msra.mxu0 %v4676
        %4720 = vmatprep.subr.mxu0 %v4673
        %4721 = vmatpush1.msra.mxu0 %v4672
        %4722 = vmatprep.subr.mxu0 %v4669
        %4723 = vmatpush1.msra.mxu0 %v4668
        %4724 = vmatprep.subr.mxu0 %v4665
        %4725 = vmatpush1.msra.mxu0 %v4664
        %4726 = vmatprep.subr.mxu0 0.0
        %4727 = vmatpush2.msra.mxu0 0.0
        %4728 = vmatprep.subr.mxu0 0.0
        %4729 = vmatpush2.msra.mxu0 0.0
        %4730 = vmatprep.subr.mxu0 0.0
        %4731 = vmatpush2.msra.mxu0 0.0
        %4732 = vmatprep.subr.mxu0 0.0
        %4733 = vmatpush2.msra.mxu0 0.0
        %4734 = vmatprep.subr.mxu0 0.0
        %4735 = vmatpush2.msra.mxu0 0.0
        %4736 = vmatprep.subr.mxu0 0.0
        %4737 = vmatpush2.msra.mxu0 0.0
        %4738 = vmatprep.subr.mxu0 0.0
        %4739 = vmatpush2.msra.mxu0 0.0
        %4740 = vmatprep.subr.mxu0 0.0
        %4741 = vmatpush2.msra.mxu0 0.0
        %4742 = vmatprep.subr.mxu0 0.0
        %4743 = vmatpush2.msra.mxu0 0.0
        %4744 = vmatprep.subr.mxu0 0.0
        %4745 = vmatpush2.msra.mxu0 0.0
        %4746 = vmatprep.subr.mxu0 0.0
        %4747 = vmatpush2.msra.mxu0 0.0
        %4748 = vmatprep.subr.mxu0 0.0
        %4749 = vmatpush2.msra.mxu0 0.0
        %4750 = vmatprep.subr.mxu0 0.0
        %4751 = vmatpush2.msra.mxu0 0.0
        %4752 = vmatprep.subr.mxu0 0.0
        %4753 = vmatpush2.msra.mxu0 0.0
        %4754 = vmatprep.subr.mxu0 0.0
        %4755 = vmatpush2.msra.mxu0 0.0
        %4756 = vmatprep.subr.mxu0 0.0
        %4757 = vmatpush2.msra.mxu0 0.0
        %4758 = vmatprep.mubr.f32.mxu0 0.0
        %4759 = vmatmul.mubr.f32.gmra.mxu0 %v4692
        %v4760 = vpop.f32.mrf.mxu0
        %v4761 = vadd.f32 %v4690, %v4760
        %v4762 = vpop.f32.mrf.mxu0
        %v4763 = vadd.f32 %v4690, %v4762
        %4764 = vdwg.mxu0
        %4765 = vmatprep.subr.mxu0 0.0
        %4766 = vmatpush1.msra.mxu0 0.0
        %4767 = vmatprep.subr.mxu0 0.0
        %4768 = vmatpush1.msra.mxu0 0.0
        %4769 = vmatprep.subr.mxu0 0.0
        %4770 = vmatpush1.msra.mxu0 0.0
        %4771 = vmatprep.subr.mxu0 0.0
        %4772 = vmatpush1.msra.mxu0 0.0
        %4773 = vmatprep.subr.mxu0 0.0
        %4774 = vmatpush1.msra.mxu0 0.0
        %4775 = vmatprep.subr.mxu0 0.0
        %4776 = vmatpush1.msra.mxu0 0.0
        %4777 = vmatprep.subr.mxu0 0.0
        %4778 = vmatpush1.msra.mxu0 0.0
        %4779 = vmatprep.subr.mxu0 0.0
        %4780 = vmatpush1.msra.mxu0 0.0
        %4781 = vmatprep.subr.mxu0 0.0
        %4782 = vmatpush1.msra.mxu0 0.0
        %4783 = vmatprep.subr.mxu0 0.0
        %4784 = vmatpush1.msra.mxu0 0.0
        %4785 = vmatprep.subr.mxu0 0.0
        %4786 = vmatpush1.msra.mxu0 0.0
        %4787 = vmatprep.subr.mxu0 0.0
        %4788 = vmatpush1.msra.mxu0 0.0
        %4789 = vmatprep.subr.mxu0 %v4679
        %4790 = vmatpush1.msra.mxu0 %v4678
        %4791 = vmatprep.subr.mxu0 %v4675
        %4792 = vmatpush1.msra.mxu0 %v4674
        %4793 = vmatprep.subr.mxu0 %v4671
        %4794 = vmatpush1.msra.mxu0 %v4670
        %4795 = vmatprep.subr.mxu0 %v4667
        %4796 = vmatpush1.msra.mxu0 %v4666
        %4797 = vmatprep.subr.mxu0 0.0
        %4798 = vmatpush2.msra.mxu0 0.0
        %4799 = vmatprep.subr.mxu0 0.0
        %4800 = vmatpush2.msra.mxu0 0.0
        %4801 = vmatprep.subr.mxu0 0.0
        %4802 = vmatpush2.msra.mxu0 0.0
        %4803 = vmatprep.subr.mxu0 0.0
        %4804 = vmatpush2.msra.mxu0 0.0
        %4805 = vmatprep.subr.mxu0 0.0
        %4806 = vmatpush2.msra.mxu0 0.0
        %4807 = vmatprep.subr.mxu0 0.0
        %4808 = vmatpush2.msra.mxu0 0.0
        %4809 = vmatprep.subr.mxu0 0.0
        %4810 = vmatpush2.msra.mxu0 0.0
        %4811 = vmatprep.subr.mxu0 0.0
        %4812 = vmatpush2.msra.mxu0 0.0
        %4813 = vmatprep.subr.mxu0 0.0
        %4814 = vmatpush2.msra.mxu0 0.0
        %4815 = vmatprep.subr.mxu0 0.0
        %4816 = vmatpush2.msra.mxu0 0.0
        %4817 = vmatprep.subr.mxu0 0.0
        %4818 = vmatpush2.msra.mxu0 0.0
        %4819 = vmatprep.subr.mxu0 0.0
        %4820 = vmatpush2.msra.mxu0 0.0
        %4821 = vmatprep.subr.mxu0 0.0
        %4822 = vmatpush2.msra.mxu0 0.0
        %4823 = vmatprep.subr.mxu0 0.0
        %4824 = vmatpush2.msra.mxu0 0.0
        %4825 = vmatprep.subr.mxu0 0.0
        %4826 = vmatpush2.msra.mxu0 0.0
        %4827 = vmatprep.subr.mxu0 0.0
        %4828 = vmatpush2.msra.mxu0 0.0
        %4829 = vmatprep.mubr.f32.mxu0 0.0
        %4830 = vmatmul.mubr.f32.gmra.mxu0 %v4692
        %v4831 = vpop.f32.mrf.mxu0
        %v4832 = vadd.f32 %v4690, %v4831
        %v4833 = vpop.f32.mrf.mxu0
        %v4834 = vadd.f32 %v4690, %v4833
        %4835 = vdwg.mxu0
        %v4836 = vsub.f32 0.0, %v4761
        %v4837 = vsub.f32 0.0, %v4763
        %v4838 = vsub.f32 0.0, %v4832
        %v4839 = vsub.f32 0.0, %v4834
        %v4840 = vmul.f32 %v4836, 1.442695
        %v4841 = vpow.pop %v4840
        %v4842 = vmul.f32 %v4837, 1.442695
        %v4843 = vpow.pop %v4842
        %v4844 = vmul.f32 %v4838, 1.442695
        %v4845 = vpow.pop %v4844
        %v4846 = vmul.f32 %v4839, 1.442695
        %v4847 = vpow.pop %v4846
        %v4848 = vadd.f32 %v4841, 1.0
        %v4849 = vadd.f32 %v4843, 1.0
        %v4850 = vadd.f32 %v4845, 1.0
        %v4851 = vadd.f32 %v4847, 1.0
        %v4852 = vrcp.pop %v4848
        %v4853 = vrcp.pop %v4849
        %v4854 = vrcp.pop %v4850
        %v4855 = vrcp.pop %v4851
        %v4860 = vcombine.low %v4852, %v4853
        %v4861 = vcombine.low %v4854, %v4855
        %v4863 = vunpack.c.l.s4 1966171168
        %v4864 = vunpack.c.0.s8 %v4863
        %v4865 = vlaneseq
        %v4866 = vshrl.u32 %v4865, 7
        %v4867 = vsub.s32 %v4864, %v4866
        %v4868 = vrot.slane %v4860, %v4867
        %v4870 = vunpack.c.l.s4 1966171168
        %v4871 = vunpack.c.0.s8 %v4870
        %v4872 = vlaneseq
        %v4873 = vshrl.u32 %v4872, 7
        %v4874 = vsub.s32 %v4871, %v4873
        %v4875 = vrot.slane %v4861, %v4874
        %v4876 = vcombine.low %v4868, %v4875
        %v4878 = vunpack.c.l.s4 1966171168
        %v4879 = vunpack.c.0.s8 %v4878
        %v4880 = vlaneseq
        %v4881 = vshrl.u32 %v4880, 7
        %v4882 = vsub.s32 %v4879, %v4881
        %v4883 = vrot.slane %v4876, %v4882
        %v4885 = vlaneseq
        %vm4886 = vcmp.ge.s32.totalorder %v4885, 0
        %vm4887 = vcmp.lt.s32.totalorder %v4885, 512
        %vm4888 = vmand %vm4886, %vm4887
        %4889 = vst.msk [vmem:[%s642] sm:$0xf] %vm4888, %v4883
        %s4890 = sand.u32 %s449, 1
        %s4891 = scalar_lea.sflag [#allocation5], %s4890
        %s4892 = sand.u32 %s449, 1
        %s4893 = smul.addr %s4892, 4
        %s4894 = scalar_lea.vmem [#allocation9], %s4893
        // Predicated region
        $region109: #{tpu_custom_call.1} parent=95 // pred_check
          %p4895 = pneg %p459
        $region110: #{tpu_custom_call.1} parent=95 // pred_check_branch
          %4897 = sbr.rel (%p4895) target = $region112
        $region111: #{tpu_custom_call.1} parent=95 // pred_region
          %s4898 = smul.u32 4, %s37
          %s4900 = ssub.s32 64, 64
          %4901 = vsyncadd %s4891, %s4900
          %s4902 = smul.addr %s4898, 16
          %s4903 = scalar_lea.hbm %s19, %s4902
          %s4905 = sshll.u32 %s4894, 4
          %s4906 = int_to_ptr.vmem [resolvable:$true] %s4905
          %4908 = dma.vmem_to_hbm [thread:$0]  %s4906, 64, %s4903, %s4891
        $region112: #{tpu_custom_call.1} parent=95 // pred_fallthru
          _
      $region96: #{tpu_custom_call.1} parent=5 // pred_fallthru
        _
      %p4909 = scmp.le.s32.totalorder 2, %s32
      // Predicated region
      $region113: #{tpu_custom_call.1} parent=5 // pred_check
        %p4910 = pneg %p4909
      $region114: #{tpu_custom_call.1} parent=5 // pred_check_branch
        %4912 = sbr.rel (%p4910) target = $region116
      $region115: #{tpu_custom_call.1} parent=5 // pred_region
        %s4913 = ssub.s32 %s32, 2
        // Predicated region
        $region117: #{tpu_custom_call.1} parent=115 // pred_check
          %p4914 = pneg %p465
        $region118: #{tpu_custom_call.1} parent=115 // pred_check_branch
          %4916 = sbr.rel (%p4914) target = $region120
        $region119: #{tpu_custom_call.1} parent=115 // pred_region
          %s4917 = sand.u32 %s450, 1
          %s4918 = scalar_lea.sflag [#allocation5], %s4917
          %s4919 = sand.u32 %s450, 1
          %s4920 = smul.addr %s4919, 4
          %s4921 = scalar_lea.vmem [#allocation9], %s4920
          %4922 = dma.done %s4918, 64
        $region120: #{tpu_custom_call.1} parent=115 // pred_fallthru
          _
      $region116: #{tpu_custom_call.1} parent=5 // pred_fallthru
        _
    $region6: #{tpu_custom_call.1} parent=1 // loop_footer
      %s36 = sadd.s32 1, %s32
    $region7: #{tpu_custom_call.1} parent=1 // loop_footer_branch
      %31 = sbr.rel target = $region3
    $region8: #{tpu_custom_call.1} parent=1 // loop_exit
      _
    %4923 = vsyncpa [#allocation4], 1
    %s4924 = scalar_lea.sflag [#allocation4], 1
    %4925 = vsyncpa %s4924, 1
    %4926 = vsyncpa [#allocation7], 1
    %4927 = vsyncpa [#allocation5], 1
    %s4928 = scalar_lea.sflag [#allocation5], 1
    %4929 = vsyncpa %s4928, 1

</llo_original>
